<compile_context>
chip_gen: v5e
topology: v5e:2x2
jax: 0.10.0
libtpu: 0.0.40
codegen_flags: <defaults>
</compile_context>

<pallas_src>
import functools

import jax
import jax.numpy as jnp
from jax.experimental import pallas as pl
from jax.experimental.pallas import tpu as pltpu


# ----------------------------- kernel ---------------------------------------


def pixelnerf_kernel(x_ref, w0_ref, b0_ref, w1_ref, b1_ref, wo_ref, bo_ref, o_ref):
    # x_ref : (TM, P*H)  bf16      lane-packed point tile (P points per row)
    # w*_ref: (R, P*H, P*H) bf16   block-diagonal resnet weights (VMEM resident)
    # b*_ref: (R, 1, P*H) f32      lane-tiled biases
    # wo_ref: (P*H, P*OUT) bf16    block-diagonal output weight
    # bo_ref: (1, P*OUT) f32
    # o_ref : (TM, P*OUT) bf16
    mm_dtype = w0_ref.dtype
    x = x_ref[...].astype(jnp.float32)          # f32 residual chain
    n_blocks = w0_ref.shape[0]
    # Small R (=2): static unroll so the LLO scheduler sees the whole MXU
    # cadence; static first-axis slices of the weight refs are zero-cost views.
    for r in range(n_blocks):
        h = jnp.maximum(x, 0.0).astype(mm_dtype)
        net = jnp.dot(h, w0_ref[r], preferred_element_type=jnp.float32) + b0_ref[r]
        dx = jnp.dot(jnp.maximum(net, 0.0).astype(mm_dtype), w1_ref[r],
                     preferred_element_type=jnp.float32) + b1_ref[r]
        x = x + dx
    rgb = jnp.dot(x.astype(mm_dtype), wo_ref[...],
                  preferred_element_type=jnp.float32) + bo_ref[...]
    o_ref[...] = jax.nn.sigmoid(rgb).astype(o_ref.dtype)


# ------------------------- one-time weight prep ------------------------------


def _block_diag(w, pack):
    """Replicate a weight along the diagonal: (..., H, K) -> (..., P*H, P*K)."""
    eye = jnp.eye(pack, dtype=w.dtype)
    if w.ndim == 3:
        r, h, k = w.shape
        return jnp.einsum("pq,rik->rpiqk", eye, w).reshape(r, pack * h, pack * k)
    h, k = w.shape
    return jnp.einsum("pq,ik->piqk", eye, w).reshape(pack * h, pack * k)


def prepare_packed_params(params, *, pack, matmul_dtype=jnp.bfloat16):
    """Pack/cast weights ONCE per parameter set (cache the result; do not call
    per forward pass — this is plain XLA layout plumbing, not kernel work)."""
    return dict(
        w0=_block_diag(params["w0"], pack).astype(matmul_dtype),
        w1=_block_diag(params["w1"], pack).astype(matmul_dtype),
        wo=_block_diag(params["wo"], pack).astype(matmul_dtype),
        b0=jnp.tile(params["b0"], (1, 1, pack)).astype(jnp.float32),
        b1=jnp.tile(params["b1"], (1, 1, pack)).astype(jnp.float32),
        bo=jnp.tile(params["bo"], (1, pack)).astype(jnp.float32),
    )


def default_pack():
    """pack=8 (PH=256) fills the 256-wide MXU on v6e/v7x; older 128-wide MXU
    chips (<= v5) keep pack=4 (PH=128) — same per-point pass count, less VMEM."""
    try:
        kind = jax.devices()[0].device_kind.lower()
    except Exception:
        return 4
    if any(tag in kind for tag in ("v6", "v7", "6e", "7x")):
        return 8
    return 4


# ------------------------------ forward --------------------------------------


@functools.partial(jax.jit, static_argnames=("pack", "tm", "out_dtype"))
def pixelnerf_forward(x, packed, *, pack, tm=None, out_dtype=jnp.bfloat16):
    """x: (N, hidden) float32.  packed: output of prepare_packed_params."""
    N, H = x.shape
    R, PH, _ = packed["w0"].shape
    POUT = packed["wo"].shape[1]
    P = pack
    assert PH == P * H and PH % 128 == 0, "pack * hidden_dim must be a multiple of 128"
    OUT = POUT // P
    if tm is None:
        tm = max(8, 2048 // P)          # ~2048 points per grid step

    # Pad only to a multiple of `pack` (<= pack-1 rows; no-op when aligned) —
    # NOT to a tile multiple; the ragged last grid block is handled by Pallas.
    N_pad = ((N + P - 1) // P) * P
    xp = x if N_pad == N else jnp.pad(x, ((0, N_pad - N), (0, 0)))
    # Lane-pack P points per row and cast to the matmul dtype (bf16): halves
    # the dominant HBM read per step; fuses with the (contiguous) reshape.
    xp = xp.reshape(N_pad // P, PH).astype(packed["w0"].dtype)

    n_rows = xp.shape[0]
    grid = (pl.cdiv(n_rows, tm),)

    out_packed = pl.pallas_call(
        pixelnerf_kernel,
        out_shape=jax.ShapeDtypeStruct((n_rows, POUT), out_dtype),
        grid_spec=pltpu.PrefetchScalarGridSpec(
            num_scalar_prefetch=0,
            grid=grid,
            in_specs=[
                pl.BlockSpec((tm, PH), lambda i: (i, 0)),        # packed x tile
                pl.BlockSpec((R, PH, PH), lambda i: (0, 0, 0)),  # fc0 weights
                pl.BlockSpec((R, 1, PH), lambda i: (0, 0, 0)),   # fc0 biases
                pl.BlockSpec((R, PH, PH), lambda i: (0, 0, 0)),  # fc1 weights
                pl.BlockSpec((R, 1, PH), lambda i: (0, 0, 0)),   # fc1 biases
                pl.BlockSpec((PH, POUT), lambda i: (0, 0)),      # output weight
                pl.BlockSpec((1, POUT), lambda i: (0, 0)),       # output bias
            ],
            out_specs=pl.BlockSpec((tm, POUT), lambda i: (i, 0)),
        ),
        compiler_params=pltpu.CompilerParams(
            dimension_semantics=("parallel",),
            # Actual residency is ~1-2 MiB (weights + double-buffered tiles);
            # 32 MiB leaves ample headroom on every generation (v7x: 64 MiB).
            vmem_limit_bytes=32 * 1024 * 1024),
    )(xp, packed["w0"], packed["b0"], packed["w1"], packed["b1"],
      packed["wo"], packed["bo"])

    # Unpack lanes back to one point per row and drop the pack padding.
    return out_packed.reshape(N_pad, OUT)[:N]


# --------------------------- init & reference --------------------------------


def init_params(key, hidden_dim, out_dim, res_blocks):
    """Deterministic synthetic init.

    Resnet-block linears: small normal weights, zero bias.  Output linear:
    kaiming_normal fan_in (std = sqrt(2 / fan_in)), zero bias, matching
    nn.init.kaiming_normal_(a=0, mode='fan_in') in the reference.  Weights are
    stored pre-transposed as (in, out) so the kernel does x @ W.
    """
    k0, k1, k2 = jax.random.split(key, 3)
    std_blk = (2.0 / hidden_dim) ** 0.5
    w0 = jax.random.normal(k0, (res_blocks, hidden_dim, hidden_dim),
                           jnp.float32) * std_blk
    w1 = jax.random.normal(k1, (res_blocks, hidden_dim, hidden_dim),
                           jnp.float32) * std_blk
    b0 = jnp.zeros((res_blocks, 1, hidden_dim), jnp.float32)
    b1 = jnp.zeros((res_blocks, 1, hidden_dim), jnp.float32)
    wo = jax.random.normal(k2, (hidden_dim, out_dim), jnp.float32) * std_blk
    bo = jnp.zeros((1, out_dim), jnp.float32)
    return dict(w0=w0, b0=b0, w1=w1, b1=b1, wo=wo, bo=bo)


def reference_forward(x, params):
    """Pure-JAX f32 reference of the same forward pass (sanity check)."""
    out = x
    R = params["w0"].shape[0]
    for r in range(R):
        h = jnp.maximum(out, 0.0)
        net = h @ params["w0"][r] + params["b0"][r]
        dx = jnp.maximum(net, 0.0) @ params["w1"][r] + params["b1"][r]
        out = out + dx
    rgb = out @ params["wo"] + params["bo"]
    return jax.nn.sigmoid(rgb)


# ------------------------------- demo ----------------------------------------


if __name__ == "__main__":
    # conf = {'inpt': ..., 'out': 4, 'hidden_dim': 32, 'res_blocks': 2}
    HIDDEN = 32
    OUT = 4
    RES_BLOCKS = 2
    N = 8000   # not a multiple of the row tile: exercises the ragged last block

    key = jax.random.PRNGKey(0)
    kx, kp = jax.random.split(key)
    x = jax.random.normal(kx, (N, HIDDEN), jnp.float32)
    params = init_params(kp, HIDDEN, OUT, RES_BLOCKS)

    pack = default_pack()                                    # 8 on v6e/v7x, else 4
    packed = prepare_packed_params(params, pack=pack)        # one-time repack
    packed = jax.tree_util.tree_map(jax.block_until_ready, packed)

    # pack=8: 1000 packed rows, tm=256 -> 4 grid steps (>=2 per TC on v7x).
    # pack=4: 2000 packed rows, tm=512 -> 4 grid steps.
    rgb = pixelnerf_forward(x, packed, pack=pack)
    rgb = jax.block_until_ready(rgb)

    ref = reference_forward(x, params)
    assert rgb.shape == (N, OUT)
    # Matmul operands / input / output are bf16 (f32 accumulate), so compare
    # loosely vs the f32 reference; sigmoid output errors stay well below this.
    max_err = float(jnp.max(jnp.abs(rgb.astype(jnp.float32) - ref)))
    assert max_err < 4e-2, f"mismatch vs reference: max |err| = {max_err}"

    print("KERNEL_OK")
</pallas_src>

<mosaic_0001>
module attributes {stable_mosaic.version = 11 : i64} {
  func.func @pixelnerf_kernel(%arg0: i32, %arg1: memref<512x128xbf16, #tpu.memory_space<vmem>>, %arg2: memref<2x128x128xbf16, #tpu.memory_space<vmem>>, %arg3: memref<2x1x128xf32, #tpu.memory_space<vmem>>, %arg4: memref<2x128x128xbf16, #tpu.memory_space<vmem>>, %arg5: memref<2x1x128xf32, #tpu.memory_space<vmem>>, %arg6: memref<128x16xbf16, #tpu.memory_space<vmem>>, %arg7: memref<1x16xf32, #tpu.memory_space<vmem>>, %arg8: memref<512x16xbf16, #tpu.memory_space<vmem>>) attributes {dimension_semantics = [#tpu.dimension_semantics<parallel>], iteration_bounds = array<i64: 4>, scalar_prefetch = 0 : i64, scratch_operands = 0 : i64, tpu.core_type = #tpu.core_type<tc>, window_params = [{transform_indices = @transform_0, window_bounds = array<i64: 512, 128>}, {pipeline_mode = #tpu.pipeline_mode<synchronous>, transform_indices = @transform_1, window_bounds = array<i64: 2, 128, 128>}, {pipeline_mode = #tpu.pipeline_mode<synchronous>, transform_indices = @transform_2, window_bounds = array<i64: 2, 1, 128>}, {pipeline_mode = #tpu.pipeline_mode<synchronous>, transform_indices = @transform_3, window_bounds = array<i64: 2, 128, 128>}, {pipeline_mode = #tpu.pipeline_mode<synchronous>, transform_indices = @transform_4, window_bounds = array<i64: 2, 1, 128>}, {pipeline_mode = #tpu.pipeline_mode<synchronous>, transform_indices = @transform_5, window_bounds = array<i64: 128, 16>}, {pipeline_mode = #tpu.pipeline_mode<synchronous>, transform_indices = @transform_6, window_bounds = array<i64: 1, 16>}, {transform_indices = @transform_7, window_bounds = array<i64: 512, 16>}]} {
    %c0 = arith.constant 0 : index
    %c0_0 = arith.constant 0 : index
    %0 = vector.load %arg1[%c0, %c0_0] : memref<512x128xbf16, #tpu.memory_space<vmem>>, vector<512x128xbf16>
    %1 = arith.extf %0 : vector<512x128xbf16> to vector<512x128xf32>
    %cst = arith.constant 0.000000e+00 : f32
    %2 = vector.broadcast %cst : f32 to vector<512x128xf32>
    %3 = arith.maximumf %1, %2 : vector<512x128xf32>
    %4 = arith.truncf %3 : vector<512x128xf32> to vector<512x128xbf16>
    %c0_1 = arith.constant 0 : index
    %c0_2 = arith.constant 0 : index
    %c0_3 = arith.constant 0 : index
    %5 = vector.load %arg2[%c0_1, %c0_2, %c0_3] : memref<2x128x128xbf16, #tpu.memory_space<vmem>>, vector<1x128x128xbf16>
    %6 = vector.shape_cast %5 : vector<1x128x128xbf16> to vector<128x128xbf16>
    %cst_4 = arith.constant dense<0.000000e+00> : vector<512x128xf32>
    %7 = tpu.matmul %4, %6, %cst_4 {dimension_numbers = #tpu.dot_dimension_numbers<[1], [0], [0], [1], [0, 0, 1, 1], [], []>} : vector<512x128xbf16>, vector<128x128xbf16>, vector<512x128xf32> -> vector<512x128xf32>
    %c0_5 = arith.constant 0 : index
    %c0_6 = arith.constant 0 : index
    %c0_7 = arith.constant 0 : index
    %8 = vector.load %arg3[%c0_5, %c0_6, %c0_7] : memref<2x1x128xf32, #tpu.memory_space<vmem>>, vector<1x1x128xf32>
    %9 = vector.shape_cast %8 : vector<1x1x128xf32> to vector<1x128xf32>
    %10 = vector.broadcast %9 : vector<1x128xf32> to vector<512x128xf32>
    %11 = arith.addf %7, %10 : vector<512x128xf32>
    %cst_8 = arith.constant 0.000000e+00 : f32
    %12 = vector.broadcast %cst_8 : f32 to vector<512x128xf32>
    %13 = arith.maximumf %11, %12 : vector<512x128xf32>
    %14 = arith.truncf %13 : vector<512x128xf32> to vector<512x128xbf16>
    %c0_9 = arith.constant 0 : index
    %c0_10 = arith.constant 0 : index
    %c0_11 = arith.constant 0 : index
    %15 = vector.load %arg4[%c0_9, %c0_10, %c0_11] : memref<2x128x128xbf16, #tpu.memory_space<vmem>>, vector<1x128x128xbf16>
    %16 = vector.shape_cast %15 : vector<1x128x128xbf16> to vector<128x128xbf16>
    %cst_12 = arith.constant dense<0.000000e+00> : vector<512x128xf32>
    %17 = tpu.matmul %14, %16, %cst_12 {dimension_numbers = #tpu.dot_dimension_numbers<[1], [0], [0], [1], [0, 0, 1, 1], [], []>} : vector<512x128xbf16>, vector<128x128xbf16>, vector<512x128xf32> -> vector<512x128xf32>
    %c0_13 = arith.constant 0 : index
    %c0_14 = arith.constant 0 : index
    %c0_15 = arith.constant 0 : index
    %18 = vector.load %arg5[%c0_13, %c0_14, %c0_15] : memref<2x1x128xf32, #tpu.memory_space<vmem>>, vector<1x1x128xf32>
    %19 = vector.shape_cast %18 : vector<1x1x128xf32> to vector<1x128xf32>
    %20 = vector.broadcast %19 : vector<1x128xf32> to vector<512x128xf32>
    %21 = arith.addf %17, %20 : vector<512x128xf32>
    %22 = arith.addf %1, %21 : vector<512x128xf32>
    %cst_16 = arith.constant 0.000000e+00 : f32
    %23 = vector.broadcast %cst_16 : f32 to vector<512x128xf32>
    %24 = arith.maximumf %22, %23 : vector<512x128xf32>
    %25 = arith.truncf %24 : vector<512x128xf32> to vector<512x128xbf16>
    %c1 = arith.constant 1 : index
    %c0_17 = arith.constant 0 : index
    %c0_18 = arith.constant 0 : index
    %26 = vector.load %arg2[%c1, %c0_17, %c0_18] : memref<2x128x128xbf16, #tpu.memory_space<vmem>>, vector<1x128x128xbf16>
    %27 = vector.shape_cast %26 : vector<1x128x128xbf16> to vector<128x128xbf16>
    %cst_19 = arith.constant dense<0.000000e+00> : vector<512x128xf32>
    %28 = tpu.matmul %25, %27, %cst_19 {dimension_numbers = #tpu.dot_dimension_numbers<[1], [0], [0], [1], [0, 0, 1, 1], [], []>} : vector<512x128xbf16>, vector<128x128xbf16>, vector<512x128xf32> -> vector<512x128xf32>
    %c1_20 = arith.constant 1 : index
    %c0_21 = arith.constant 0 : index
    %c0_22 = arith.constant 0 : index
    %29 = vector.load %arg3[%c1_20, %c0_21, %c0_22] : memref<2x1x128xf32, #tpu.memory_space<vmem>>, vector<1x1x128xf32>
    %30 = vector.shape_cast %29 : vector<1x1x128xf32> to vector<1x128xf32>
    %31 = vector.broadcast %30 : vector<1x128xf32> to vector<512x128xf32>
    %32 = arith.addf %28, %31 : vector<512x128xf32>
    %cst_23 = arith.constant 0.000000e+00 : f32
    %33 = vector.broadcast %cst_23 : f32 to vector<512x128xf32>
    %34 = arith.maximumf %32, %33 : vector<512x128xf32>
    %35 = arith.truncf %34 : vector<512x128xf32> to vector<512x128xbf16>
    %c1_24 = arith.constant 1 : index
    %c0_25 = arith.constant 0 : index
    %c0_26 = arith.constant 0 : index
    %36 = vector.load %arg4[%c1_24, %c0_25, %c0_26] : memref<2x128x128xbf16, #tpu.memory_space<vmem>>, vector<1x128x128xbf16>
    %37 = vector.shape_cast %36 : vector<1x128x128xbf16> to vector<128x128xbf16>
    %cst_27 = arith.constant dense<0.000000e+00> : vector<512x128xf32>
    %38 = tpu.matmul %35, %37, %cst_27 {dimension_numbers = #tpu.dot_dimension_numbers<[1], [0], [0], [1], [0, 0, 1, 1], [], []>} : vector<512x128xbf16>, vector<128x128xbf16>, vector<512x128xf32> -> vector<512x128xf32>
    %c1_28 = arith.constant 1 : index
    %c0_29 = arith.constant 0 : index
    %c0_30 = arith.constant 0 : index
    %39 = vector.load %arg5[%c1_28, %c0_29, %c0_30] : memref<2x1x128xf32, #tpu.memory_space<vmem>>, vector<1x1x128xf32>
    %40 = vector.shape_cast %39 : vector<1x1x128xf32> to vector<1x128xf32>
    %41 = vector.broadcast %40 : vector<1x128xf32> to vector<512x128xf32>
    %42 = arith.addf %38, %41 : vector<512x128xf32>
    %43 = arith.addf %22, %42 : vector<512x128xf32>
    %44 = arith.truncf %43 : vector<512x128xf32> to vector<512x128xbf16>
    %c0_31 = arith.constant 0 : index
    %c0_32 = arith.constant 0 : index
    %45 = vector.load %arg6[%c0_31, %c0_32] : memref<128x16xbf16, #tpu.memory_space<vmem>>, vector<128x16xbf16>
    %cst_33 = arith.constant dense<0.000000e+00> : vector<512x16xf32>
    %46 = tpu.matmul %44, %45, %cst_33 {dimension_numbers = #tpu.dot_dimension_numbers<[1], [0], [0], [1], [0, 0, 1, 1], [], []>} : vector<512x128xbf16>, vector<128x16xbf16>, vector<512x16xf32> -> vector<512x16xf32>
    %c0_34 = arith.constant 0 : index
    %c0_35 = arith.constant 0 : index
    %47 = vector.load %arg7[%c0_34, %c0_35] : memref<1x16xf32, #tpu.memory_space<vmem>>, vector<1x16xf32>
    %48 = vector.broadcast %47 : vector<1x16xf32> to vector<512x16xf32>
    %49 = arith.addf %46, %48 : vector<512x16xf32>
    %50 = arith.negf %49 : vector<512x16xf32>
    %51 = math.exp %50 : vector<512x16xf32>
    %cst_36 = arith.constant 1.000000e+00 : f32
    %52 = vector.broadcast %cst_36 : f32 to vector<512x16xf32>
    %53 = arith.addf %52, %51 : vector<512x16xf32>
    %54 = arith.divf %52, %53 : vector<512x16xf32>
    %55 = arith.truncf %54 : vector<512x16xf32> to vector<512x16xbf16>
    %c0_37 = arith.constant 0 : index
    %c0_38 = arith.constant 0 : index
    %56 = vector.load %arg8[%c0_37, %c0_38] : memref<512x16xbf16, #tpu.memory_space<vmem>>, vector<512x16xbf16>
    tpu.vector_store %arg8[%c0_37, %c0_38], %55 {strides = array<i32>} : memref<512x16xbf16, #tpu.memory_space<vmem>>, vector<512x16xbf16>,
    return
  }
  func.func @transform_0(%arg0: i32) -> (i32, i32) {
    %c0_i32 = arith.constant 0 : i32
    %c0_i32_0 = arith.constant 0 : i32
    return %arg0, %c0_i32 : i32, i32
  }
  func.func @transform_1(%arg0: i32) -> (i32, i32, i32) {
    %c0_i32 = arith.constant 0 : i32
    %c0_i32_0 = arith.constant 0 : i32
    %c0_i32_1 = arith.constant 0 : i32
    %c0_i32_2 = arith.constant 0 : i32
    return %c0_i32, %c0_i32_0, %c0_i32_1 : i32, i32, i32
  }
  func.func @transform_2(%arg0: i32) -> (i32, i32, i32) {
    %c0_i32 = arith.constant 0 : i32
    %c0_i32_0 = arith.constant 0 : i32
    %c0_i32_1 = arith.constant 0 : i32
    %c0_i32_2 = arith.constant 0 : i32
    return %c0_i32, %c0_i32_0, %c0_i32_1 : i32, i32, i32
  }
  func.func @transform_3(%arg0: i32) -> (i32, i32, i32) {
    %c0_i32 = arith.constant 0 : i32
    %c0_i32_0 = arith.constant 0 : i32
    %c0_i32_1 = arith.constant 0 : i32
    %c0_i32_2 = arith.constant 0 : i32
    return %c0_i32, %c0_i32_0, %c0_i32_1 : i32, i32, i32
  }
  func.func @transform_4(%arg0: i32) -> (i32, i32, i32) {
    %c0_i32 = arith.constant 0 : i32
    %c0_i32_0 = arith.constant 0 : i32
    %c0_i32_1 = arith.constant 0 : i32
    %c0_i32_2 = arith.constant 0 : i32
    return %c0_i32, %c0_i32_0, %c0_i32_1 : i32, i32, i32
  }
  func.func @transform_5(%arg0: i32) -> (i32, i32) {
    %c0_i32 = arith.constant 0 : i32
    %c0_i32_0 = arith.constant 0 : i32
    %c0_i32_1 = arith.constant 0 : i32
    return %c0_i32, %c0_i32_0 : i32, i32
  }
  func.func @transform_6(%arg0: i32) -> (i32, i32) {
    %c0_i32 = arith.constant 0 : i32
    %c0_i32_0 = arith.constant 0 : i32
    %c0_i32_1 = arith.constant 0 : i32
    return %c0_i32, %c0_i32_0 : i32, i32
  }
  func.func @transform_7(%arg0: i32) -> (i32, i32) {
    %c0_i32 = arith.constant 0 : i32
    %c0_i32_0 = arith.constant 0 : i32
    return %arg0, %c0_i32 : i32, i32
  }
}

</mosaic_0001>

<llo_original>
// kernel: pixelnerf_forward.1
$region0: #{pixelnerf_forward.1}
  #allocation0 [shape = 'u32[]', space=smem, size = 0x4, offset = 0x4, fixed_abs, tag = 'smem constant byte address 0x4 - core index']
  #allocation1 [shape = 'u32[72,128]{1,0:T(1,128)}', space=vmem, size = 0x9000, scoped, tag = 'internal scratch']
  %s0 = inlined_call_operand.vmem [shape: bf16[2000,128], index: 0, kind: input, shape index: {}]
  %s1 = inlined_call_operand.vmem [shape: bf16[2,128,128], index: 1, kind: input, shape index: {}]
  %s2 = inlined_call_operand.vmem [shape: f32[2,1,128], index: 2, kind: input, shape index: {}]
  %s3 = inlined_call_operand.vmem [shape: bf16[2,128,128], index: 3, kind: input, shape index: {}]
  %s4 = inlined_call_operand.vmem [shape: f32[2,1,128], index: 4, kind: input, shape index: {}]
  %s5 = inlined_call_operand.vmem [shape: bf16[128,16], index: 5, kind: input, shape index: {}]
  %s6 = inlined_call_operand.vmem [shape: f32[1,16], index: 6, kind: input, shape index: {}]
  %s7 = inlined_call_operand.vmem [shape: bf16[2000,16], index: 7, kind: output, shape index: {}]
  %s8 = sld [smem:[#allocation0]]
  $region105: #{pixelnerf_forward.1} parent=0
    _
  %s10 = ssub.s32 1, %s8
  %s11 = scalar_select 0, %s10, %s8
  $region1: #{pixelnerf_forward.1} parent=0
    #allocation2 [shape = 'u8[262144]{0}', space=vmem, size = 0x40000, scoped, tag = 'output window, operand 0']
    loop: start=0, step=1, limit=6
    $region2: #{pixelnerf_forward.1} parent=1 // loop_pre_header
      _
    $region3: #{pixelnerf_forward.1} parent=1 // loop_header
      %s13 = sphi 0, %s17
      %p14 = scmp.ge.s32.totalorder %s13, 6
      %s23 = sphi 0, %s25
      %s26 = sphi 0, %s23
      %s27 = sphi 0, %s26
      %s43 = sphi 0, %s27
      %s47 = sphi 0, %s47
      %s49 = sphi 0, %s47
      %s50 = sphi 0, %s49
      %s64 = sphi 0, %s50
      %s68 = sphi 0, %s68
      %s70 = sphi 0, %s68
      %s71 = sphi 0, %s70
      %s85 = sphi 0, %s71
      %s89 = sphi 0, %s89
      %s91 = sphi 0, %s89
      %s92 = sphi 0, %s91
      %s106 = sphi 0, %s92
      %s110 = sphi 0, %s110
      %s112 = sphi 0, %s110
      %s113 = sphi 0, %s112
      %s127 = sphi 0, %s113
      %s131 = sphi 0, %s131
      %s133 = sphi 0, %s131
      %s134 = sphi 0, %s133
      %s148 = sphi 0, %s134
      %s152 = sphi 0, %s152
      %s154 = sphi 0, %s152
      %s155 = sphi 0, %s154
      %s169 = sphi 0, %s155
      %s175 = sphi 0, %s177
      %s178 = sphi 0, %s175
      %s179 = sphi 0, %s178
      %s195 = sphi 0, %s179
    $region4: #{pixelnerf_forward.1} parent=1 // loop_header_branch
      %16 = sbr.rel (%p14) target = $region8
    $region5: #{pixelnerf_forward.1} parent=1 // loop_body
      %s18 = ssub.s32 %s13, 1
      %s19 = ssub.s32 %s13, 2
      %s20 = sadd.s32 %s13, 1
      %s21 = ssub.s32 %s13, %s20
      %p22 = scmp.eq.s32.totalorder %s21, 0
      %s24 = sadd.s32 %s23, 1
      %s25 = scalar_select %p22, %s23, %s24
      %p28 = pneg %p22
      %p29 = scmp.eq.s32.totalorder %s13, 3
      %p30 = por %p28, %p29
      %p31 = scmp.ne.s32.totalorder %s23, %s26
      %p32 = scmp.eq.s32.totalorder %s13, 0
      %p33 = por %p31, %p32
      %p34 = scmp.ne.s32.totalorder %s23, %s26
      %p35 = scmp.eq.s32.totalorder %s18, 3
      %p36 = por %p34, %p35
      %p37 = scmp.ne.s32.totalorder %s26, %s27
      %p38 = scmp.eq.s32.totalorder %s18, 0
      %p39 = por %p37, %p38
      %p40 = scmp.ne.s32.totalorder %s26, %s27
      %p41 = scmp.eq.s32.totalorder %s19, 3
      %p42 = por %p40, %p41
      %p44 = scmp.ne.s32.totalorder %s27, %s43
      %p45 = scmp.eq.s32.totalorder %s19, 0
      %p46 = por %p44, %p45
      %s48 = sadd.s32 %s47, 1
      %p51 = scmp.eq.s32.totalorder %s13, 3
      %p52 = scmp.ne.s32.totalorder %s47, %s49
      %p53 = scmp.eq.s32.totalorder %s13, 0
      %p54 = por %p52, %p53
      %p55 = scmp.ne.s32.totalorder %s47, %s49
      %p56 = scmp.eq.s32.totalorder %s18, 3
      %p57 = por %p55, %p56
      %p58 = scmp.ne.s32.totalorder %s49, %s50
      %p59 = scmp.eq.s32.totalorder %s18, 0
      %p60 = por %p58, %p59
      %p61 = scmp.ne.s32.totalorder %s49, %s50
      %p62 = scmp.eq.s32.totalorder %s19, 3
      %p63 = por %p61, %p62
      %p65 = scmp.ne.s32.totalorder %s50, %s64
      %p66 = scmp.eq.s32.totalorder %s19, 0
      %p67 = por %p65, %p66
      %s69 = sadd.s32 %s68, 1
      %p72 = scmp.eq.s32.totalorder %s13, 3
      %p73 = scmp.ne.s32.totalorder %s68, %s70
      %p74 = scmp.eq.s32.totalorder %s13, 0
      %p75 = por %p73, %p74
      %p76 = scmp.ne.s32.totalorder %s68, %s70
      %p77 = scmp.eq.s32.totalorder %s18, 3
      %p78 = por %p76, %p77
      %p79 = scmp.ne.s32.totalorder %s70, %s71
      %p80 = scmp.eq.s32.totalorder %s18, 0
      %p81 = por %p79, %p80
      %p82 = scmp.ne.s32.totalorder %s70, %s71
      %p83 = scmp.eq.s32.totalorder %s19, 3
      %p84 = por %p82, %p83
      %p86 = scmp.ne.s32.totalorder %s71, %s85
      %p87 = scmp.eq.s32.totalorder %s19, 0
      %p88 = por %p86, %p87
      %s90 = sadd.s32 %s89, 1
      %p93 = scmp.eq.s32.totalorder %s13, 3
      %p94 = scmp.ne.s32.totalorder %s89, %s91
      %p95 = scmp.eq.s32.totalorder %s13, 0
      %p96 = por %p94, %p95
      %p97 = scmp.ne.s32.totalorder %s89, %s91
      %p98 = scmp.eq.s32.totalorder %s18, 3
      %p99 = por %p97, %p98
      %p100 = scmp.ne.s32.totalorder %s91, %s92
      %p101 = scmp.eq.s32.totalorder %s18, 0
      %p102 = por %p100, %p101
      %p103 = scmp.ne.s32.totalorder %s91, %s92
      %p104 = scmp.eq.s32.totalorder %s19, 3
      %p105 = por %p103, %p104
      %p107 = scmp.ne.s32.totalorder %s92, %s106
      %p108 = scmp.eq.s32.totalorder %s19, 0
      %p109 = por %p107, %p108
      %s111 = sadd.s32 %s110, 1
      %p114 = scmp.eq.s32.totalorder %s13, 3
      %p115 = scmp.ne.s32.totalorder %s110, %s112
      %p116 = scmp.eq.s32.totalorder %s13, 0
      %p117 = por %p115, %p116
      %p118 = scmp.ne.s32.totalorder %s110, %s112
      %p119 = scmp.eq.s32.totalorder %s18, 3
      %p120 = por %p118, %p119
      %p121 = scmp.ne.s32.totalorder %s112, %s113
      %p122 = scmp.eq.s32.totalorder %s18, 0
      %p123 = por %p121, %p122
      %p124 = scmp.ne.s32.totalorder %s112, %s113
      %p125 = scmp.eq.s32.totalorder %s19, 3
      %p126 = por %p124, %p125
      %p128 = scmp.ne.s32.totalorder %s113, %s127
      %p129 = scmp.eq.s32.totalorder %s19, 0
      %p130 = por %p128, %p129
      %s132 = sadd.s32 %s131, 1
      %p135 = scmp.eq.s32.totalorder %s13, 3
      %p136 = scmp.ne.s32.totalorder %s131, %s133
      %p137 = scmp.eq.s32.totalorder %s13, 0
      %p138 = por %p136, %p137
      %p139 = scmp.ne.s32.totalorder %s131, %s133
      %p140 = scmp.eq.s32.totalorder %s18, 3
      %p141 = por %p139, %p140
      %p142 = scmp.ne.s32.totalorder %s133, %s134
      %p143 = scmp.eq.s32.totalorder %s18, 0
      %p144 = por %p142, %p143
      %p145 = scmp.ne.s32.totalorder %s133, %s134
      %p146 = scmp.eq.s32.totalorder %s19, 3
      %p147 = por %p145, %p146
      %p149 = scmp.ne.s32.totalorder %s134, %s148
      %p150 = scmp.eq.s32.totalorder %s19, 0
      %p151 = por %p149, %p150
      %s153 = sadd.s32 %s152, 1
      %p156 = scmp.eq.s32.totalorder %s13, 3
      %p157 = scmp.ne.s32.totalorder %s152, %s154
      %p158 = scmp.eq.s32.totalorder %s13, 0
      %p159 = por %p157, %p158
      %p160 = scmp.ne.s32.totalorder %s152, %s154
      %p161 = scmp.eq.s32.totalorder %s18, 3
      %p162 = por %p160, %p161
      %p163 = scmp.ne.s32.totalorder %s154, %s155
      %p164 = scmp.eq.s32.totalorder %s18, 0
      %p165 = por %p163, %p164
      %p166 = scmp.ne.s32.totalorder %s154, %s155
      %p167 = scmp.eq.s32.totalorder %s19, 3
      %p168 = por %p166, %p167
      %p170 = scmp.ne.s32.totalorder %s155, %s169
      %p171 = scmp.eq.s32.totalorder %s19, 0
      %p172 = por %p170, %p171
      %s173 = ssub.s32 %s13, %s20
      %p174 = scmp.eq.s32.totalorder %s173, 0
      %s176 = sadd.s32 %s175, 1
      %s177 = scalar_select %p174, %s175, %s176
      %p180 = pneg %p174
      %p181 = scmp.eq.s32.totalorder %s13, 3
      %p182 = por %p180, %p181
      %p183 = scmp.ne.s32.totalorder %s175, %s178
      %p184 = scmp.eq.s32.totalorder %s13, 0
      %p185 = por %p183, %p184
      %p186 = scmp.ne.s32.totalorder %s175, %s178
      %p187 = scmp.eq.s32.totalorder %s18, 3
      %p188 = por %p186, %p187
      %p189 = scmp.ne.s32.totalorder %s178, %s179
      %p190 = scmp.eq.s32.totalorder %s18, 0
      %p191 = por %p189, %p190
      %p192 = scmp.ne.s32.totalorder %s178, %s179
      %p193 = scmp.eq.s32.totalorder %s19, 3
      %p194 = por %p192, %p193
      %p196 = scmp.ne.s32.totalorder %s179, %s195
      %p197 = scmp.eq.s32.totalorder %s19, 0
      %p198 = por %p196, %p197
      %p199 = scmp.le.s32.totalorder 1, %s13
      %p200 = scmp.lt.s32.totalorder %s13, 5
      %p201 = pnand %p199, %p200
      %p202 = pneg %p201
      // Predicated region
      $region9: #{pixelnerf_forward.1} parent=5 // pred_check
        _
      $region10: #{pixelnerf_forward.1} parent=5 // pred_check_branch
        %204 = sbr.rel (%p201) target = $region12
      $region11: #{pixelnerf_forward.1} parent=5 // pred_region
        %s205 = ssub.s32 %s13, 1
        // Predicated region
        $region13: #{pixelnerf_forward.1} parent=11 // pred_check
          %p206 = pneg %p60
        $region14: #{pixelnerf_forward.1} parent=11 // pred_check_branch
          %208 = sbr.rel (%p206) target = $region16
        $region15: #{pixelnerf_forward.1} parent=11 // pred_region
          _
        $region16: #{pixelnerf_forward.1} parent=11 // pred_fallthru
          _
        // Predicated region
        $region17: #{pixelnerf_forward.1} parent=11 // pred_check
          %p209 = pneg %p81
        $region18: #{pixelnerf_forward.1} parent=11 // pred_check_branch
          %211 = sbr.rel (%p209) target = $region20
        $region19: #{pixelnerf_forward.1} parent=11 // pred_region
          _
        $region20: #{pixelnerf_forward.1} parent=11 // pred_fallthru
          _
        // Predicated region
        $region21: #{pixelnerf_forward.1} parent=11 // pred_check
          %p212 = pneg %p102
        $region22: #{pixelnerf_forward.1} parent=11 // pred_check_branch
          %214 = sbr.rel (%p212) target = $region24
        $region23: #{pixelnerf_forward.1} parent=11 // pred_region
          _
        $region24: #{pixelnerf_forward.1} parent=11 // pred_fallthru
          _
        // Predicated region
        $region25: #{pixelnerf_forward.1} parent=11 // pred_check
          %p215 = pneg %p123
        $region26: #{pixelnerf_forward.1} parent=11 // pred_check_branch
          %217 = sbr.rel (%p215) target = $region28
        $region27: #{pixelnerf_forward.1} parent=11 // pred_region
          _
        $region28: #{pixelnerf_forward.1} parent=11 // pred_fallthru
          _
        // Predicated region
        $region29: #{pixelnerf_forward.1} parent=11 // pred_check
          %p218 = pneg %p144
        $region30: #{pixelnerf_forward.1} parent=11 // pred_check_branch
          %220 = sbr.rel (%p218) target = $region32
        $region31: #{pixelnerf_forward.1} parent=11 // pred_region
          _
        $region32: #{pixelnerf_forward.1} parent=11 // pred_fallthru
          _
        // Predicated region
        $region33: #{pixelnerf_forward.1} parent=11 // pred_check
          %p221 = pneg %p165
        $region34: #{pixelnerf_forward.1} parent=11 // pred_check_branch
          %223 = sbr.rel (%p221) target = $region36
        $region35: #{pixelnerf_forward.1} parent=11 // pred_region
          _
        $region36: #{pixelnerf_forward.1} parent=11 // pred_fallthru
          _
      $region12: #{pixelnerf_forward.1} parent=5 // pred_fallthru
        _
      %p224 = scmp.lt.s32.totalorder %s13, 4
      // Predicated region
      $region37: #{pixelnerf_forward.1} parent=5 // pred_check
        %p225 = pneg %p224
      $region38: #{pixelnerf_forward.1} parent=5 // pred_check_branch
        %227 = sbr.rel (%p225) target = $region40
      $region39: #{pixelnerf_forward.1} parent=5 // pred_region
        // Predicated region
        $region41: #{pixelnerf_forward.1} parent=39 // pred_check
          %p228 = pneg %p33
        $region42: #{pixelnerf_forward.1} parent=39 // pred_check_branch
          %230 = sbr.rel (%p228) target = $region44
        $region43: #{pixelnerf_forward.1} parent=39 // pred_region
          %s231 = smul.u32 64, %s13
          %s232 = ssub.s32 250, %s231
          %p233 = scmp.lt.s32.totalorder %s232, 64
          %s234 = scalar_select %p233, %s232, 64
          %s235 = smul.u32 4, %s234
          %p236 = scmp.lt.s32.totalorder %s231, 249
          %s237 = scalar_select %p236, %s231, 249
          %s238 = smul.addr %s237, 4
          %s239 = scalar_lea.vmem %s0, %s238
          %s240 = smul.u32 64, %s13
          %s241 = ssub.s32 250, %s240
          %p242 = scmp.lt.s32.totalorder %s241, 64
          %s243 = scalar_select %p242, %s241, 64
          %s244 = smul.u32 4, %s243
        $region44: #{pixelnerf_forward.1} parent=39 // pred_fallthru
          _
      $region40: #{pixelnerf_forward.1} parent=5 // pred_fallthru
        _
      %p245 = scmp.le.s32.totalorder 1, %s13
      %p246 = scmp.lt.s32.totalorder %s13, 5
      %p247 = pnand %p245, %p246
      %p248 = pneg %p247
      // Predicated region
      $region45: #{pixelnerf_forward.1} parent=5 // pred_check
        _
      $region46: #{pixelnerf_forward.1} parent=5 // pred_check_branch
        %250 = sbr.rel (%p247) target = $region48
      $region47: #{pixelnerf_forward.1} parent=5 // pred_region
        %s251 = ssub.s32 %s13, 1
        %s252 = smul.u32 64, %s18
        %s253 = ssub.s32 250, %s252
        %p254 = scmp.lt.s32.totalorder %s253, 64
        %s255 = scalar_select %p254, %s253, 64
        %s256 = smul.u32 4, %s255
        %p257 = scmp.lt.s32.totalorder %s252, 249
        %s258 = scalar_select %p257, %s252, 249
        %s259 = smul.addr %s258, 4
        %s260 = scalar_lea.vmem %s0, %s259
        %p261 = pneg %p39
        %p262 = pneg %p36
        %p263 = pneg %p60
        %p264 = pneg %p57
        %p265 = pneg %p81
        %p266 = pneg %p78
        %p267 = pneg %p102
        %p268 = pneg %p99
        %p269 = pneg %p123
        %p270 = pneg %p120
        %p271 = pneg %p144
        %p272 = pneg %p141
        %p273 = pneg %p165
        %p274 = pneg %p162
        %p275 = pneg %p191
        %p276 = pneg %p188
        %s277 = sand.u32 %s178, 1
        %s278 = sand.u32 %s178, 1
        %s279 = smul.addr %s278, 256
        %s280 = scalar_lea.vmem [#allocation2], %s279
        %s281 = smul.u32 64, %s18
        %s282 = ssub.s32 250, %s281
        %p283 = scmp.lt.s32.totalorder %s282, 64
        %s284 = scalar_select %p283, %s282, 64
        %s285 = smul.u32 4, %s284
        %p286 = scmp.lt.s32.totalorder %s281, 249
        %s287 = scalar_select %p286, %s281, 249
        %s288 = smul.addr %s287, 4
        %s289 = scalar_lea.vmem %s0, %s288
        %s290 = smul.u32 64, %s18
        %s291 = ssub.s32 250, %s290
        %p292 = scmp.lt.s32.totalorder %s291, 64
        %s293 = scalar_select %p292, %s291, 64
        %s294 = smul.u32 4, %s293
        %s295 = smul.u32 64, %s18
        %s296 = ssub.s32 250, %s295
        %p297 = scmp.lt.s32.totalorder %s296, 64
        %s298 = scalar_select %p297, %s296, 64
        %s299 = smul.u32 4, %s298
        %v300 = vld [vmem:[%s289] sm:$0xf]
        %v301 = vld [vmem:[%s289 + $0x4] sm:$0xf]
        %v302 = vld [vmem:[%s289 + $0x8] sm:$0xf]
        %v303 = vld [vmem:[%s289 + $0xc] sm:$0xf]
        %v304 = vld [vmem:[%s289 + $0x10] sm:$0xf]
        %v305 = vld [vmem:[%s289 + $0x14] sm:$0xf]
        %v306 = vld [vmem:[%s289 + $0x18] sm:$0xf]
        %v307 = vld [vmem:[%s289 + $0x1c] sm:$0xf]
        %v308 = vld [vmem:[%s289 + $0x20] sm:$0xf]
        %v309 = vld [vmem:[%s289 + $0x24] sm:$0xf]
        %v310 = vld [vmem:[%s289 + $0x28] sm:$0xf]
        %v311 = vld [vmem:[%s289 + $0x2c] sm:$0xf]
        %v312 = vld [vmem:[%s289 + $0x30] sm:$0xf]
        %v313 = vld [vmem:[%s289 + $0x34] sm:$0xf]
        %v314 = vld [vmem:[%s289 + $0x38] sm:$0xf]
        %v315 = vld [vmem:[%s289 + $0x3c] sm:$0xf]
        %v316 = vld [vmem:[%s289 + $0x40] sm:$0xf]
        %v317 = vld [vmem:[%s289 + $0x44] sm:$0xf]
        %v318 = vld [vmem:[%s289 + $0x48] sm:$0xf]
        %v319 = vld [vmem:[%s289 + $0x4c] sm:$0xf]
        %v320 = vld [vmem:[%s289 + $0x50] sm:$0xf]
        %v321 = vld [vmem:[%s289 + $0x54] sm:$0xf]
        %v322 = vld [vmem:[%s289 + $0x58] sm:$0xf]
        %v323 = vld [vmem:[%s289 + $0x5c] sm:$0xf]
        %v324 = vld [vmem:[%s289 + $0x60] sm:$0xf]
        %v325 = vld [vmem:[%s289 + $0x64] sm:$0xf]
        %v326 = vld [vmem:[%s289 + $0x68] sm:$0xf]
        %v327 = vld [vmem:[%s289 + $0x6c] sm:$0xf]
        %v328 = vld [vmem:[%s289 + $0x70] sm:$0xf]
        %v329 = vld [vmem:[%s289 + $0x74] sm:$0xf]
        %v330 = vld [vmem:[%s289 + $0x78] sm:$0xf]
        %v331 = vld [vmem:[%s289 + $0x7c] sm:$0xf]
        %v332 = vld [vmem:[%s289 + $0x80] sm:$0xf]
        %v333 = vld [vmem:[%s289 + $0x84] sm:$0xf]
        %v334 = vld [vmem:[%s289 + $0x88] sm:$0xf]
        %v335 = vld [vmem:[%s289 + $0x8c] sm:$0xf]
        %v336 = vld [vmem:[%s289 + $0x90] sm:$0xf]
        %v337 = vld [vmem:[%s289 + $0x94] sm:$0xf]
        %v338 = vld [vmem:[%s289 + $0x98] sm:$0xf]
        %v339 = vld [vmem:[%s289 + $0x9c] sm:$0xf]
        %v340 = vld [vmem:[%s289 + $0xa0] sm:$0xf]
        %v341 = vld [vmem:[%s289 + $0xa4] sm:$0xf]
        %v342 = vld [vmem:[%s289 + $0xa8] sm:$0xf]
        %v343 = vld [vmem:[%s289 + $0xac] sm:$0xf]
        %v344 = vld [vmem:[%s289 + $0xb0] sm:$0xf]
        %v345 = vld [vmem:[%s289 + $0xb4] sm:$0xf]
        %v346 = vld [vmem:[%s289 + $0xb8] sm:$0xf]
        %v347 = vld [vmem:[%s289 + $0xbc] sm:$0xf]
        %v348 = vld [vmem:[%s289 + $0xc0] sm:$0xf]
        %v349 = vld [vmem:[%s289 + $0xc4] sm:$0xf]
        %v350 = vld [vmem:[%s289 + $0xc8] sm:$0xf]
        %v351 = vld [vmem:[%s289 + $0xcc] sm:$0xf]
        %v352 = vld [vmem:[%s289 + $0xd0] sm:$0xf]
        %v353 = vld [vmem:[%s289 + $0xd4] sm:$0xf]
        %v354 = vld [vmem:[%s289 + $0xd8] sm:$0xf]
        %v355 = vld [vmem:[%s289 + $0xdc] sm:$0xf]
        %v356 = vld [vmem:[%s289 + $0xe0] sm:$0xf]
        %v357 = vld [vmem:[%s289 + $0xe4] sm:$0xf]
        %v358 = vld [vmem:[%s289 + $0xe8] sm:$0xf]
        %v359 = vld [vmem:[%s289 + $0xec] sm:$0xf]
        %v360 = vld [vmem:[%s289 + $0xf0] sm:$0xf]
        %v361 = vld [vmem:[%s289 + $0xf4] sm:$0xf]
        %v362 = vld [vmem:[%s289 + $0xf8] sm:$0xf]
        %v363 = vld [vmem:[%s289 + $0xfc] sm:$0xf]
        %v364 = vunpack.c.l.bf16 %v300
        %v365 = vunpack.c.l.bf16 %v301
        %v366 = vunpack.c.l.bf16 %v302
        %v367 = vunpack.c.l.bf16 %v303
        %v368 = vunpack.c.l.bf16 %v304
        %v369 = vunpack.c.l.bf16 %v305
        %v370 = vunpack.c.l.bf16 %v306
        %v371 = vunpack.c.l.bf16 %v307
        %v372 = vunpack.c.l.bf16 %v308
        %v373 = vunpack.c.l.bf16 %v309
        %v374 = vunpack.c.l.bf16 %v310
        %v375 = vunpack.c.l.bf16 %v311
        %v376 = vunpack.c.l.bf16 %v312
        %v377 = vunpack.c.l.bf16 %v313
        %v378 = vunpack.c.l.bf16 %v314
        %v379 = vunpack.c.l.bf16 %v315
        %v380 = vunpack.c.l.bf16 %v316
        %v381 = vunpack.c.l.bf16 %v317
        %v382 = vunpack.c.l.bf16 %v318
        %v383 = vunpack.c.l.bf16 %v319
        %v384 = vunpack.c.l.bf16 %v320
        %v385 = vunpack.c.l.bf16 %v321
        %v386 = vunpack.c.l.bf16 %v322
        %v387 = vunpack.c.l.bf16 %v323
        %v388 = vunpack.c.l.bf16 %v324
        %v389 = vunpack.c.l.bf16 %v325
        %v390 = vunpack.c.l.bf16 %v326
        %v391 = vunpack.c.l.bf16 %v327
        %v392 = vunpack.c.l.bf16 %v328
        %v393 = vunpack.c.l.bf16 %v329
        %v394 = vunpack.c.l.bf16 %v330
        %v395 = vunpack.c.l.bf16 %v331
        %v396 = vunpack.c.l.bf16 %v332
        %v397 = vunpack.c.l.bf16 %v333
        %v398 = vunpack.c.l.bf16 %v334
        %v399 = vunpack.c.l.bf16 %v335
        %v400 = vunpack.c.l.bf16 %v336
        %v401 = vunpack.c.l.bf16 %v337
        %v402 = vunpack.c.l.bf16 %v338
        %v403 = vunpack.c.l.bf16 %v339
        %v404 = vunpack.c.l.bf16 %v340
        %v405 = vunpack.c.l.bf16 %v341
        %v406 = vunpack.c.l.bf16 %v342
        %v407 = vunpack.c.l.bf16 %v343
        %v408 = vunpack.c.l.bf16 %v344
        %v409 = vunpack.c.l.bf16 %v345
        %v410 = vunpack.c.l.bf16 %v346
        %v411 = vunpack.c.l.bf16 %v347
        %v412 = vunpack.c.l.bf16 %v348
        %v413 = vunpack.c.l.bf16 %v349
        %v414 = vunpack.c.l.bf16 %v350
        %v415 = vunpack.c.l.bf16 %v351
        %v416 = vunpack.c.l.bf16 %v352
        %v417 = vunpack.c.l.bf16 %v353
        %v418 = vunpack.c.l.bf16 %v354
        %v419 = vunpack.c.l.bf16 %v355
        %v420 = vunpack.c.l.bf16 %v356
        %v421 = vunpack.c.l.bf16 %v357
        %v422 = vunpack.c.l.bf16 %v358
        %v423 = vunpack.c.l.bf16 %v359
        %v424 = vunpack.c.l.bf16 %v360
        %v425 = vunpack.c.l.bf16 %v361
        %v426 = vunpack.c.l.bf16 %v362
        %v427 = vunpack.c.l.bf16 %v363
        %v428 = vmax.f32 %v364, 0.0
        %v429 = vmax.f32 %v365, 0.0
        %v430 = vmax.f32 %v366, 0.0
        %v431 = vmax.f32 %v367, 0.0
        %v432 = vmax.f32 %v368, 0.0
        %v433 = vmax.f32 %v369, 0.0
        %v434 = vmax.f32 %v370, 0.0
        %v435 = vmax.f32 %v371, 0.0
        %v436 = vmax.f32 %v372, 0.0
        %v437 = vmax.f32 %v373, 0.0
        %v438 = vmax.f32 %v374, 0.0
        %v439 = vmax.f32 %v375, 0.0
        %v440 = vmax.f32 %v376, 0.0
        %v441 = vmax.f32 %v377, 0.0
        %v442 = vmax.f32 %v378, 0.0
        %v443 = vmax.f32 %v379, 0.0
        %v444 = vmax.f32 %v380, 0.0
        %v445 = vmax.f32 %v381, 0.0
        %v446 = vmax.f32 %v382, 0.0
        %v447 = vmax.f32 %v383, 0.0
        %v448 = vmax.f32 %v384, 0.0
        %v449 = vmax.f32 %v385, 0.0
        %v450 = vmax.f32 %v386, 0.0
        %v451 = vmax.f32 %v387, 0.0
        %v452 = vmax.f32 %v388, 0.0
        %v453 = vmax.f32 %v389, 0.0
        %v454 = vmax.f32 %v390, 0.0
        %v455 = vmax.f32 %v391, 0.0
        %v456 = vmax.f32 %v392, 0.0
        %v457 = vmax.f32 %v393, 0.0
        %v458 = vmax.f32 %v394, 0.0
        %v459 = vmax.f32 %v395, 0.0
        %v460 = vmax.f32 %v396, 0.0
        %v461 = vmax.f32 %v397, 0.0
        %v462 = vmax.f32 %v398, 0.0
        %v463 = vmax.f32 %v399, 0.0
        %v464 = vmax.f32 %v400, 0.0
        %v465 = vmax.f32 %v401, 0.0
        %v466 = vmax.f32 %v402, 0.0
        %v467 = vmax.f32 %v403, 0.0
        %v468 = vmax.f32 %v404, 0.0
        %v469 = vmax.f32 %v405, 0.0
        %v470 = vmax.f32 %v406, 0.0
        %v471 = vmax.f32 %v407, 0.0
        %v472 = vmax.f32 %v408, 0.0
        %v473 = vmax.f32 %v409, 0.0
        %v474 = vmax.f32 %v410, 0.0
        %v475 = vmax.f32 %v411, 0.0
        %v476 = vmax.f32 %v412, 0.0
        %v477 = vmax.f32 %v413, 0.0
        %v478 = vmax.f32 %v414, 0.0
        %v479 = vmax.f32 %v415, 0.0
        %v480 = vmax.f32 %v416, 0.0
        %v481 = vmax.f32 %v417, 0.0
        %v482 = vmax.f32 %v418, 0.0
        %v483 = vmax.f32 %v419, 0.0
        %v484 = vmax.f32 %v420, 0.0
        %v485 = vmax.f32 %v421, 0.0
        %v486 = vmax.f32 %v422, 0.0
        %v487 = vmax.f32 %v423, 0.0
        %v488 = vmax.f32 %v424, 0.0
        %v489 = vmax.f32 %v425, 0.0
        %v490 = vmax.f32 %v426, 0.0
        %v491 = vmax.f32 %v427, 0.0
        %v492 = vpack.c.bf16 %v429, %v428
        %v493 = vpack.c.bf16 %v431, %v430
        %v494 = vpack.c.bf16 %v433, %v432
        %v495 = vpack.c.bf16 %v435, %v434
        %v496 = vpack.c.bf16 %v437, %v436
        %v497 = vpack.c.bf16 %v439, %v438
        %v498 = vpack.c.bf16 %v441, %v440
        %v499 = vpack.c.bf16 %v443, %v442
        %v500 = vpack.c.bf16 %v445, %v444
        %v501 = vpack.c.bf16 %v447, %v446
        %v502 = vpack.c.bf16 %v449, %v448
        %v503 = vpack.c.bf16 %v451, %v450
        %v504 = vpack.c.bf16 %v453, %v452
        %v505 = vpack.c.bf16 %v455, %v454
        %v506 = vpack.c.bf16 %v457, %v456
        %v507 = vpack.c.bf16 %v459, %v458
        %v508 = vpack.c.bf16 %v461, %v460
        %v509 = vpack.c.bf16 %v463, %v462
        %v510 = vpack.c.bf16 %v465, %v464
        %v511 = vpack.c.bf16 %v467, %v466
        %v512 = vpack.c.bf16 %v469, %v468
        %v513 = vpack.c.bf16 %v471, %v470
        %v514 = vpack.c.bf16 %v473, %v472
        %v515 = vpack.c.bf16 %v475, %v474
        %v516 = vpack.c.bf16 %v477, %v476
        %v517 = vpack.c.bf16 %v479, %v478
        %v518 = vpack.c.bf16 %v481, %v480
        %v519 = vpack.c.bf16 %v483, %v482
        %v520 = vpack.c.bf16 %v485, %v484
        %v521 = vpack.c.bf16 %v487, %v486
        %v522 = vpack.c.bf16 %v489, %v488
        %v523 = vpack.c.bf16 %v491, %v490
        %v524 = vld [vmem:[%s1] sm:$0xf]
        %v525 = vld [vmem:[%s1 + $0x4] sm:$0xf]
        %v526 = vld [vmem:[%s1 + $0x8] sm:$0xf]
        %v527 = vld [vmem:[%s1 + $0xc] sm:$0xf]
        %v528 = vld [vmem:[%s1 + $0x10] sm:$0xf]
        %v529 = vld [vmem:[%s1 + $0x14] sm:$0xf]
        %v530 = vld [vmem:[%s1 + $0x18] sm:$0xf]
        %v531 = vld [vmem:[%s1 + $0x1c] sm:$0xf]
        %v532 = vld [vmem:[%s1 + $0x20] sm:$0xf]
        %v533 = vld [vmem:[%s1 + $0x24] sm:$0xf]
        %v534 = vld [vmem:[%s1 + $0x28] sm:$0xf]
        %v535 = vld [vmem:[%s1 + $0x2c] sm:$0xf]
        %v536 = vld [vmem:[%s1 + $0x30] sm:$0xf]
        %v537 = vld [vmem:[%s1 + $0x34] sm:$0xf]
        %v538 = vld [vmem:[%s1 + $0x38] sm:$0xf]
        %v539 = vld [vmem:[%s1 + $0x3c] sm:$0xf]
        %v540 = vld [vmem:[%s2] sm:$0x1]
        %v542 = vperm.slane %v540, 0
        %v560 = vunpack.c.l.b16 %v524
        %v561 = vunpack.c.l.b16 %v525
        %v562 = vunpack.c.l.b16 %v526
        %v563 = vunpack.c.l.b16 %v527
        %v564 = vunpack.c.l.b16 %v528
        %v565 = vunpack.c.l.b16 %v529
        %v566 = vunpack.c.l.b16 %v530
        %v567 = vunpack.c.l.b16 %v531
        %v568 = vunpack.c.l.b16 %v532
        %v569 = vunpack.c.l.b16 %v533
        %v570 = vunpack.c.l.b16 %v534
        %v571 = vunpack.c.l.b16 %v535
        %v572 = vunpack.c.l.b16 %v536
        %v573 = vunpack.c.l.b16 %v537
        %v574 = vunpack.c.l.b16 %v538
        %v575 = vunpack.c.l.b16 %v539
        %v576 = vpack.c.b16 %v561, %v560
        %v577 = vpack.c.b16 %v563, %v562
        %v578 = vpack.c.b16 %v565, %v564
        %v579 = vpack.c.b16 %v567, %v566
        %v580 = vpack.c.b16 %v569, %v568
        %v581 = vpack.c.b16 %v571, %v570
        %v582 = vpack.c.b16 %v573, %v572
        %v583 = vpack.c.b16 %v575, %v574
        %592 = vmatpush.bf16.msra.mxu0 %v583
        %593 = vmatpush.bf16.msra.mxu0 %v582
        %594 = vmatpush.bf16.msra.mxu0 %v581
        %595 = vmatpush.bf16.msra.mxu0 %v580
        %596 = vmatpush.bf16.msra.mxu0 %v579
        %597 = vmatpush.bf16.msra.mxu0 %v578
        %598 = vmatpush.bf16.msra.mxu0 %v577
        %599 = vmatpush.bf16.msra.mxu0 %v576
        %600 = vmatmul.bf16.gmra.mxu0 %v492
        %v601 = vpop.f32.mrf.mxu0
        %v602 = vadd.f32 %v542, %v601
        %v603 = vpop.f32.mrf.mxu0
        %v604 = vadd.f32 %v542, %v603
        %605 = vmatmul.bf16.gmra.mxu0 %v493
        %v606 = vpop.f32.mrf.mxu0
        %v607 = vadd.f32 %v542, %v606
        %v608 = vpop.f32.mrf.mxu0
        %v609 = vadd.f32 %v542, %v608
        %610 = vmatmul.bf16.gmra.mxu0 %v494
        %v611 = vpop.f32.mrf.mxu0
        %v612 = vadd.f32 %v542, %v611
        %v613 = vpop.f32.mrf.mxu0
        %v614 = vadd.f32 %v542, %v613
        %615 = vmatmul.bf16.gmra.mxu0 %v495
        %v616 = vpop.f32.mrf.mxu0
        %v617 = vadd.f32 %v542, %v616
        %v618 = vpop.f32.mrf.mxu0
        %v619 = vadd.f32 %v542, %v618
        %620 = vmatmul.bf16.gmra.mxu0 %v496
        %v621 = vpop.f32.mrf.mxu0
        %v622 = vadd.f32 %v542, %v621
        %v623 = vpop.f32.mrf.mxu0
        %v624 = vadd.f32 %v542, %v623
        %625 = vmatmul.bf16.gmra.mxu0 %v497
        %v626 = vpop.f32.mrf.mxu0
        %v627 = vadd.f32 %v542, %v626
        %v628 = vpop.f32.mrf.mxu0
        %v629 = vadd.f32 %v542, %v628
        %630 = vmatmul.bf16.gmra.mxu0 %v498
        %v631 = vpop.f32.mrf.mxu0
        %v632 = vadd.f32 %v542, %v631
        %v633 = vpop.f32.mrf.mxu0
        %v634 = vadd.f32 %v542, %v633
        %635 = vmatmul.bf16.gmra.mxu0 %v499
        %v636 = vpop.f32.mrf.mxu0
        %v637 = vadd.f32 %v542, %v636
        %v638 = vpop.f32.mrf.mxu0
        %v639 = vadd.f32 %v542, %v638
        %640 = vmatmul.bf16.gmra.mxu0 %v500
        %v641 = vpop.f32.mrf.mxu0
        %v642 = vadd.f32 %v542, %v641
        %v643 = vpop.f32.mrf.mxu0
        %v644 = vadd.f32 %v542, %v643
        %645 = vmatmul.bf16.gmra.mxu0 %v501
        %v646 = vpop.f32.mrf.mxu0
        %v647 = vadd.f32 %v542, %v646
        %v648 = vpop.f32.mrf.mxu0
        %v649 = vadd.f32 %v542, %v648
        %650 = vmatmul.bf16.gmra.mxu0 %v502
        %v651 = vpop.f32.mrf.mxu0
        %v652 = vadd.f32 %v542, %v651
        %v653 = vpop.f32.mrf.mxu0
        %v654 = vadd.f32 %v542, %v653
        %655 = vmatmul.bf16.gmra.mxu0 %v503
        %v656 = vpop.f32.mrf.mxu0
        %v657 = vadd.f32 %v542, %v656
        %v658 = vpop.f32.mrf.mxu0
        %v659 = vadd.f32 %v542, %v658
        %660 = vmatmul.bf16.gmra.mxu0 %v504
        %v661 = vpop.f32.mrf.mxu0
        %v662 = vadd.f32 %v542, %v661
        %v663 = vpop.f32.mrf.mxu0
        %v664 = vadd.f32 %v542, %v663
        %665 = vmatmul.bf16.gmra.mxu0 %v505
        %v666 = vpop.f32.mrf.mxu0
        %v667 = vadd.f32 %v542, %v666
        %v668 = vpop.f32.mrf.mxu0
        %v669 = vadd.f32 %v542, %v668
        %670 = vmatmul.bf16.gmra.mxu0 %v506
        %v671 = vpop.f32.mrf.mxu0
        %v672 = vadd.f32 %v542, %v671
        %v673 = vpop.f32.mrf.mxu0
        %v674 = vadd.f32 %v542, %v673
        %675 = vmatmul.bf16.gmra.mxu0 %v507
        %v676 = vpop.f32.mrf.mxu0
        %v677 = vadd.f32 %v542, %v676
        %v678 = vpop.f32.mrf.mxu0
        %v679 = vadd.f32 %v542, %v678
        %680 = vmatmul.bf16.gmra.mxu0 %v508
        %v681 = vpop.f32.mrf.mxu0
        %v682 = vadd.f32 %v542, %v681
        %v683 = vpop.f32.mrf.mxu0
        %v684 = vadd.f32 %v542, %v683
        %685 = vmatmul.bf16.gmra.mxu0 %v509
        %v686 = vpop.f32.mrf.mxu0
        %v687 = vadd.f32 %v542, %v686
        %v688 = vpop.f32.mrf.mxu0
        %v689 = vadd.f32 %v542, %v688
        %690 = vmatmul.bf16.gmra.mxu0 %v510
        %v691 = vpop.f32.mrf.mxu0
        %v692 = vadd.f32 %v542, %v691
        %v693 = vpop.f32.mrf.mxu0
        %v694 = vadd.f32 %v542, %v693
        %695 = vmatmul.bf16.gmra.mxu0 %v511
        %v696 = vpop.f32.mrf.mxu0
        %v697 = vadd.f32 %v542, %v696
        %v698 = vpop.f32.mrf.mxu0
        %v699 = vadd.f32 %v542, %v698
        %700 = vmatmul.bf16.gmra.mxu0 %v512
        %v701 = vpop.f32.mrf.mxu0
        %v702 = vadd.f32 %v542, %v701
        %v703 = vpop.f32.mrf.mxu0
        %v704 = vadd.f32 %v542, %v703
        %705 = vmatmul.bf16.gmra.mxu0 %v513
        %v706 = vpop.f32.mrf.mxu0
        %v707 = vadd.f32 %v542, %v706
        %v708 = vpop.f32.mrf.mxu0
        %v709 = vadd.f32 %v542, %v708
        %710 = vmatmul.bf16.gmra.mxu0 %v514
        %v711 = vpop.f32.mrf.mxu0
        %v712 = vadd.f32 %v542, %v711
        %v713 = vpop.f32.mrf.mxu0
        %v714 = vadd.f32 %v542, %v713
        %715 = vmatmul.bf16.gmra.mxu0 %v515
        %v716 = vpop.f32.mrf.mxu0
        %v717 = vadd.f32 %v542, %v716
        %v718 = vpop.f32.mrf.mxu0
        %v719 = vadd.f32 %v542, %v718
        %720 = vmatmul.bf16.gmra.mxu0 %v516
        %v721 = vpop.f32.mrf.mxu0
        %v722 = vadd.f32 %v542, %v721
        %v723 = vpop.f32.mrf.mxu0
        %v724 = vadd.f32 %v542, %v723
        %725 = vmatmul.bf16.gmra.mxu0 %v517
        %v726 = vpop.f32.mrf.mxu0
        %v727 = vadd.f32 %v542, %v726
        %v728 = vpop.f32.mrf.mxu0
        %v729 = vadd.f32 %v542, %v728
        %730 = vmatmul.bf16.gmra.mxu0 %v518
        %v731 = vpop.f32.mrf.mxu0
        %v732 = vadd.f32 %v542, %v731
        %v733 = vpop.f32.mrf.mxu0
        %v734 = vadd.f32 %v542, %v733
        %735 = vmatmul.bf16.gmra.mxu0 %v519
        %v736 = vpop.f32.mrf.mxu0
        %v737 = vadd.f32 %v542, %v736
        %v738 = vpop.f32.mrf.mxu0
        %v739 = vadd.f32 %v542, %v738
        %740 = vmatmul.bf16.gmra.mxu0 %v520
        %v741 = vpop.f32.mrf.mxu0
        %v742 = vadd.f32 %v542, %v741
        %v743 = vpop.f32.mrf.mxu0
        %v744 = vadd.f32 %v542, %v743
        %745 = vmatmul.bf16.gmra.mxu0 %v521
        %v746 = vpop.f32.mrf.mxu0
        %v747 = vadd.f32 %v542, %v746
        %v748 = vpop.f32.mrf.mxu0
        %v749 = vadd.f32 %v542, %v748
        %750 = vmatmul.bf16.gmra.mxu0 %v522
        %v751 = vpop.f32.mrf.mxu0
        %v752 = vadd.f32 %v542, %v751
        %v753 = vpop.f32.mrf.mxu0
        %v754 = vadd.f32 %v542, %v753
        %755 = vmatmul.bf16.gmra.mxu0 %v523
        %v756 = vpop.f32.mrf.mxu0
        %v757 = vadd.f32 %v542, %v756
        %v758 = vpop.f32.mrf.mxu0
        %v759 = vadd.f32 %v542, %v758
        %760 = vdwg.mxu0
        %v761 = vmax.f32 %v602, 0.0
        %v762 = vmax.f32 %v604, 0.0
        %v763 = vmax.f32 %v607, 0.0
        %v764 = vmax.f32 %v609, 0.0
        %v765 = vmax.f32 %v612, 0.0
        %v766 = vmax.f32 %v614, 0.0
        %v767 = vmax.f32 %v617, 0.0
        %v768 = vmax.f32 %v619, 0.0
        %v769 = vmax.f32 %v622, 0.0
        %v770 = vmax.f32 %v624, 0.0
        %v771 = vmax.f32 %v627, 0.0
        %v772 = vmax.f32 %v629, 0.0
        %v773 = vmax.f32 %v632, 0.0
        %v774 = vmax.f32 %v634, 0.0
        %v775 = vmax.f32 %v637, 0.0
        %v776 = vmax.f32 %v639, 0.0
        %v777 = vmax.f32 %v642, 0.0
        %v778 = vmax.f32 %v644, 0.0
        %v779 = vmax.f32 %v647, 0.0
        %v780 = vmax.f32 %v649, 0.0
        %v781 = vmax.f32 %v652, 0.0
        %v782 = vmax.f32 %v654, 0.0
        %v783 = vmax.f32 %v657, 0.0
        %v784 = vmax.f32 %v659, 0.0
        %v785 = vmax.f32 %v662, 0.0
        %v786 = vmax.f32 %v664, 0.0
        %v787 = vmax.f32 %v667, 0.0
        %v788 = vmax.f32 %v669, 0.0
        %v789 = vmax.f32 %v672, 0.0
        %v790 = vmax.f32 %v674, 0.0
        %v791 = vmax.f32 %v677, 0.0
        %v792 = vmax.f32 %v679, 0.0
        %v793 = vmax.f32 %v682, 0.0
        %v794 = vmax.f32 %v684, 0.0
        %v795 = vmax.f32 %v687, 0.0
        %v796 = vmax.f32 %v689, 0.0
        %v797 = vmax.f32 %v692, 0.0
        %v798 = vmax.f32 %v694, 0.0
        %v799 = vmax.f32 %v697, 0.0
        %v800 = vmax.f32 %v699, 0.0
        %v801 = vmax.f32 %v702, 0.0
        %v802 = vmax.f32 %v704, 0.0
        %v803 = vmax.f32 %v707, 0.0
        %v804 = vmax.f32 %v709, 0.0
        %v805 = vmax.f32 %v712, 0.0
        %v806 = vmax.f32 %v714, 0.0
        %v807 = vmax.f32 %v717, 0.0
        %v808 = vmax.f32 %v719, 0.0
        %v809 = vmax.f32 %v722, 0.0
        %v810 = vmax.f32 %v724, 0.0
        %v811 = vmax.f32 %v727, 0.0
        %v812 = vmax.f32 %v729, 0.0
        %v813 = vmax.f32 %v732, 0.0
        %v814 = vmax.f32 %v734, 0.0
        %v815 = vmax.f32 %v737, 0.0
        %v816 = vmax.f32 %v739, 0.0
        %v817 = vmax.f32 %v742, 0.0
        %v818 = vmax.f32 %v744, 0.0
        %v819 = vmax.f32 %v747, 0.0
        %v820 = vmax.f32 %v749, 0.0
        %v821 = vmax.f32 %v752, 0.0
        %v822 = vmax.f32 %v754, 0.0
        %v823 = vmax.f32 %v757, 0.0
        %v824 = vmax.f32 %v759, 0.0
        %v825 = vpack.c.bf16 %v762, %v761
        %v826 = vpack.c.bf16 %v764, %v763
        %v827 = vpack.c.bf16 %v766, %v765
        %v828 = vpack.c.bf16 %v768, %v767
        %v829 = vpack.c.bf16 %v770, %v769
        %v830 = vpack.c.bf16 %v772, %v771
        %v831 = vpack.c.bf16 %v774, %v773
        %v832 = vpack.c.bf16 %v776, %v775
        %v833 = vpack.c.bf16 %v778, %v777
        %v834 = vpack.c.bf16 %v780, %v779
        %v835 = vpack.c.bf16 %v782, %v781
        %v836 = vpack.c.bf16 %v784, %v783
        %v837 = vpack.c.bf16 %v786, %v785
        %v838 = vpack.c.bf16 %v788, %v787
        %v839 = vpack.c.bf16 %v790, %v789
        %v840 = vpack.c.bf16 %v792, %v791
        %v841 = vpack.c.bf16 %v794, %v793
        %v842 = vpack.c.bf16 %v796, %v795
        %v843 = vpack.c.bf16 %v798, %v797
        %v844 = vpack.c.bf16 %v800, %v799
        %v845 = vpack.c.bf16 %v802, %v801
        %v846 = vpack.c.bf16 %v804, %v803
        %v847 = vpack.c.bf16 %v806, %v805
        %v848 = vpack.c.bf16 %v808, %v807
        %v849 = vpack.c.bf16 %v810, %v809
        %v850 = vpack.c.bf16 %v812, %v811
        %v851 = vpack.c.bf16 %v814, %v813
        %v852 = vpack.c.bf16 %v816, %v815
        %v853 = vpack.c.bf16 %v818, %v817
        %v854 = vpack.c.bf16 %v820, %v819
        %v855 = vpack.c.bf16 %v822, %v821
        %v856 = vpack.c.bf16 %v824, %v823
        %v857 = vld [vmem:[%s3] sm:$0xf]
        %v858 = vld [vmem:[%s3 + $0x4] sm:$0xf]
        %v859 = vld [vmem:[%s3 + $0x8] sm:$0xf]
        %v860 = vld [vmem:[%s3 + $0xc] sm:$0xf]
        %v861 = vld [vmem:[%s3 + $0x10] sm:$0xf]
        %v862 = vld [vmem:[%s3 + $0x14] sm:$0xf]
        %v863 = vld [vmem:[%s3 + $0x18] sm:$0xf]
        %v864 = vld [vmem:[%s3 + $0x1c] sm:$0xf]
        %v865 = vld [vmem:[%s3 + $0x20] sm:$0xf]
        %v866 = vld [vmem:[%s3 + $0x24] sm:$0xf]
        %v867 = vld [vmem:[%s3 + $0x28] sm:$0xf]
        %v868 = vld [vmem:[%s3 + $0x2c] sm:$0xf]
        %v869 = vld [vmem:[%s3 + $0x30] sm:$0xf]
        %v870 = vld [vmem:[%s3 + $0x34] sm:$0xf]
        %v871 = vld [vmem:[%s3 + $0x38] sm:$0xf]
        %v872 = vld [vmem:[%s3 + $0x3c] sm:$0xf]
        %v873 = vld [vmem:[%s4] sm:$0x1]
        %v875 = vperm.slane %v873, 0
        %v893 = vunpack.c.l.b16 %v857
        %v894 = vunpack.c.l.b16 %v858
        %v895 = vunpack.c.l.b16 %v859
        %v896 = vunpack.c.l.b16 %v860
        %v897 = vunpack.c.l.b16 %v861
        %v898 = vunpack.c.l.b16 %v862
        %v899 = vunpack.c.l.b16 %v863
        %v900 = vunpack.c.l.b16 %v864
        %v901 = vunpack.c.l.b16 %v865
        %v902 = vunpack.c.l.b16 %v866
        %v903 = vunpack.c.l.b16 %v867
        %v904 = vunpack.c.l.b16 %v868
        %v905 = vunpack.c.l.b16 %v869
        %v906 = vunpack.c.l.b16 %v870
        %v907 = vunpack.c.l.b16 %v871
        %v908 = vunpack.c.l.b16 %v872
        %v909 = vpack.c.b16 %v894, %v893
        %v910 = vpack.c.b16 %v896, %v895
        %v911 = vpack.c.b16 %v898, %v897
        %v912 = vpack.c.b16 %v900, %v899
        %v913 = vpack.c.b16 %v902, %v901
        %v914 = vpack.c.b16 %v904, %v903
        %v915 = vpack.c.b16 %v906, %v905
        %v916 = vpack.c.b16 %v908, %v907
        %925 = vmatpush.bf16.msra.mxu0 %v916
        %926 = vmatpush.bf16.msra.mxu0 %v915
        %927 = vmatpush.bf16.msra.mxu0 %v914
        %928 = vmatpush.bf16.msra.mxu0 %v913
        %929 = vmatpush.bf16.msra.mxu0 %v912
        %930 = vmatpush.bf16.msra.mxu0 %v911
        %931 = vmatpush.bf16.msra.mxu0 %v910
        %932 = vmatpush.bf16.msra.mxu0 %v909
        %933 = vmatmul.bf16.gmra.mxu0 %v825
        %v934 = vpop.f32.mrf.mxu0
        %v935 = vadd.f32 %v875, %v934
        %v936 = vpop.f32.mrf.mxu0
        %v937 = vadd.f32 %v875, %v936
        %938 = vmatmul.bf16.gmra.mxu0 %v826
        %v939 = vpop.f32.mrf.mxu0
        %v940 = vadd.f32 %v875, %v939
        %v941 = vpop.f32.mrf.mxu0
        %v942 = vadd.f32 %v875, %v941
        %943 = vmatmul.bf16.gmra.mxu0 %v827
        %v944 = vpop.f32.mrf.mxu0
        %v945 = vadd.f32 %v875, %v944
        %v946 = vpop.f32.mrf.mxu0
        %v947 = vadd.f32 %v875, %v946
        %948 = vmatmul.bf16.gmra.mxu0 %v828
        %v949 = vpop.f32.mrf.mxu0
        %v950 = vadd.f32 %v875, %v949
        %v951 = vpop.f32.mrf.mxu0
        %v952 = vadd.f32 %v875, %v951
        %953 = vmatmul.bf16.gmra.mxu0 %v829
        %v954 = vpop.f32.mrf.mxu0
        %v955 = vadd.f32 %v875, %v954
        %v956 = vpop.f32.mrf.mxu0
        %v957 = vadd.f32 %v875, %v956
        %958 = vmatmul.bf16.gmra.mxu0 %v830
        %v959 = vpop.f32.mrf.mxu0
        %v960 = vadd.f32 %v875, %v959
        %v961 = vpop.f32.mrf.mxu0
        %v962 = vadd.f32 %v875, %v961
        %963 = vmatmul.bf16.gmra.mxu0 %v831
        %v964 = vpop.f32.mrf.mxu0
        %v965 = vadd.f32 %v875, %v964
        %v966 = vpop.f32.mrf.mxu0
        %v967 = vadd.f32 %v875, %v966
        %968 = vmatmul.bf16.gmra.mxu0 %v832
        %v969 = vpop.f32.mrf.mxu0
        %v970 = vadd.f32 %v875, %v969
        %v971 = vpop.f32.mrf.mxu0
        %v972 = vadd.f32 %v875, %v971
        %973 = vmatmul.bf16.gmra.mxu0 %v833
        %v974 = vpop.f32.mrf.mxu0
        %v975 = vadd.f32 %v875, %v974
        %v976 = vpop.f32.mrf.mxu0
        %v977 = vadd.f32 %v875, %v976
        %978 = vmatmul.bf16.gmra.mxu0 %v834
        %v979 = vpop.f32.mrf.mxu0
        %v980 = vadd.f32 %v875, %v979
        %v981 = vpop.f32.mrf.mxu0
        %v982 = vadd.f32 %v875, %v981
        %983 = vmatmul.bf16.gmra.mxu0 %v835
        %v984 = vpop.f32.mrf.mxu0
        %v985 = vadd.f32 %v875, %v984
        %v986 = vpop.f32.mrf.mxu0
        %v987 = vadd.f32 %v875, %v986
        %988 = vmatmul.bf16.gmra.mxu0 %v836
        %v989 = vpop.f32.mrf.mxu0
        %v990 = vadd.f32 %v875, %v989
        %v991 = vpop.f32.mrf.mxu0
        %v992 = vadd.f32 %v875, %v991
        %993 = vmatmul.bf16.gmra.mxu0 %v837
        %v994 = vpop.f32.mrf.mxu0
        %v995 = vadd.f32 %v875, %v994
        %v996 = vpop.f32.mrf.mxu0
        %v997 = vadd.f32 %v875, %v996
        %998 = vmatmul.bf16.gmra.mxu0 %v838
        %v999 = vpop.f32.mrf.mxu0
        %v1000 = vadd.f32 %v875, %v999
        %v1001 = vpop.f32.mrf.mxu0
        %v1002 = vadd.f32 %v875, %v1001
        %1003 = vmatmul.bf16.gmra.mxu0 %v839
        %v1004 = vpop.f32.mrf.mxu0
        %v1005 = vadd.f32 %v875, %v1004
        %v1006 = vpop.f32.mrf.mxu0
        %v1007 = vadd.f32 %v875, %v1006
        %1008 = vmatmul.bf16.gmra.mxu0 %v840
        %v1009 = vpop.f32.mrf.mxu0
        %v1010 = vadd.f32 %v875, %v1009
        %v1011 = vpop.f32.mrf.mxu0
        %v1012 = vadd.f32 %v875, %v1011
        %1013 = vmatmul.bf16.gmra.mxu0 %v841
        %v1014 = vpop.f32.mrf.mxu0
        %v1015 = vadd.f32 %v875, %v1014
        %v1016 = vpop.f32.mrf.mxu0
        %v1017 = vadd.f32 %v875, %v1016
        %1018 = vmatmul.bf16.gmra.mxu0 %v842
        %v1019 = vpop.f32.mrf.mxu0
        %v1020 = vadd.f32 %v875, %v1019
        %v1021 = vpop.f32.mrf.mxu0
        %v1022 = vadd.f32 %v875, %v1021
        %1023 = vmatmul.bf16.gmra.mxu0 %v843
        %v1024 = vpop.f32.mrf.mxu0
        %v1025 = vadd.f32 %v875, %v1024
        %v1026 = vpop.f32.mrf.mxu0
        %v1027 = vadd.f32 %v875, %v1026
        %1028 = vmatmul.bf16.gmra.mxu0 %v844
        %v1029 = vpop.f32.mrf.mxu0
        %v1030 = vadd.f32 %v875, %v1029
        %v1031 = vpop.f32.mrf.mxu0
        %v1032 = vadd.f32 %v875, %v1031
        %1033 = vmatmul.bf16.gmra.mxu0 %v845
        %v1034 = vpop.f32.mrf.mxu0
        %v1035 = vadd.f32 %v875, %v1034
        %v1036 = vpop.f32.mrf.mxu0
        %v1037 = vadd.f32 %v875, %v1036
        %1038 = vmatmul.bf16.gmra.mxu0 %v846
        %v1039 = vpop.f32.mrf.mxu0
        %v1040 = vadd.f32 %v875, %v1039
        %v1041 = vpop.f32.mrf.mxu0
        %v1042 = vadd.f32 %v875, %v1041
        %1043 = vmatmul.bf16.gmra.mxu0 %v847
        %v1044 = vpop.f32.mrf.mxu0
        %v1045 = vadd.f32 %v875, %v1044
        %v1046 = vpop.f32.mrf.mxu0
        %v1047 = vadd.f32 %v875, %v1046
        %1048 = vmatmul.bf16.gmra.mxu0 %v848
        %v1049 = vpop.f32.mrf.mxu0
        %v1050 = vadd.f32 %v875, %v1049
        %v1051 = vpop.f32.mrf.mxu0
        %v1052 = vadd.f32 %v875, %v1051
        %1053 = vmatmul.bf16.gmra.mxu0 %v849
        %v1054 = vpop.f32.mrf.mxu0
        %v1055 = vadd.f32 %v875, %v1054
        %v1056 = vpop.f32.mrf.mxu0
        %v1057 = vadd.f32 %v875, %v1056
        %1058 = vmatmul.bf16.gmra.mxu0 %v850
        %v1059 = vpop.f32.mrf.mxu0
        %v1060 = vadd.f32 %v875, %v1059
        %v1061 = vpop.f32.mrf.mxu0
        %v1062 = vadd.f32 %v875, %v1061
        %1063 = vmatmul.bf16.gmra.mxu0 %v851
        %v1064 = vpop.f32.mrf.mxu0
        %v1065 = vadd.f32 %v875, %v1064
        %v1066 = vpop.f32.mrf.mxu0
        %v1067 = vadd.f32 %v875, %v1066
        %1068 = vmatmul.bf16.gmra.mxu0 %v852
        %v1069 = vpop.f32.mrf.mxu0
        %v1070 = vadd.f32 %v875, %v1069
        %v1071 = vpop.f32.mrf.mxu0
        %v1072 = vadd.f32 %v875, %v1071
        %1073 = vmatmul.bf16.gmra.mxu0 %v853
        %v1074 = vpop.f32.mrf.mxu0
        %v1075 = vadd.f32 %v875, %v1074
        %v1076 = vpop.f32.mrf.mxu0
        %v1077 = vadd.f32 %v875, %v1076
        %1078 = vmatmul.bf16.gmra.mxu0 %v854
        %v1079 = vpop.f32.mrf.mxu0
        %v1080 = vadd.f32 %v875, %v1079
        %v1081 = vpop.f32.mrf.mxu0
        %v1082 = vadd.f32 %v875, %v1081
        %1083 = vmatmul.bf16.gmra.mxu0 %v855
        %v1084 = vpop.f32.mrf.mxu0
        %v1085 = vadd.f32 %v875, %v1084
        %v1086 = vpop.f32.mrf.mxu0
        %v1087 = vadd.f32 %v875, %v1086
        %1088 = vmatmul.bf16.gmra.mxu0 %v856
        %v1089 = vpop.f32.mrf.mxu0
        %v1090 = vadd.f32 %v875, %v1089
        %v1091 = vpop.f32.mrf.mxu0
        %v1092 = vadd.f32 %v875, %v1091
        %1093 = vdwg.mxu0
        %v1094 = vadd.f32 %v364, %v935
        %v1095 = vadd.f32 %v365, %v937
        %v1096 = vadd.f32 %v366, %v940
        %v1097 = vadd.f32 %v367, %v942
        %v1098 = vadd.f32 %v368, %v945
        %v1099 = vadd.f32 %v369, %v947
        %v1100 = vadd.f32 %v370, %v950
        %v1101 = vadd.f32 %v371, %v952
        %v1102 = vadd.f32 %v372, %v955
        %v1103 = vadd.f32 %v373, %v957
        %v1104 = vadd.f32 %v374, %v960
        %v1105 = vadd.f32 %v375, %v962
        %v1106 = vadd.f32 %v376, %v965
        %v1107 = vadd.f32 %v377, %v967
        %v1108 = vadd.f32 %v378, %v970
        %v1109 = vadd.f32 %v379, %v972
        %v1110 = vadd.f32 %v380, %v975
        %v1111 = vadd.f32 %v381, %v977
        %v1112 = vadd.f32 %v382, %v980
        %v1113 = vadd.f32 %v383, %v982
        %v1114 = vadd.f32 %v384, %v985
        %v1115 = vadd.f32 %v385, %v987
        %v1116 = vadd.f32 %v386, %v990
        %v1117 = vadd.f32 %v387, %v992
        %v1118 = vadd.f32 %v388, %v995
        %v1119 = vadd.f32 %v389, %v997
        %v1120 = vadd.f32 %v390, %v1000
        %v1121 = vadd.f32 %v391, %v1002
        %v1122 = vadd.f32 %v392, %v1005
        %v1123 = vadd.f32 %v393, %v1007
        %v1124 = vadd.f32 %v394, %v1010
        %v1125 = vadd.f32 %v395, %v1012
        %v1126 = vadd.f32 %v396, %v1015
        %v1127 = vadd.f32 %v397, %v1017
        %v1128 = vadd.f32 %v398, %v1020
        %v1129 = vadd.f32 %v399, %v1022
        %v1130 = vadd.f32 %v400, %v1025
        %v1131 = vadd.f32 %v401, %v1027
        %v1132 = vadd.f32 %v402, %v1030
        %v1133 = vadd.f32 %v403, %v1032
        %v1134 = vadd.f32 %v404, %v1035
        %v1135 = vadd.f32 %v405, %v1037
        %v1136 = vadd.f32 %v406, %v1040
        %v1137 = vadd.f32 %v407, %v1042
        %v1138 = vadd.f32 %v408, %v1045
        %v1139 = vadd.f32 %v409, %v1047
        %v1140 = vadd.f32 %v410, %v1050
        %v1141 = vadd.f32 %v411, %v1052
        %v1142 = vadd.f32 %v412, %v1055
        %v1143 = vadd.f32 %v413, %v1057
        %v1144 = vadd.f32 %v414, %v1060
        %v1145 = vadd.f32 %v415, %v1062
        %v1146 = vadd.f32 %v416, %v1065
        %v1147 = vadd.f32 %v417, %v1067
        %v1148 = vadd.f32 %v418, %v1070
        %v1149 = vadd.f32 %v419, %v1072
        %v1150 = vadd.f32 %v420, %v1075
        %v1151 = vadd.f32 %v421, %v1077
        %v1152 = vadd.f32 %v422, %v1080
        %v1153 = vadd.f32 %v423, %v1082
        %v1154 = vadd.f32 %v424, %v1085
        %v1155 = vadd.f32 %v425, %v1087
        %v1156 = vadd.f32 %v426, %v1090
        %v1157 = vadd.f32 %v427, %v1092
        %v1158 = vmax.f32 %v1094, 0.0
        %v1159 = vmax.f32 %v1095, 0.0
        %v1160 = vmax.f32 %v1096, 0.0
        %v1161 = vmax.f32 %v1097, 0.0
        %v1162 = vmax.f32 %v1098, 0.0
        %v1163 = vmax.f32 %v1099, 0.0
        %v1164 = vmax.f32 %v1100, 0.0
        %v1165 = vmax.f32 %v1101, 0.0
        %v1166 = vmax.f32 %v1102, 0.0
        %v1167 = vmax.f32 %v1103, 0.0
        %v1168 = vmax.f32 %v1104, 0.0
        %v1169 = vmax.f32 %v1105, 0.0
        %v1170 = vmax.f32 %v1106, 0.0
        %v1171 = vmax.f32 %v1107, 0.0
        %v1172 = vmax.f32 %v1108, 0.0
        %v1173 = vmax.f32 %v1109, 0.0
        %v1174 = vmax.f32 %v1110, 0.0
        %v1175 = vmax.f32 %v1111, 0.0
        %v1176 = vmax.f32 %v1112, 0.0
        %v1177 = vmax.f32 %v1113, 0.0
        %v1178 = vmax.f32 %v1114, 0.0
        %v1179 = vmax.f32 %v1115, 0.0
        %v1180 = vmax.f32 %v1116, 0.0
        %v1181 = vmax.f32 %v1117, 0.0
        %v1182 = vmax.f32 %v1118, 0.0
        %v1183 = vmax.f32 %v1119, 0.0
        %v1184 = vmax.f32 %v1120, 0.0
        %v1185 = vmax.f32 %v1121, 0.0
        %v1186 = vmax.f32 %v1122, 0.0
        %v1187 = vmax.f32 %v1123, 0.0
        %v1188 = vmax.f32 %v1124, 0.0
        %v1189 = vmax.f32 %v1125, 0.0
        %v1190 = vmax.f32 %v1126, 0.0
        %v1191 = vmax.f32 %v1127, 0.0
        %v1192 = vmax.f32 %v1128, 0.0
        %v1193 = vmax.f32 %v1129, 0.0
        %v1194 = vmax.f32 %v1130, 0.0
        %v1195 = vmax.f32 %v1131, 0.0
        %v1196 = vmax.f32 %v1132, 0.0
        %v1197 = vmax.f32 %v1133, 0.0
        %v1198 = vmax.f32 %v1134, 0.0
        %v1199 = vmax.f32 %v1135, 0.0
        %v1200 = vmax.f32 %v1136, 0.0
        %v1201 = vmax.f32 %v1137, 0.0
        %v1202 = vmax.f32 %v1138, 0.0
        %v1203 = vmax.f32 %v1139, 0.0
        %v1204 = vmax.f32 %v1140, 0.0
        %v1205 = vmax.f32 %v1141, 0.0
        %v1206 = vmax.f32 %v1142, 0.0
        %v1207 = vmax.f32 %v1143, 0.0
        %v1208 = vmax.f32 %v1144, 0.0
        %v1209 = vmax.f32 %v1145, 0.0
        %v1210 = vmax.f32 %v1146, 0.0
        %v1211 = vmax.f32 %v1147, 0.0
        %v1212 = vmax.f32 %v1148, 0.0
        %v1213 = vmax.f32 %v1149, 0.0
        %v1214 = vmax.f32 %v1150, 0.0
        %v1215 = vmax.f32 %v1151, 0.0
        %v1216 = vmax.f32 %v1152, 0.0
        %v1217 = vmax.f32 %v1153, 0.0
        %v1218 = vmax.f32 %v1154, 0.0
        %v1219 = vmax.f32 %v1155, 0.0
        %v1220 = vmax.f32 %v1156, 0.0
        %v1221 = vmax.f32 %v1157, 0.0
        %v1222 = vpack.c.bf16 %v1159, %v1158
        %v1223 = vpack.c.bf16 %v1161, %v1160
        %v1224 = vpack.c.bf16 %v1163, %v1162
        %v1225 = vpack.c.bf16 %v1165, %v1164
        %v1226 = vpack.c.bf16 %v1167, %v1166
        %v1227 = vpack.c.bf16 %v1169, %v1168
        %v1228 = vpack.c.bf16 %v1171, %v1170
        %v1229 = vpack.c.bf16 %v1173, %v1172
        %v1230 = vpack.c.bf16 %v1175, %v1174
        %v1231 = vpack.c.bf16 %v1177, %v1176
        %v1232 = vpack.c.bf16 %v1179, %v1178
        %v1233 = vpack.c.bf16 %v1181, %v1180
        %v1234 = vpack.c.bf16 %v1183, %v1182
        %v1235 = vpack.c.bf16 %v1185, %v1184
        %v1236 = vpack.c.bf16 %v1187, %v1186
        %v1237 = vpack.c.bf16 %v1189, %v1188
        %v1238 = vpack.c.bf16 %v1191, %v1190
        %v1239 = vpack.c.bf16 %v1193, %v1192
        %v1240 = vpack.c.bf16 %v1195, %v1194
        %v1241 = vpack.c.bf16 %v1197, %v1196
        %v1242 = vpack.c.bf16 %v1199, %v1198
        %v1243 = vpack.c.bf16 %v1201, %v1200
        %v1244 = vpack.c.bf16 %v1203, %v1202
        %v1245 = vpack.c.bf16 %v1205, %v1204
        %v1246 = vpack.c.bf16 %v1207, %v1206
        %v1247 = vpack.c.bf16 %v1209, %v1208
        %v1248 = vpack.c.bf16 %v1211, %v1210
        %v1249 = vpack.c.bf16 %v1213, %v1212
        %v1250 = vpack.c.bf16 %v1215, %v1214
        %v1251 = vpack.c.bf16 %v1217, %v1216
        %v1252 = vpack.c.bf16 %v1219, %v1218
        %v1253 = vpack.c.bf16 %v1221, %v1220
        %s1254 = scalar_lea.vmem %s1, 64
        %v1255 = vld [vmem:[%s1254] sm:$0xf]
        %v1256 = vld [vmem:[%s1254 + $0x4] sm:$0xf]
        %v1257 = vld [vmem:[%s1254 + $0x8] sm:$0xf]
        %v1258 = vld [vmem:[%s1254 + $0xc] sm:$0xf]
        %v1259 = vld [vmem:[%s1254 + $0x10] sm:$0xf]
        %v1260 = vld [vmem:[%s1254 + $0x14] sm:$0xf]
        %v1261 = vld [vmem:[%s1254 + $0x18] sm:$0xf]
        %v1262 = vld [vmem:[%s1254 + $0x1c] sm:$0xf]
        %v1263 = vld [vmem:[%s1254 + $0x20] sm:$0xf]
        %v1264 = vld [vmem:[%s1254 + $0x24] sm:$0xf]
        %v1265 = vld [vmem:[%s1254 + $0x28] sm:$0xf]
        %v1266 = vld [vmem:[%s1254 + $0x2c] sm:$0xf]
        %v1267 = vld [vmem:[%s1254 + $0x30] sm:$0xf]
        %v1268 = vld [vmem:[%s1254 + $0x34] sm:$0xf]
        %v1269 = vld [vmem:[%s1254 + $0x38] sm:$0xf]
        %v1270 = vld [vmem:[%s1254 + $0x3c] sm:$0xf]
        %s1271 = scalar_lea.vmem %s2, 1
        %v1272 = vld [vmem:[%s1271] sm:$0x1]
        %v1274 = vperm.slane %v1272, 0
        %v1292 = vunpack.c.l.b16 %v1255
        %v1293 = vunpack.c.l.b16 %v1256
        %v1294 = vunpack.c.l.b16 %v1257
        %v1295 = vunpack.c.l.b16 %v1258
        %v1296 = vunpack.c.l.b16 %v1259
        %v1297 = vunpack.c.l.b16 %v1260
        %v1298 = vunpack.c.l.b16 %v1261
        %v1299 = vunpack.c.l.b16 %v1262
        %v1300 = vunpack.c.l.b16 %v1263
        %v1301 = vunpack.c.l.b16 %v1264
        %v1302 = vunpack.c.l.b16 %v1265
        %v1303 = vunpack.c.l.b16 %v1266
        %v1304 = vunpack.c.l.b16 %v1267
        %v1305 = vunpack.c.l.b16 %v1268
        %v1306 = vunpack.c.l.b16 %v1269
        %v1307 = vunpack.c.l.b16 %v1270
        %v1308 = vpack.c.b16 %v1293, %v1292
        %v1309 = vpack.c.b16 %v1295, %v1294
        %v1310 = vpack.c.b16 %v1297, %v1296
        %v1311 = vpack.c.b16 %v1299, %v1298
        %v1312 = vpack.c.b16 %v1301, %v1300
        %v1313 = vpack.c.b16 %v1303, %v1302
        %v1314 = vpack.c.b16 %v1305, %v1304
        %v1315 = vpack.c.b16 %v1307, %v1306
        %1324 = vmatpush.bf16.msra.mxu0 %v1315
        %1325 = vmatpush.bf16.msra.mxu0 %v1314
        %1326 = vmatpush.bf16.msra.mxu0 %v1313
        %1327 = vmatpush.bf16.msra.mxu0 %v1312
        %1328 = vmatpush.bf16.msra.mxu0 %v1311
        %1329 = vmatpush.bf16.msra.mxu0 %v1310
        %1330 = vmatpush.bf16.msra.mxu0 %v1309
        %1331 = vmatpush.bf16.msra.mxu0 %v1308
        %1332 = vmatmul.bf16.gmra.mxu0 %v1222
        %v1333 = vpop.f32.mrf.mxu0
        %v1334 = vadd.f32 %v1274, %v1333
        %v1335 = vpop.f32.mrf.mxu0
        %v1336 = vadd.f32 %v1274, %v1335
        %1337 = vmatmul.bf16.gmra.mxu0 %v1223
        %v1338 = vpop.f32.mrf.mxu0
        %v1339 = vadd.f32 %v1274, %v1338
        %v1340 = vpop.f32.mrf.mxu0
        %v1341 = vadd.f32 %v1274, %v1340
        %1342 = vmatmul.bf16.gmra.mxu0 %v1224
        %v1343 = vpop.f32.mrf.mxu0
        %v1344 = vadd.f32 %v1274, %v1343
        %v1345 = vpop.f32.mrf.mxu0
        %v1346 = vadd.f32 %v1274, %v1345
        %1347 = vmatmul.bf16.gmra.mxu0 %v1225
        %v1348 = vpop.f32.mrf.mxu0
        %v1349 = vadd.f32 %v1274, %v1348
        %v1350 = vpop.f32.mrf.mxu0
        %v1351 = vadd.f32 %v1274, %v1350
        %1352 = vmatmul.bf16.gmra.mxu0 %v1226
        %v1353 = vpop.f32.mrf.mxu0
        %v1354 = vadd.f32 %v1274, %v1353
        %v1355 = vpop.f32.mrf.mxu0
        %v1356 = vadd.f32 %v1274, %v1355
        %1357 = vmatmul.bf16.gmra.mxu0 %v1227
        %v1358 = vpop.f32.mrf.mxu0
        %v1359 = vadd.f32 %v1274, %v1358
        %v1360 = vpop.f32.mrf.mxu0
        %v1361 = vadd.f32 %v1274, %v1360
        %1362 = vmatmul.bf16.gmra.mxu0 %v1228
        %v1363 = vpop.f32.mrf.mxu0
        %v1364 = vadd.f32 %v1274, %v1363
        %v1365 = vpop.f32.mrf.mxu0
        %v1366 = vadd.f32 %v1274, %v1365
        %1367 = vmatmul.bf16.gmra.mxu0 %v1229
        %v1368 = vpop.f32.mrf.mxu0
        %v1369 = vadd.f32 %v1274, %v1368
        %v1370 = vpop.f32.mrf.mxu0
        %v1371 = vadd.f32 %v1274, %v1370
        %1372 = vmatmul.bf16.gmra.mxu0 %v1230
        %v1373 = vpop.f32.mrf.mxu0
        %v1374 = vadd.f32 %v1274, %v1373
        %v1375 = vpop.f32.mrf.mxu0
        %v1376 = vadd.f32 %v1274, %v1375
        %1377 = vmatmul.bf16.gmra.mxu0 %v1231
        %v1378 = vpop.f32.mrf.mxu0
        %v1379 = vadd.f32 %v1274, %v1378
        %v1380 = vpop.f32.mrf.mxu0
        %v1381 = vadd.f32 %v1274, %v1380
        %1382 = vmatmul.bf16.gmra.mxu0 %v1232
        %v1383 = vpop.f32.mrf.mxu0
        %v1384 = vadd.f32 %v1274, %v1383
        %v1385 = vpop.f32.mrf.mxu0
        %v1386 = vadd.f32 %v1274, %v1385
        %1387 = vmatmul.bf16.gmra.mxu0 %v1233
        %v1388 = vpop.f32.mrf.mxu0
        %v1389 = vadd.f32 %v1274, %v1388
        %v1390 = vpop.f32.mrf.mxu0
        %v1391 = vadd.f32 %v1274, %v1390
        %1392 = vmatmul.bf16.gmra.mxu0 %v1234
        %v1393 = vpop.f32.mrf.mxu0
        %v1394 = vadd.f32 %v1274, %v1393
        %v1395 = vpop.f32.mrf.mxu0
        %v1396 = vadd.f32 %v1274, %v1395
        %1397 = vmatmul.bf16.gmra.mxu0 %v1235
        %v1398 = vpop.f32.mrf.mxu0
        %v1399 = vadd.f32 %v1274, %v1398
        %v1400 = vpop.f32.mrf.mxu0
        %v1401 = vadd.f32 %v1274, %v1400
        %1402 = vmatmul.bf16.gmra.mxu0 %v1236
        %v1403 = vpop.f32.mrf.mxu0
        %v1404 = vadd.f32 %v1274, %v1403
        %v1405 = vpop.f32.mrf.mxu0
        %v1406 = vadd.f32 %v1274, %v1405
        %1407 = vmatmul.bf16.gmra.mxu0 %v1237
        %v1408 = vpop.f32.mrf.mxu0
        %v1409 = vadd.f32 %v1274, %v1408
        %v1410 = vpop.f32.mrf.mxu0
        %v1411 = vadd.f32 %v1274, %v1410
        %1412 = vmatmul.bf16.gmra.mxu0 %v1238
        %v1413 = vpop.f32.mrf.mxu0
        %v1414 = vadd.f32 %v1274, %v1413
        %v1415 = vpop.f32.mrf.mxu0
        %v1416 = vadd.f32 %v1274, %v1415
        %1417 = vmatmul.bf16.gmra.mxu0 %v1239
        %v1418 = vpop.f32.mrf.mxu0
        %v1419 = vadd.f32 %v1274, %v1418
        %v1420 = vpop.f32.mrf.mxu0
        %v1421 = vadd.f32 %v1274, %v1420
        %1422 = vmatmul.bf16.gmra.mxu0 %v1240
        %v1423 = vpop.f32.mrf.mxu0
        %v1424 = vadd.f32 %v1274, %v1423
        %v1425 = vpop.f32.mrf.mxu0
        %v1426 = vadd.f32 %v1274, %v1425
        %1427 = vmatmul.bf16.gmra.mxu0 %v1241
        %v1428 = vpop.f32.mrf.mxu0
        %v1429 = vadd.f32 %v1274, %v1428
        %v1430 = vpop.f32.mrf.mxu0
        %v1431 = vadd.f32 %v1274, %v1430
        %1432 = vmatmul.bf16.gmra.mxu0 %v1242
        %v1433 = vpop.f32.mrf.mxu0
        %v1434 = vadd.f32 %v1274, %v1433
        %v1435 = vpop.f32.mrf.mxu0
        %v1436 = vadd.f32 %v1274, %v1435
        %1437 = vmatmul.bf16.gmra.mxu0 %v1243
        %v1438 = vpop.f32.mrf.mxu0
        %v1439 = vadd.f32 %v1274, %v1438
        %v1440 = vpop.f32.mrf.mxu0
        %v1441 = vadd.f32 %v1274, %v1440
        %1442 = vmatmul.bf16.gmra.mxu0 %v1244
        %v1443 = vpop.f32.mrf.mxu0
        %v1444 = vadd.f32 %v1274, %v1443
        %v1445 = vpop.f32.mrf.mxu0
        %v1446 = vadd.f32 %v1274, %v1445
        %1447 = vmatmul.bf16.gmra.mxu0 %v1245
        %v1448 = vpop.f32.mrf.mxu0
        %v1449 = vadd.f32 %v1274, %v1448
        %v1450 = vpop.f32.mrf.mxu0
        %v1451 = vadd.f32 %v1274, %v1450
        %1452 = vmatmul.bf16.gmra.mxu0 %v1246
        %v1453 = vpop.f32.mrf.mxu0
        %v1454 = vadd.f32 %v1274, %v1453
        %v1455 = vpop.f32.mrf.mxu0
        %v1456 = vadd.f32 %v1274, %v1455
        %1457 = vmatmul.bf16.gmra.mxu0 %v1247
        %v1458 = vpop.f32.mrf.mxu0
        %v1459 = vadd.f32 %v1274, %v1458
        %v1460 = vpop.f32.mrf.mxu0
        %v1461 = vadd.f32 %v1274, %v1460
        %1462 = vmatmul.bf16.gmra.mxu0 %v1248
        %v1463 = vpop.f32.mrf.mxu0
        %v1464 = vadd.f32 %v1274, %v1463
        %v1465 = vpop.f32.mrf.mxu0
        %v1466 = vadd.f32 %v1274, %v1465
        %1467 = vmatmul.bf16.gmra.mxu0 %v1249
        %v1468 = vpop.f32.mrf.mxu0
        %v1469 = vadd.f32 %v1274, %v1468
        %v1470 = vpop.f32.mrf.mxu0
        %v1471 = vadd.f32 %v1274, %v1470
        %1472 = vmatmul.bf16.gmra.mxu0 %v1250
        %v1473 = vpop.f32.mrf.mxu0
        %v1474 = vadd.f32 %v1274, %v1473
        %v1475 = vpop.f32.mrf.mxu0
        %v1476 = vadd.f32 %v1274, %v1475
        %1477 = vmatmul.bf16.gmra.mxu0 %v1251
        %v1478 = vpop.f32.mrf.mxu0
        %v1479 = vadd.f32 %v1274, %v1478
        %v1480 = vpop.f32.mrf.mxu0
        %v1481 = vadd.f32 %v1274, %v1480
        %1482 = vmatmul.bf16.gmra.mxu0 %v1252
        %v1483 = vpop.f32.mrf.mxu0
        %v1484 = vadd.f32 %v1274, %v1483
        %v1485 = vpop.f32.mrf.mxu0
        %v1486 = vadd.f32 %v1274, %v1485
        %1487 = vmatmul.bf16.gmra.mxu0 %v1253
        %v1488 = vpop.f32.mrf.mxu0
        %v1489 = vadd.f32 %v1274, %v1488
        %v1490 = vpop.f32.mrf.mxu0
        %v1491 = vadd.f32 %v1274, %v1490
        %1492 = vdwg.mxu0
        %v1493 = vmax.f32 %v1334, 0.0
        %v1494 = vmax.f32 %v1336, 0.0
        %v1495 = vmax.f32 %v1339, 0.0
        %v1496 = vmax.f32 %v1341, 0.0
        %v1497 = vmax.f32 %v1344, 0.0
        %v1498 = vmax.f32 %v1346, 0.0
        %v1499 = vmax.f32 %v1349, 0.0
        %v1500 = vmax.f32 %v1351, 0.0
        %v1501 = vmax.f32 %v1354, 0.0
        %v1502 = vmax.f32 %v1356, 0.0
        %v1503 = vmax.f32 %v1359, 0.0
        %v1504 = vmax.f32 %v1361, 0.0
        %v1505 = vmax.f32 %v1364, 0.0
        %v1506 = vmax.f32 %v1366, 0.0
        %v1507 = vmax.f32 %v1369, 0.0
        %v1508 = vmax.f32 %v1371, 0.0
        %v1509 = vmax.f32 %v1374, 0.0
        %v1510 = vmax.f32 %v1376, 0.0
        %v1511 = vmax.f32 %v1379, 0.0
        %v1512 = vmax.f32 %v1381, 0.0
        %v1513 = vmax.f32 %v1384, 0.0
        %v1514 = vmax.f32 %v1386, 0.0
        %v1515 = vmax.f32 %v1389, 0.0
        %v1516 = vmax.f32 %v1391, 0.0
        %v1517 = vmax.f32 %v1394, 0.0
        %v1518 = vmax.f32 %v1396, 0.0
        %v1519 = vmax.f32 %v1399, 0.0
        %v1520 = vmax.f32 %v1401, 0.0
        %v1521 = vmax.f32 %v1404, 0.0
        %v1522 = vmax.f32 %v1406, 0.0
        %v1523 = vmax.f32 %v1409, 0.0
        %v1524 = vmax.f32 %v1411, 0.0
        %v1525 = vmax.f32 %v1414, 0.0
        %v1526 = vmax.f32 %v1416, 0.0
        %v1527 = vmax.f32 %v1419, 0.0
        %v1528 = vmax.f32 %v1421, 0.0
        %v1529 = vmax.f32 %v1424, 0.0
        %v1530 = vmax.f32 %v1426, 0.0
        %v1531 = vmax.f32 %v1429, 0.0
        %v1532 = vmax.f32 %v1431, 0.0
        %v1533 = vmax.f32 %v1434, 0.0
        %v1534 = vmax.f32 %v1436, 0.0
        %v1535 = vmax.f32 %v1439, 0.0
        %v1536 = vmax.f32 %v1441, 0.0
        %v1537 = vmax.f32 %v1444, 0.0
        %v1538 = vmax.f32 %v1446, 0.0
        %v1539 = vmax.f32 %v1449, 0.0
        %v1540 = vmax.f32 %v1451, 0.0
        %v1541 = vmax.f32 %v1454, 0.0
        %v1542 = vmax.f32 %v1456, 0.0
        %v1543 = vmax.f32 %v1459, 0.0
        %v1544 = vmax.f32 %v1461, 0.0
        %v1545 = vmax.f32 %v1464, 0.0
        %v1546 = vmax.f32 %v1466, 0.0
        %v1547 = vmax.f32 %v1469, 0.0
        %v1548 = vmax.f32 %v1471, 0.0
        %v1549 = vmax.f32 %v1474, 0.0
        %v1550 = vmax.f32 %v1476, 0.0
        %v1551 = vmax.f32 %v1479, 0.0
        %v1552 = vmax.f32 %v1481, 0.0
        %v1553 = vmax.f32 %v1484, 0.0
        %v1554 = vmax.f32 %v1486, 0.0
        %v1555 = vmax.f32 %v1489, 0.0
        %v1556 = vmax.f32 %v1491, 0.0
        %v1557 = vpack.c.bf16 %v1494, %v1493
        %v1558 = vpack.c.bf16 %v1496, %v1495
        %v1559 = vpack.c.bf16 %v1498, %v1497
        %v1560 = vpack.c.bf16 %v1500, %v1499
        %v1561 = vpack.c.bf16 %v1502, %v1501
        %v1562 = vpack.c.bf16 %v1504, %v1503
        %v1563 = vpack.c.bf16 %v1506, %v1505
        %v1564 = vpack.c.bf16 %v1508, %v1507
        %v1565 = vpack.c.bf16 %v1510, %v1509
        %v1566 = vpack.c.bf16 %v1512, %v1511
        %v1567 = vpack.c.bf16 %v1514, %v1513
        %v1568 = vpack.c.bf16 %v1516, %v1515
        %v1569 = vpack.c.bf16 %v1518, %v1517
        %v1570 = vpack.c.bf16 %v1520, %v1519
        %v1571 = vpack.c.bf16 %v1522, %v1521
        %v1572 = vpack.c.bf16 %v1524, %v1523
        %v1573 = vpack.c.bf16 %v1526, %v1525
        %v1574 = vpack.c.bf16 %v1528, %v1527
        %v1575 = vpack.c.bf16 %v1530, %v1529
        %v1576 = vpack.c.bf16 %v1532, %v1531
        %v1577 = vpack.c.bf16 %v1534, %v1533
        %v1578 = vpack.c.bf16 %v1536, %v1535
        %v1579 = vpack.c.bf16 %v1538, %v1537
        %v1580 = vpack.c.bf16 %v1540, %v1539
        %v1581 = vpack.c.bf16 %v1542, %v1541
        %v1582 = vpack.c.bf16 %v1544, %v1543
        %v1583 = vpack.c.bf16 %v1546, %v1545
        %v1584 = vpack.c.bf16 %v1548, %v1547
        %v1585 = vpack.c.bf16 %v1550, %v1549
        %v1586 = vpack.c.bf16 %v1552, %v1551
        %v1587 = vpack.c.bf16 %v1554, %v1553
        %v1588 = vpack.c.bf16 %v1556, %v1555
        %s1589 = scalar_lea.vmem %s3, 64
        %v1590 = vld [vmem:[%s1589] sm:$0xf]
        %v1591 = vld [vmem:[%s1589 + $0x4] sm:$0xf]
        %v1592 = vld [vmem:[%s1589 + $0x8] sm:$0xf]
        %v1593 = vld [vmem:[%s1589 + $0xc] sm:$0xf]
        %v1594 = vld [vmem:[%s1589 + $0x10] sm:$0xf]
        %v1595 = vld [vmem:[%s1589 + $0x14] sm:$0xf]
        %v1596 = vld [vmem:[%s1589 + $0x18] sm:$0xf]
        %v1597 = vld [vmem:[%s1589 + $0x1c] sm:$0xf]
        %v1598 = vld [vmem:[%s1589 + $0x20] sm:$0xf]
        %v1599 = vld [vmem:[%s1589 + $0x24] sm:$0xf]
        %v1600 = vld [vmem:[%s1589 + $0x28] sm:$0xf]
        %v1601 = vld [vmem:[%s1589 + $0x2c] sm:$0xf]
        %v1602 = vld [vmem:[%s1589 + $0x30] sm:$0xf]
        %v1603 = vld [vmem:[%s1589 + $0x34] sm:$0xf]
        %v1604 = vld [vmem:[%s1589 + $0x38] sm:$0xf]
        %v1605 = vld [vmem:[%s1589 + $0x3c] sm:$0xf]
        %s1606 = scalar_lea.vmem %s4, 1
        %v1607 = vld [vmem:[%s1606] sm:$0x1]
        %v1609 = vperm.slane %v1607, 0
        %v1627 = vunpack.c.l.b16 %v1590
        %v1628 = vunpack.c.l.b16 %v1591
        %v1629 = vunpack.c.l.b16 %v1592
        %v1630 = vunpack.c.l.b16 %v1593
        %v1631 = vunpack.c.l.b16 %v1594
        %v1632 = vunpack.c.l.b16 %v1595
        %v1633 = vunpack.c.l.b16 %v1596
        %v1634 = vunpack.c.l.b16 %v1597
        %v1635 = vunpack.c.l.b16 %v1598
        %v1636 = vunpack.c.l.b16 %v1599
        %v1637 = vunpack.c.l.b16 %v1600
        %v1638 = vunpack.c.l.b16 %v1601
        %v1639 = vunpack.c.l.b16 %v1602
        %v1640 = vunpack.c.l.b16 %v1603
        %v1641 = vunpack.c.l.b16 %v1604
        %v1642 = vunpack.c.l.b16 %v1605
        %v1643 = vpack.c.b16 %v1628, %v1627
        %v1644 = vpack.c.b16 %v1630, %v1629
        %v1645 = vpack.c.b16 %v1632, %v1631
        %v1646 = vpack.c.b16 %v1634, %v1633
        %v1647 = vpack.c.b16 %v1636, %v1635
        %v1648 = vpack.c.b16 %v1638, %v1637
        %v1649 = vpack.c.b16 %v1640, %v1639
        %v1650 = vpack.c.b16 %v1642, %v1641
        %1659 = vmatpush.bf16.msra.mxu0 %v1650
        %1660 = vmatpush.bf16.msra.mxu0 %v1649
        %1661 = vmatpush.bf16.msra.mxu0 %v1648
        %1662 = vmatpush.bf16.msra.mxu0 %v1647
        %1663 = vmatpush.bf16.msra.mxu0 %v1646
        %1664 = vmatpush.bf16.msra.mxu0 %v1645
        %1665 = vmatpush.bf16.msra.mxu0 %v1644
        %1666 = vmatpush.bf16.msra.mxu0 %v1643
        %1667 = vmatmul.bf16.gmra.mxu0 %v1557
        %v1668 = vpop.f32.mrf.mxu0
        %v1669 = vadd.f32 %v1609, %v1668
        %v1670 = vpop.f32.mrf.mxu0
        %v1671 = vadd.f32 %v1609, %v1670
        %1672 = vmatmul.bf16.gmra.mxu0 %v1558
        %v1673 = vpop.f32.mrf.mxu0
        %v1674 = vadd.f32 %v1609, %v1673
        %v1675 = vpop.f32.mrf.mxu0
        %v1676 = vadd.f32 %v1609, %v1675
        %1677 = vmatmul.bf16.gmra.mxu0 %v1559
        %v1678 = vpop.f32.mrf.mxu0
        %v1679 = vadd.f32 %v1609, %v1678
        %v1680 = vpop.f32.mrf.mxu0
        %v1681 = vadd.f32 %v1609, %v1680
        %1682 = vmatmul.bf16.gmra.mxu0 %v1560
        %v1683 = vpop.f32.mrf.mxu0
        %v1684 = vadd.f32 %v1609, %v1683
        %v1685 = vpop.f32.mrf.mxu0
        %v1686 = vadd.f32 %v1609, %v1685
        %1687 = vmatmul.bf16.gmra.mxu0 %v1561
        %v1688 = vpop.f32.mrf.mxu0
        %v1689 = vadd.f32 %v1609, %v1688
        %v1690 = vpop.f32.mrf.mxu0
        %v1691 = vadd.f32 %v1609, %v1690
        %1692 = vmatmul.bf16.gmra.mxu0 %v1562
        %v1693 = vpop.f32.mrf.mxu0
        %v1694 = vadd.f32 %v1609, %v1693
        %v1695 = vpop.f32.mrf.mxu0
        %v1696 = vadd.f32 %v1609, %v1695
        %1697 = vmatmul.bf16.gmra.mxu0 %v1563
        %v1698 = vpop.f32.mrf.mxu0
        %v1699 = vadd.f32 %v1609, %v1698
        %v1700 = vpop.f32.mrf.mxu0
        %v1701 = vadd.f32 %v1609, %v1700
        %1702 = vmatmul.bf16.gmra.mxu0 %v1564
        %v1703 = vpop.f32.mrf.mxu0
        %v1704 = vadd.f32 %v1609, %v1703
        %v1705 = vpop.f32.mrf.mxu0
        %v1706 = vadd.f32 %v1609, %v1705
        %1707 = vmatmul.bf16.gmra.mxu0 %v1565
        %v1708 = vpop.f32.mrf.mxu0
        %v1709 = vadd.f32 %v1609, %v1708
        %v1710 = vpop.f32.mrf.mxu0
        %v1711 = vadd.f32 %v1609, %v1710
        %1712 = vmatmul.bf16.gmra.mxu0 %v1566
        %v1713 = vpop.f32.mrf.mxu0
        %v1714 = vadd.f32 %v1609, %v1713
        %v1715 = vpop.f32.mrf.mxu0
        %v1716 = vadd.f32 %v1609, %v1715
        %1717 = vmatmul.bf16.gmra.mxu0 %v1567
        %v1718 = vpop.f32.mrf.mxu0
        %v1719 = vadd.f32 %v1609, %v1718
        %v1720 = vpop.f32.mrf.mxu0
        %v1721 = vadd.f32 %v1609, %v1720
        %1722 = vmatmul.bf16.gmra.mxu0 %v1568
        %v1723 = vpop.f32.mrf.mxu0
        %v1724 = vadd.f32 %v1609, %v1723
        %v1725 = vpop.f32.mrf.mxu0
        %v1726 = vadd.f32 %v1609, %v1725
        %1727 = vmatmul.bf16.gmra.mxu0 %v1569
        %v1728 = vpop.f32.mrf.mxu0
        %v1729 = vadd.f32 %v1609, %v1728
        %v1730 = vpop.f32.mrf.mxu0
        %v1731 = vadd.f32 %v1609, %v1730
        %1732 = vmatmul.bf16.gmra.mxu0 %v1570
        %v1733 = vpop.f32.mrf.mxu0
        %v1734 = vadd.f32 %v1609, %v1733
        %v1735 = vpop.f32.mrf.mxu0
        %v1736 = vadd.f32 %v1609, %v1735
        %1737 = vmatmul.bf16.gmra.mxu0 %v1571
        %v1738 = vpop.f32.mrf.mxu0
        %v1739 = vadd.f32 %v1609, %v1738
        %v1740 = vpop.f32.mrf.mxu0
        %v1741 = vadd.f32 %v1609, %v1740
        %1742 = vmatmul.bf16.gmra.mxu0 %v1572
        %v1743 = vpop.f32.mrf.mxu0
        %v1744 = vadd.f32 %v1609, %v1743
        %v1745 = vpop.f32.mrf.mxu0
        %v1746 = vadd.f32 %v1609, %v1745
        %1747 = vmatmul.bf16.gmra.mxu0 %v1573
        %v1748 = vpop.f32.mrf.mxu0
        %v1749 = vadd.f32 %v1609, %v1748
        %v1750 = vpop.f32.mrf.mxu0
        %v1751 = vadd.f32 %v1609, %v1750
        %1752 = vmatmul.bf16.gmra.mxu0 %v1574
        %v1753 = vpop.f32.mrf.mxu0
        %v1754 = vadd.f32 %v1609, %v1753
        %v1755 = vpop.f32.mrf.mxu0
        %v1756 = vadd.f32 %v1609, %v1755
        %1757 = vmatmul.bf16.gmra.mxu0 %v1575
        %v1758 = vpop.f32.mrf.mxu0
        %v1759 = vadd.f32 %v1609, %v1758
        %v1760 = vpop.f32.mrf.mxu0
        %v1761 = vadd.f32 %v1609, %v1760
        %1762 = vmatmul.bf16.gmra.mxu0 %v1576
        %v1763 = vpop.f32.mrf.mxu0
        %v1764 = vadd.f32 %v1609, %v1763
        %v1765 = vpop.f32.mrf.mxu0
        %v1766 = vadd.f32 %v1609, %v1765
        %1767 = vmatmul.bf16.gmra.mxu0 %v1577
        %v1768 = vpop.f32.mrf.mxu0
        %v1769 = vadd.f32 %v1609, %v1768
        %v1770 = vpop.f32.mrf.mxu0
        %v1771 = vadd.f32 %v1609, %v1770
        %1772 = vmatmul.bf16.gmra.mxu0 %v1578
        %v1773 = vpop.f32.mrf.mxu0
        %v1774 = vadd.f32 %v1609, %v1773
        %v1775 = vpop.f32.mrf.mxu0
        %v1776 = vadd.f32 %v1609, %v1775
        %1777 = vmatmul.bf16.gmra.mxu0 %v1579
        %v1778 = vpop.f32.mrf.mxu0
        %v1779 = vadd.f32 %v1609, %v1778
        %v1780 = vpop.f32.mrf.mxu0
        %v1781 = vadd.f32 %v1609, %v1780
        %1782 = vmatmul.bf16.gmra.mxu0 %v1580
        %v1783 = vpop.f32.mrf.mxu0
        %v1784 = vadd.f32 %v1609, %v1783
        %v1785 = vpop.f32.mrf.mxu0
        %v1786 = vadd.f32 %v1609, %v1785
        %1787 = vmatmul.bf16.gmra.mxu0 %v1581
        %v1788 = vpop.f32.mrf.mxu0
        %v1789 = vadd.f32 %v1609, %v1788
        %v1790 = vpop.f32.mrf.mxu0
        %v1791 = vadd.f32 %v1609, %v1790
        %1792 = vmatmul.bf16.gmra.mxu0 %v1582
        %v1793 = vpop.f32.mrf.mxu0
        %v1794 = vadd.f32 %v1609, %v1793
        %v1795 = vpop.f32.mrf.mxu0
        %v1796 = vadd.f32 %v1609, %v1795
        %1797 = vmatmul.bf16.gmra.mxu0 %v1583
        %v1798 = vpop.f32.mrf.mxu0
        %v1799 = vadd.f32 %v1609, %v1798
        %v1800 = vpop.f32.mrf.mxu0
        %v1801 = vadd.f32 %v1609, %v1800
        %1802 = vmatmul.bf16.gmra.mxu0 %v1584
        %v1803 = vpop.f32.mrf.mxu0
        %v1804 = vadd.f32 %v1609, %v1803
        %v1805 = vpop.f32.mrf.mxu0
        %v1806 = vadd.f32 %v1609, %v1805
        %1807 = vmatmul.bf16.gmra.mxu0 %v1585
        %v1808 = vpop.f32.mrf.mxu0
        %v1809 = vadd.f32 %v1609, %v1808
        %v1810 = vpop.f32.mrf.mxu0
        %v1811 = vadd.f32 %v1609, %v1810
        %1812 = vmatmul.bf16.gmra.mxu0 %v1586
        %v1813 = vpop.f32.mrf.mxu0
        %v1814 = vadd.f32 %v1609, %v1813
        %v1815 = vpop.f32.mrf.mxu0
        %v1816 = vadd.f32 %v1609, %v1815
        %1817 = vmatmul.bf16.gmra.mxu0 %v1587
        %v1818 = vpop.f32.mrf.mxu0
        %v1819 = vadd.f32 %v1609, %v1818
        %v1820 = vpop.f32.mrf.mxu0
        %v1821 = vadd.f32 %v1609, %v1820
        %1822 = vmatmul.bf16.gmra.mxu0 %v1588
        %v1823 = vpop.f32.mrf.mxu0
        %v1824 = vadd.f32 %v1609, %v1823
        %v1825 = vpop.f32.mrf.mxu0
        %v1826 = vadd.f32 %v1609, %v1825
        %1827 = vdwg.mxu0
        %v1828 = vadd.f32 %v1094, %v1669
        %v1829 = vadd.f32 %v1095, %v1671
        %v1830 = vadd.f32 %v1096, %v1674
        %v1831 = vadd.f32 %v1097, %v1676
        %v1832 = vadd.f32 %v1098, %v1679
        %v1833 = vadd.f32 %v1099, %v1681
        %v1834 = vadd.f32 %v1100, %v1684
        %v1835 = vadd.f32 %v1101, %v1686
        %v1836 = vadd.f32 %v1102, %v1689
        %v1837 = vadd.f32 %v1103, %v1691
        %v1838 = vadd.f32 %v1104, %v1694
        %v1839 = vadd.f32 %v1105, %v1696
        %v1840 = vadd.f32 %v1106, %v1699
        %v1841 = vadd.f32 %v1107, %v1701
        %v1842 = vadd.f32 %v1108, %v1704
        %v1843 = vadd.f32 %v1109, %v1706
        %v1844 = vadd.f32 %v1110, %v1709
        %v1845 = vadd.f32 %v1111, %v1711
        %v1846 = vadd.f32 %v1112, %v1714
        %v1847 = vadd.f32 %v1113, %v1716
        %v1848 = vadd.f32 %v1114, %v1719
        %v1849 = vadd.f32 %v1115, %v1721
        %v1850 = vadd.f32 %v1116, %v1724
        %v1851 = vadd.f32 %v1117, %v1726
        %v1852 = vadd.f32 %v1118, %v1729
        %v1853 = vadd.f32 %v1119, %v1731
        %v1854 = vadd.f32 %v1120, %v1734
        %v1855 = vadd.f32 %v1121, %v1736
        %v1856 = vadd.f32 %v1122, %v1739
        %v1857 = vadd.f32 %v1123, %v1741
        %v1858 = vadd.f32 %v1124, %v1744
        %v1859 = vadd.f32 %v1125, %v1746
        %v1860 = vadd.f32 %v1126, %v1749
        %v1861 = vadd.f32 %v1127, %v1751
        %v1862 = vadd.f32 %v1128, %v1754
        %v1863 = vadd.f32 %v1129, %v1756
        %v1864 = vadd.f32 %v1130, %v1759
        %v1865 = vadd.f32 %v1131, %v1761
        %v1866 = vadd.f32 %v1132, %v1764
        %v1867 = vadd.f32 %v1133, %v1766
        %v1868 = vadd.f32 %v1134, %v1769
        %v1869 = vadd.f32 %v1135, %v1771
        %v1870 = vadd.f32 %v1136, %v1774
        %v1871 = vadd.f32 %v1137, %v1776
        %v1872 = vadd.f32 %v1138, %v1779
        %v1873 = vadd.f32 %v1139, %v1781
        %v1874 = vadd.f32 %v1140, %v1784
        %v1875 = vadd.f32 %v1141, %v1786
        %v1876 = vadd.f32 %v1142, %v1789
        %v1877 = vadd.f32 %v1143, %v1791
        %v1878 = vadd.f32 %v1144, %v1794
        %v1879 = vadd.f32 %v1145, %v1796
        %v1880 = vadd.f32 %v1146, %v1799
        %v1881 = vadd.f32 %v1147, %v1801
        %v1882 = vadd.f32 %v1148, %v1804
        %v1883 = vadd.f32 %v1149, %v1806
        %v1884 = vadd.f32 %v1150, %v1809
        %v1885 = vadd.f32 %v1151, %v1811
        %v1886 = vadd.f32 %v1152, %v1814
        %v1887 = vadd.f32 %v1153, %v1816
        %v1888 = vadd.f32 %v1154, %v1819
        %v1889 = vadd.f32 %v1155, %v1821
        %v1890 = vadd.f32 %v1156, %v1824
        %v1891 = vadd.f32 %v1157, %v1826
        %v1892 = vpack.c.bf16 %v1829, %v1828
        %v1893 = vpack.c.bf16 %v1831, %v1830
        %v1894 = vpack.c.bf16 %v1833, %v1832
        %v1895 = vpack.c.bf16 %v1835, %v1834
        %v1896 = vpack.c.bf16 %v1837, %v1836
        %v1897 = vpack.c.bf16 %v1839, %v1838
        %v1898 = vpack.c.bf16 %v1841, %v1840
        %v1899 = vpack.c.bf16 %v1843, %v1842
        %v1900 = vpack.c.bf16 %v1845, %v1844
        %v1901 = vpack.c.bf16 %v1847, %v1846
        %v1902 = vpack.c.bf16 %v1849, %v1848
        %v1903 = vpack.c.bf16 %v1851, %v1850
        %v1904 = vpack.c.bf16 %v1853, %v1852
        %v1905 = vpack.c.bf16 %v1855, %v1854
        %v1906 = vpack.c.bf16 %v1857, %v1856
        %v1907 = vpack.c.bf16 %v1859, %v1858
        %v1908 = vpack.c.bf16 %v1861, %v1860
        %v1909 = vpack.c.bf16 %v1863, %v1862
        %v1910 = vpack.c.bf16 %v1865, %v1864
        %v1911 = vpack.c.bf16 %v1867, %v1866
        %v1912 = vpack.c.bf16 %v1869, %v1868
        %v1913 = vpack.c.bf16 %v1871, %v1870
        %v1914 = vpack.c.bf16 %v1873, %v1872
        %v1915 = vpack.c.bf16 %v1875, %v1874
        %v1916 = vpack.c.bf16 %v1877, %v1876
        %v1917 = vpack.c.bf16 %v1879, %v1878
        %v1918 = vpack.c.bf16 %v1881, %v1880
        %v1919 = vpack.c.bf16 %v1883, %v1882
        %v1920 = vpack.c.bf16 %v1885, %v1884
        %v1921 = vpack.c.bf16 %v1887, %v1886
        %v1922 = vpack.c.bf16 %v1889, %v1888
        %v1923 = vpack.c.bf16 %v1891, %v1890
        %v1924 = vld [vmem:[%s5] sm:$0xf]
        %v1925 = vld [vmem:[%s5 + $0x4] sm:$0xf]
        %v1926 = vld [vmem:[%s5 + $0x8] sm:$0xf]
        %v1927 = vld [vmem:[%s5 + $0xc] sm:$0xf]
        %v1928 = vld [vmem:[%s5 + $0x10] sm:$0xf]
        %v1929 = vld [vmem:[%s5 + $0x14] sm:$0xf]
        %v1930 = vld [vmem:[%s5 + $0x18] sm:$0xf]
        %v1931 = vld [vmem:[%s5 + $0x1c] sm:$0xf]
        %v1932 = vld [vmem:[%s5 + $0x20] sm:$0xf]
        %v1933 = vld [vmem:[%s5 + $0x24] sm:$0xf]
        %v1934 = vld [vmem:[%s5 + $0x28] sm:$0xf]
        %v1935 = vld [vmem:[%s5 + $0x2c] sm:$0xf]
        %v1936 = vld [vmem:[%s5 + $0x30] sm:$0xf]
        %v1937 = vld [vmem:[%s5 + $0x34] sm:$0xf]
        %v1938 = vld [vmem:[%s5 + $0x38] sm:$0xf]
        %v1939 = vld [vmem:[%s5 + $0x3c] sm:$0xf]
        %v1940 = vld [vmem:[%s6] sm:$0x1]
        %v1942 = vperm.slane %v1940, 0
        %v1960 = vunpack.c.l.b16 %v1924
        %v1961 = vunpack.c.l.b16 %v1925
        %v1962 = vunpack.c.l.b16 %v1926
        %v1963 = vunpack.c.l.b16 %v1927
        %v1964 = vunpack.c.l.b16 %v1928
        %v1965 = vunpack.c.l.b16 %v1929
        %v1966 = vunpack.c.l.b16 %v1930
        %v1967 = vunpack.c.l.b16 %v1931
        %v1968 = vunpack.c.l.b16 %v1932
        %v1969 = vunpack.c.l.b16 %v1933
        %v1970 = vunpack.c.l.b16 %v1934
        %v1971 = vunpack.c.l.b16 %v1935
        %v1972 = vunpack.c.l.b16 %v1936
        %v1973 = vunpack.c.l.b16 %v1937
        %v1974 = vunpack.c.l.b16 %v1938
        %v1975 = vunpack.c.l.b16 %v1939
        %v1976 = vpack.c.b16 %v1961, %v1960
        %v1977 = vpack.c.b16 %v1963, %v1962
        %v1978 = vpack.c.b16 %v1965, %v1964
        %v1979 = vpack.c.b16 %v1967, %v1966
        %v1980 = vpack.c.b16 %v1969, %v1968
        %v1981 = vpack.c.b16 %v1971, %v1970
        %v1982 = vpack.c.b16 %v1973, %v1972
        %v1983 = vpack.c.b16 %v1975, %v1974
        %1992 = vmatpush.bf16.msra.mxu0 %v1983
        %1993 = vmatpush.bf16.msra.mxu0 %v1982
        %1994 = vmatpush.bf16.msra.mxu0 %v1981
        %1995 = vmatpush.bf16.msra.mxu0 %v1980
        %1996 = vmatpush.bf16.msra.mxu0 %v1979
        %1997 = vmatpush.bf16.msra.mxu0 %v1978
        %1998 = vmatpush.bf16.msra.mxu0 %v1977
        %1999 = vmatpush.bf16.msra.mxu0 %v1976
        %2000 = vmatmul.bf16.gmra.mxu0 %v1892
        %v2001 = vpop.f32.mrf.mxu0
        %v2002 = vadd.f32 %v1942, %v2001
        %v2003 = vpop.f32.mrf.mxu0
        %v2004 = vadd.f32 %v1942, %v2003
        %2005 = vmatmul.bf16.gmra.mxu0 %v1893
        %v2006 = vpop.f32.mrf.mxu0
        %v2007 = vadd.f32 %v1942, %v2006
        %v2008 = vpop.f32.mrf.mxu0
        %v2009 = vadd.f32 %v1942, %v2008
        %2010 = vmatmul.bf16.gmra.mxu0 %v1894
        %v2011 = vpop.f32.mrf.mxu0
        %v2012 = vadd.f32 %v1942, %v2011
        %v2013 = vpop.f32.mrf.mxu0
        %v2014 = vadd.f32 %v1942, %v2013
        %2015 = vmatmul.bf16.gmra.mxu0 %v1895
        %v2016 = vpop.f32.mrf.mxu0
        %v2017 = vadd.f32 %v1942, %v2016
        %v2018 = vpop.f32.mrf.mxu0
        %v2019 = vadd.f32 %v1942, %v2018
        %2020 = vmatmul.bf16.gmra.mxu0 %v1896
        %v2021 = vpop.f32.mrf.mxu0
        %v2022 = vadd.f32 %v1942, %v2021
        %v2023 = vpop.f32.mrf.mxu0
        %v2024 = vadd.f32 %v1942, %v2023
        %2025 = vmatmul.bf16.gmra.mxu0 %v1897
        %v2026 = vpop.f32.mrf.mxu0
        %v2027 = vadd.f32 %v1942, %v2026
        %v2028 = vpop.f32.mrf.mxu0
        %v2029 = vadd.f32 %v1942, %v2028
        %2030 = vmatmul.bf16.gmra.mxu0 %v1898
        %v2031 = vpop.f32.mrf.mxu0
        %v2032 = vadd.f32 %v1942, %v2031
        %v2033 = vpop.f32.mrf.mxu0
        %v2034 = vadd.f32 %v1942, %v2033
        %2035 = vmatmul.bf16.gmra.mxu0 %v1899
        %v2036 = vpop.f32.mrf.mxu0
        %v2037 = vadd.f32 %v1942, %v2036
        %v2038 = vpop.f32.mrf.mxu0
        %v2039 = vadd.f32 %v1942, %v2038
        %2040 = vmatmul.bf16.gmra.mxu0 %v1900
        %v2041 = vpop.f32.mrf.mxu0
        %v2042 = vadd.f32 %v1942, %v2041
        %v2043 = vpop.f32.mrf.mxu0
        %v2044 = vadd.f32 %v1942, %v2043
        %2045 = vmatmul.bf16.gmra.mxu0 %v1901
        %v2046 = vpop.f32.mrf.mxu0
        %v2047 = vadd.f32 %v1942, %v2046
        %v2048 = vpop.f32.mrf.mxu0
        %v2049 = vadd.f32 %v1942, %v2048
        %2050 = vmatmul.bf16.gmra.mxu0 %v1902
        %v2051 = vpop.f32.mrf.mxu0
        %v2052 = vadd.f32 %v1942, %v2051
        %v2053 = vpop.f32.mrf.mxu0
        %v2054 = vadd.f32 %v1942, %v2053
        %2055 = vmatmul.bf16.gmra.mxu0 %v1903
        %v2056 = vpop.f32.mrf.mxu0
        %v2057 = vadd.f32 %v1942, %v2056
        %v2058 = vpop.f32.mrf.mxu0
        %v2059 = vadd.f32 %v1942, %v2058
        %2060 = vmatmul.bf16.gmra.mxu0 %v1904
        %v2061 = vpop.f32.mrf.mxu0
        %v2062 = vadd.f32 %v1942, %v2061
        %v2063 = vpop.f32.mrf.mxu0
        %v2064 = vadd.f32 %v1942, %v2063
        %2065 = vmatmul.bf16.gmra.mxu0 %v1905
        %v2066 = vpop.f32.mrf.mxu0
        %v2067 = vadd.f32 %v1942, %v2066
        %v2068 = vpop.f32.mrf.mxu0
        %v2069 = vadd.f32 %v1942, %v2068
        %2070 = vmatmul.bf16.gmra.mxu0 %v1906
        %v2071 = vpop.f32.mrf.mxu0
        %v2072 = vadd.f32 %v1942, %v2071
        %v2073 = vpop.f32.mrf.mxu0
        %v2074 = vadd.f32 %v1942, %v2073
        %2075 = vmatmul.bf16.gmra.mxu0 %v1907
        %v2076 = vpop.f32.mrf.mxu0
        %v2077 = vadd.f32 %v1942, %v2076
        %v2078 = vpop.f32.mrf.mxu0
        %v2079 = vadd.f32 %v1942, %v2078
        %2080 = vmatmul.bf16.gmra.mxu0 %v1908
        %v2081 = vpop.f32.mrf.mxu0
        %v2082 = vadd.f32 %v1942, %v2081
        %v2083 = vpop.f32.mrf.mxu0
        %v2084 = vadd.f32 %v1942, %v2083
        %2085 = vmatmul.bf16.gmra.mxu0 %v1909
        %v2086 = vpop.f32.mrf.mxu0
        %v2087 = vadd.f32 %v1942, %v2086
        %v2088 = vpop.f32.mrf.mxu0
        %v2089 = vadd.f32 %v1942, %v2088
        %2090 = vmatmul.bf16.gmra.mxu0 %v1910
        %v2091 = vpop.f32.mrf.mxu0
        %v2092 = vadd.f32 %v1942, %v2091
        %v2093 = vpop.f32.mrf.mxu0
        %v2094 = vadd.f32 %v1942, %v2093
        %2095 = vmatmul.bf16.gmra.mxu0 %v1911
        %v2096 = vpop.f32.mrf.mxu0
        %v2097 = vadd.f32 %v1942, %v2096
        %v2098 = vpop.f32.mrf.mxu0
        %v2099 = vadd.f32 %v1942, %v2098
        %2100 = vmatmul.bf16.gmra.mxu0 %v1912
        %v2101 = vpop.f32.mrf.mxu0
        %v2102 = vadd.f32 %v1942, %v2101
        %v2103 = vpop.f32.mrf.mxu0
        %v2104 = vadd.f32 %v1942, %v2103
        %2105 = vmatmul.bf16.gmra.mxu0 %v1913
        %v2106 = vpop.f32.mrf.mxu0
        %v2107 = vadd.f32 %v1942, %v2106
        %v2108 = vpop.f32.mrf.mxu0
        %v2109 = vadd.f32 %v1942, %v2108
        %2110 = vmatmul.bf16.gmra.mxu0 %v1914
        %v2111 = vpop.f32.mrf.mxu0
        %v2112 = vadd.f32 %v1942, %v2111
        %v2113 = vpop.f32.mrf.mxu0
        %v2114 = vadd.f32 %v1942, %v2113
        %2115 = vmatmul.bf16.gmra.mxu0 %v1915
        %v2116 = vpop.f32.mrf.mxu0
        %v2117 = vadd.f32 %v1942, %v2116
        %v2118 = vpop.f32.mrf.mxu0
        %v2119 = vadd.f32 %v1942, %v2118
        %2120 = vmatmul.bf16.gmra.mxu0 %v1916
        %v2121 = vpop.f32.mrf.mxu0
        %v2122 = vadd.f32 %v1942, %v2121
        %v2123 = vpop.f32.mrf.mxu0
        %v2124 = vadd.f32 %v1942, %v2123
        %2125 = vmatmul.bf16.gmra.mxu0 %v1917
        %v2126 = vpop.f32.mrf.mxu0
        %v2127 = vadd.f32 %v1942, %v2126
        %v2128 = vpop.f32.mrf.mxu0
        %v2129 = vadd.f32 %v1942, %v2128
        %2130 = vmatmul.bf16.gmra.mxu0 %v1918
        %v2131 = vpop.f32.mrf.mxu0
        %v2132 = vadd.f32 %v1942, %v2131
        %v2133 = vpop.f32.mrf.mxu0
        %v2134 = vadd.f32 %v1942, %v2133
        %2135 = vmatmul.bf16.gmra.mxu0 %v1919
        %v2136 = vpop.f32.mrf.mxu0
        %v2137 = vadd.f32 %v1942, %v2136
        %v2138 = vpop.f32.mrf.mxu0
        %v2139 = vadd.f32 %v1942, %v2138
        %2140 = vmatmul.bf16.gmra.mxu0 %v1920
        %v2141 = vpop.f32.mrf.mxu0
        %v2142 = vadd.f32 %v1942, %v2141
        %v2143 = vpop.f32.mrf.mxu0
        %v2144 = vadd.f32 %v1942, %v2143
        %2145 = vmatmul.bf16.gmra.mxu0 %v1921
        %v2146 = vpop.f32.mrf.mxu0
        %v2147 = vadd.f32 %v1942, %v2146
        %v2148 = vpop.f32.mrf.mxu0
        %v2149 = vadd.f32 %v1942, %v2148
        %2150 = vmatmul.bf16.gmra.mxu0 %v1922
        %v2151 = vpop.f32.mrf.mxu0
        %v2152 = vadd.f32 %v1942, %v2151
        %v2153 = vpop.f32.mrf.mxu0
        %v2154 = vadd.f32 %v1942, %v2153
        %2155 = vmatmul.bf16.gmra.mxu0 %v1923
        %v2156 = vpop.f32.mrf.mxu0
        %v2157 = vadd.f32 %v1942, %v2156
        %v2158 = vpop.f32.mrf.mxu0
        %v2159 = vadd.f32 %v1942, %v2158
        %2160 = vdwg.mxu0
        %v2161 = vxor.u32 %v2002, 2147483648
        %v2162 = vxor.u32 %v2004, 2147483648
        %v2163 = vxor.u32 %v2007, 2147483648
        %v2164 = vxor.u32 %v2009, 2147483648
        %v2165 = vxor.u32 %v2012, 2147483648
        %v2166 = vxor.u32 %v2014, 2147483648
        %v2167 = vxor.u32 %v2017, 2147483648
        %v2168 = vxor.u32 %v2019, 2147483648
        %v2169 = vxor.u32 %v2022, 2147483648
        %v2170 = vxor.u32 %v2024, 2147483648
        %v2171 = vxor.u32 %v2027, 2147483648
        %v2172 = vxor.u32 %v2029, 2147483648
        %v2173 = vxor.u32 %v2032, 2147483648
        %v2174 = vxor.u32 %v2034, 2147483648
        %v2175 = vxor.u32 %v2037, 2147483648
        %v2176 = vxor.u32 %v2039, 2147483648
        %v2177 = vxor.u32 %v2042, 2147483648
        %v2178 = vxor.u32 %v2044, 2147483648
        %v2179 = vxor.u32 %v2047, 2147483648
        %v2180 = vxor.u32 %v2049, 2147483648
        %v2181 = vxor.u32 %v2052, 2147483648
        %v2182 = vxor.u32 %v2054, 2147483648
        %v2183 = vxor.u32 %v2057, 2147483648
        %v2184 = vxor.u32 %v2059, 2147483648
        %v2185 = vxor.u32 %v2062, 2147483648
        %v2186 = vxor.u32 %v2064, 2147483648
        %v2187 = vxor.u32 %v2067, 2147483648
        %v2188 = vxor.u32 %v2069, 2147483648
        %v2189 = vxor.u32 %v2072, 2147483648
        %v2190 = vxor.u32 %v2074, 2147483648
        %v2191 = vxor.u32 %v2077, 2147483648
        %v2192 = vxor.u32 %v2079, 2147483648
        %v2193 = vxor.u32 %v2082, 2147483648
        %v2194 = vxor.u32 %v2084, 2147483648
        %v2195 = vxor.u32 %v2087, 2147483648
        %v2196 = vxor.u32 %v2089, 2147483648
        %v2197 = vxor.u32 %v2092, 2147483648
        %v2198 = vxor.u32 %v2094, 2147483648
        %v2199 = vxor.u32 %v2097, 2147483648
        %v2200 = vxor.u32 %v2099, 2147483648
        %v2201 = vxor.u32 %v2102, 2147483648
        %v2202 = vxor.u32 %v2104, 2147483648
        %v2203 = vxor.u32 %v2107, 2147483648
        %v2204 = vxor.u32 %v2109, 2147483648
        %v2205 = vxor.u32 %v2112, 2147483648
        %v2206 = vxor.u32 %v2114, 2147483648
        %v2207 = vxor.u32 %v2117, 2147483648
        %v2208 = vxor.u32 %v2119, 2147483648
        %v2209 = vxor.u32 %v2122, 2147483648
        %v2210 = vxor.u32 %v2124, 2147483648
        %v2211 = vxor.u32 %v2127, 2147483648
        %v2212 = vxor.u32 %v2129, 2147483648
        %v2213 = vxor.u32 %v2132, 2147483648
        %v2214 = vxor.u32 %v2134, 2147483648
        %v2215 = vxor.u32 %v2137, 2147483648
        %v2216 = vxor.u32 %v2139, 2147483648
        %v2217 = vxor.u32 %v2142, 2147483648
        %v2218 = vxor.u32 %v2144, 2147483648
        %v2219 = vxor.u32 %v2147, 2147483648
        %v2220 = vxor.u32 %v2149, 2147483648
        %v2221 = vxor.u32 %v2152, 2147483648
        %v2222 = vxor.u32 %v2154, 2147483648
        %v2223 = vxor.u32 %v2157, 2147483648
        %v2224 = vxor.u32 %v2159, 2147483648
        %v2225 = vmul.f32 %v2161, 1.442695
        %v2226 = vpow.pop %v2225
        %v2227 = vmul.f32 %v2162, 1.442695
        %v2228 = vpow.pop %v2227
        %v2229 = vmul.f32 %v2163, 1.442695
        %v2230 = vpow.pop %v2229
        %v2231 = vmul.f32 %v2164, 1.442695
        %v2232 = vpow.pop %v2231
        %v2233 = vmul.f32 %v2165, 1.442695
        %v2234 = vpow.pop %v2233
        %v2235 = vmul.f32 %v2166, 1.442695
        %v2236 = vpow.pop %v2235
        %v2237 = vmul.f32 %v2167, 1.442695
        %v2238 = vpow.pop %v2237
        %v2239 = vmul.f32 %v2168, 1.442695
        %v2240 = vpow.pop %v2239
        %v2241 = vmul.f32 %v2169, 1.442695
        %v2242 = vpow.pop %v2241
        %v2243 = vmul.f32 %v2170, 1.442695
        %v2244 = vpow.pop %v2243
        %v2245 = vmul.f32 %v2171, 1.442695
        %v2246 = vpow.pop %v2245
        %v2247 = vmul.f32 %v2172, 1.442695
        %v2248 = vpow.pop %v2247
        %v2249 = vmul.f32 %v2173, 1.442695
        %v2250 = vpow.pop %v2249
        %v2251 = vmul.f32 %v2174, 1.442695
        %v2252 = vpow.pop %v2251
        %v2253 = vmul.f32 %v2175, 1.442695
        %v2254 = vpow.pop %v2253
        %v2255 = vmul.f32 %v2176, 1.442695
        %v2256 = vpow.pop %v2255
        %v2257 = vmul.f32 %v2177, 1.442695
        %v2258 = vpow.pop %v2257
        %v2259 = vmul.f32 %v2178, 1.442695
        %v2260 = vpow.pop %v2259
        %v2261 = vmul.f32 %v2179, 1.442695
        %v2262 = vpow.pop %v2261
        %v2263 = vmul.f32 %v2180, 1.442695
        %v2264 = vpow.pop %v2263
        %v2265 = vmul.f32 %v2181, 1.442695
        %v2266 = vpow.pop %v2265
        %v2267 = vmul.f32 %v2182, 1.442695
        %v2268 = vpow.pop %v2267
        %v2269 = vmul.f32 %v2183, 1.442695
        %v2270 = vpow.pop %v2269
        %v2271 = vmul.f32 %v2184, 1.442695
        %v2272 = vpow.pop %v2271
        %v2273 = vmul.f32 %v2185, 1.442695
        %v2274 = vpow.pop %v2273
        %v2275 = vmul.f32 %v2186, 1.442695
        %v2276 = vpow.pop %v2275
        %v2277 = vmul.f32 %v2187, 1.442695
        %v2278 = vpow.pop %v2277
        %v2279 = vmul.f32 %v2188, 1.442695
        %v2280 = vpow.pop %v2279
        %v2281 = vmul.f32 %v2189, 1.442695
        %v2282 = vpow.pop %v2281
        %v2283 = vmul.f32 %v2190, 1.442695
        %v2284 = vpow.pop %v2283
        %v2285 = vmul.f32 %v2191, 1.442695
        %v2286 = vpow.pop %v2285
        %v2287 = vmul.f32 %v2192, 1.442695
        %v2288 = vpow.pop %v2287
        %v2289 = vmul.f32 %v2193, 1.442695
        %v2290 = vpow.pop %v2289
        %v2291 = vmul.f32 %v2194, 1.442695
        %v2292 = vpow.pop %v2291
        %v2293 = vmul.f32 %v2195, 1.442695
        %v2294 = vpow.pop %v2293
        %v2295 = vmul.f32 %v2196, 1.442695
        %v2296 = vpow.pop %v2295
        %v2297 = vmul.f32 %v2197, 1.442695
        %v2298 = vpow.pop %v2297
        %v2299 = vmul.f32 %v2198, 1.442695
        %v2300 = vpow.pop %v2299
        %v2301 = vmul.f32 %v2199, 1.442695
        %v2302 = vpow.pop %v2301
        %v2303 = vmul.f32 %v2200, 1.442695
        %v2304 = vpow.pop %v2303
        %v2305 = vmul.f32 %v2201, 1.442695
        %v2306 = vpow.pop %v2305
        %v2307 = vmul.f32 %v2202, 1.442695
        %v2308 = vpow.pop %v2307
        %v2309 = vmul.f32 %v2203, 1.442695
        %v2310 = vpow.pop %v2309
        %v2311 = vmul.f32 %v2204, 1.442695
        %v2312 = vpow.pop %v2311
        %v2313 = vmul.f32 %v2205, 1.442695
        %v2314 = vpow.pop %v2313
        %v2315 = vmul.f32 %v2206, 1.442695
        %v2316 = vpow.pop %v2315
        %v2317 = vmul.f32 %v2207, 1.442695
        %v2318 = vpow.pop %v2317
        %v2319 = vmul.f32 %v2208, 1.442695
        %v2320 = vpow.pop %v2319
        %v2321 = vmul.f32 %v2209, 1.442695
        %v2322 = vpow.pop %v2321
        %v2323 = vmul.f32 %v2210, 1.442695
        %v2324 = vpow.pop %v2323
        %v2325 = vmul.f32 %v2211, 1.442695
        %v2326 = vpow.pop %v2325
        %v2327 = vmul.f32 %v2212, 1.442695
        %v2328 = vpow.pop %v2327
        %v2329 = vmul.f32 %v2213, 1.442695
        %v2330 = vpow.pop %v2329
        %v2331 = vmul.f32 %v2214, 1.442695
        %v2332 = vpow.pop %v2331
        %v2333 = vmul.f32 %v2215, 1.442695
        %v2334 = vpow.pop %v2333
        %v2335 = vmul.f32 %v2216, 1.442695
        %v2336 = vpow.pop %v2335
        %v2337 = vmul.f32 %v2217, 1.442695
        %v2338 = vpow.pop %v2337
        %v2339 = vmul.f32 %v2218, 1.442695
        %v2340 = vpow.pop %v2339
        %v2341 = vmul.f32 %v2219, 1.442695
        %v2342 = vpow.pop %v2341
        %v2343 = vmul.f32 %v2220, 1.442695
        %v2344 = vpow.pop %v2343
        %v2345 = vmul.f32 %v2221, 1.442695
        %v2346 = vpow.pop %v2345
        %v2347 = vmul.f32 %v2222, 1.442695
        %v2348 = vpow.pop %v2347
        %v2349 = vmul.f32 %v2223, 1.442695
        %v2350 = vpow.pop %v2349
        %v2351 = vmul.f32 %v2224, 1.442695
        %v2352 = vpow.pop %v2351
        %v2353 = vadd.f32 %v2226, 1.0
        %v2354 = vadd.f32 %v2228, 1.0
        %v2355 = vadd.f32 %v2230, 1.0
        %v2356 = vadd.f32 %v2232, 1.0
        %v2357 = vadd.f32 %v2234, 1.0
        %v2358 = vadd.f32 %v2236, 1.0
        %v2359 = vadd.f32 %v2238, 1.0
        %v2360 = vadd.f32 %v2240, 1.0
        %v2361 = vadd.f32 %v2242, 1.0
        %v2362 = vadd.f32 %v2244, 1.0
        %v2363 = vadd.f32 %v2246, 1.0
        %v2364 = vadd.f32 %v2248, 1.0
        %v2365 = vadd.f32 %v2250, 1.0
        %v2366 = vadd.f32 %v2252, 1.0
        %v2367 = vadd.f32 %v2254, 1.0
        %v2368 = vadd.f32 %v2256, 1.0
        %v2369 = vadd.f32 %v2258, 1.0
        %v2370 = vadd.f32 %v2260, 1.0
        %v2371 = vadd.f32 %v2262, 1.0
        %v2372 = vadd.f32 %v2264, 1.0
        %v2373 = vadd.f32 %v2266, 1.0
        %v2374 = vadd.f32 %v2268, 1.0
        %v2375 = vadd.f32 %v2270, 1.0
        %v2376 = vadd.f32 %v2272, 1.0
        %v2377 = vadd.f32 %v2274, 1.0
        %v2378 = vadd.f32 %v2276, 1.0
        %v2379 = vadd.f32 %v2278, 1.0
        %v2380 = vadd.f32 %v2280, 1.0
        %v2381 = vadd.f32 %v2282, 1.0
        %v2382 = vadd.f32 %v2284, 1.0
        %v2383 = vadd.f32 %v2286, 1.0
        %v2384 = vadd.f32 %v2288, 1.0
        %v2385 = vadd.f32 %v2290, 1.0
        %v2386 = vadd.f32 %v2292, 1.0
        %v2387 = vadd.f32 %v2294, 1.0
        %v2388 = vadd.f32 %v2296, 1.0
        %v2389 = vadd.f32 %v2298, 1.0
        %v2390 = vadd.f32 %v2300, 1.0
        %v2391 = vadd.f32 %v2302, 1.0
        %v2392 = vadd.f32 %v2304, 1.0
        %v2393 = vadd.f32 %v2306, 1.0
        %v2394 = vadd.f32 %v2308, 1.0
        %v2395 = vadd.f32 %v2310, 1.0
        %v2396 = vadd.f32 %v2312, 1.0
        %v2397 = vadd.f32 %v2314, 1.0
        %v2398 = vadd.f32 %v2316, 1.0
        %v2399 = vadd.f32 %v2318, 1.0
        %v2400 = vadd.f32 %v2320, 1.0
        %v2401 = vadd.f32 %v2322, 1.0
        %v2402 = vadd.f32 %v2324, 1.0
        %v2403 = vadd.f32 %v2326, 1.0
        %v2404 = vadd.f32 %v2328, 1.0
        %v2405 = vadd.f32 %v2330, 1.0
        %v2406 = vadd.f32 %v2332, 1.0
        %v2407 = vadd.f32 %v2334, 1.0
        %v2408 = vadd.f32 %v2336, 1.0
        %v2409 = vadd.f32 %v2338, 1.0
        %v2410 = vadd.f32 %v2340, 1.0
        %v2411 = vadd.f32 %v2342, 1.0
        %v2412 = vadd.f32 %v2344, 1.0
        %v2413 = vadd.f32 %v2346, 1.0
        %v2414 = vadd.f32 %v2348, 1.0
        %v2415 = vadd.f32 %v2350, 1.0
        %v2416 = vadd.f32 %v2352, 1.0
        %v2417 = vrcp.pop %v2353
        %v2418 = vmul.f32 %v2353, %v2417
        %v2419 = vsub.f32 1.0, %v2418
        %v2420 = vmul.f32 %v2417, %v2419
        %v2421 = vadd.f32 %v2417, %v2420
        %vm2422 = vweird.f32 %v2353
        %vm2423 = vweird.f32 %v2417
        %vm2424 = vmor %vm2422, %vm2423
        %v2425 = vsel %vm2424, %v2417, %v2421
        %v2426 = vand.u32 2147483647, %v2353
        %vm2427 = vcmp.eq.f32.partialorder %v2426, 8.507059e+37
        %v2428 = vand.u32 %v2353, 2147483648
        %v2429 = vor.u32 1.1754944e-38, %v2428
        %v2430 = vsel %vm2427, %v2429, %v2425
        %v2431 = vmul.f32 1.0, %v2430
        %v2432 = vrcp.pop %v2354
        %v2433 = vmul.f32 %v2354, %v2432
        %v2434 = vsub.f32 1.0, %v2433
        %v2435 = vmul.f32 %v2432, %v2434
        %v2436 = vadd.f32 %v2432, %v2435
        %vm2437 = vweird.f32 %v2354
        %vm2438 = vweird.f32 %v2432
        %vm2439 = vmor %vm2437, %vm2438
        %v2440 = vsel %vm2439, %v2432, %v2436
        %v2441 = vand.u32 2147483647, %v2354
        %vm2442 = vcmp.eq.f32.partialorder %v2441, 8.507059e+37
        %v2443 = vand.u32 %v2354, 2147483648
        %v2444 = vor.u32 1.1754944e-38, %v2443
        %v2445 = vsel %vm2442, %v2444, %v2440
        %v2446 = vmul.f32 1.0, %v2445
        %v2447 = vrcp.pop %v2355
        %v2448 = vmul.f32 %v2355, %v2447
        %v2449 = vsub.f32 1.0, %v2448
        %v2450 = vmul.f32 %v2447, %v2449
        %v2451 = vadd.f32 %v2447, %v2450
        %vm2452 = vweird.f32 %v2355
        %vm2453 = vweird.f32 %v2447
        %vm2454 = vmor %vm2452, %vm2453
        %v2455 = vsel %vm2454, %v2447, %v2451
        %v2456 = vand.u32 2147483647, %v2355
        %vm2457 = vcmp.eq.f32.partialorder %v2456, 8.507059e+37
        %v2458 = vand.u32 %v2355, 2147483648
        %v2459 = vor.u32 1.1754944e-38, %v2458
        %v2460 = vsel %vm2457, %v2459, %v2455
        %v2461 = vmul.f32 1.0, %v2460
        %v2462 = vrcp.pop %v2356
        %v2463 = vmul.f32 %v2356, %v2462
        %v2464 = vsub.f32 1.0, %v2463
        %v2465 = vmul.f32 %v2462, %v2464
        %v2466 = vadd.f32 %v2462, %v2465
        %vm2467 = vweird.f32 %v2356
        %vm2468 = vweird.f32 %v2462
        %vm2469 = vmor %vm2467, %vm2468
        %v2470 = vsel %vm2469, %v2462, %v2466
        %v2471 = vand.u32 2147483647, %v2356
        %vm2472 = vcmp.eq.f32.partialorder %v2471, 8.507059e+37
        %v2473 = vand.u32 %v2356, 2147483648
        %v2474 = vor.u32 1.1754944e-38, %v2473
        %v2475 = vsel %vm2472, %v2474, %v2470
        %v2476 = vmul.f32 1.0, %v2475
        %v2477 = vrcp.pop %v2357
        %v2478 = vmul.f32 %v2357, %v2477
        %v2479 = vsub.f32 1.0, %v2478
        %v2480 = vmul.f32 %v2477, %v2479
        %v2481 = vadd.f32 %v2477, %v2480
        %vm2482 = vweird.f32 %v2357
        %vm2483 = vweird.f32 %v2477
        %vm2484 = vmor %vm2482, %vm2483
        %v2485 = vsel %vm2484, %v2477, %v2481
        %v2486 = vand.u32 2147483647, %v2357
        %vm2487 = vcmp.eq.f32.partialorder %v2486, 8.507059e+37
        %v2488 = vand.u32 %v2357, 2147483648
        %v2489 = vor.u32 1.1754944e-38, %v2488
        %v2490 = vsel %vm2487, %v2489, %v2485
        %v2491 = vmul.f32 1.0, %v2490
        %v2492 = vrcp.pop %v2358
        %v2493 = vmul.f32 %v2358, %v2492
        %v2494 = vsub.f32 1.0, %v2493
        %v2495 = vmul.f32 %v2492, %v2494
        %v2496 = vadd.f32 %v2492, %v2495
        %vm2497 = vweird.f32 %v2358
        %vm2498 = vweird.f32 %v2492
        %vm2499 = vmor %vm2497, %vm2498
        %v2500 = vsel %vm2499, %v2492, %v2496
        %v2501 = vand.u32 2147483647, %v2358
        %vm2502 = vcmp.eq.f32.partialorder %v2501, 8.507059e+37
        %v2503 = vand.u32 %v2358, 2147483648
        %v2504 = vor.u32 1.1754944e-38, %v2503
        %v2505 = vsel %vm2502, %v2504, %v2500
        %v2506 = vmul.f32 1.0, %v2505
        %v2507 = vrcp.pop %v2359
        %v2508 = vmul.f32 %v2359, %v2507
        %v2509 = vsub.f32 1.0, %v2508
        %v2510 = vmul.f32 %v2507, %v2509
        %v2511 = vadd.f32 %v2507, %v2510
        %vm2512 = vweird.f32 %v2359
        %vm2513 = vweird.f32 %v2507
        %vm2514 = vmor %vm2512, %vm2513
        %v2515 = vsel %vm2514, %v2507, %v2511
        %v2516 = vand.u32 2147483647, %v2359
        %vm2517 = vcmp.eq.f32.partialorder %v2516, 8.507059e+37
        %v2518 = vand.u32 %v2359, 2147483648
        %v2519 = vor.u32 1.1754944e-38, %v2518
        %v2520 = vsel %vm2517, %v2519, %v2515
        %v2521 = vmul.f32 1.0, %v2520
        %v2522 = vrcp.pop %v2360
        %v2523 = vmul.f32 %v2360, %v2522
        %v2524 = vsub.f32 1.0, %v2523
        %v2525 = vmul.f32 %v2522, %v2524
        %v2526 = vadd.f32 %v2522, %v2525
        %vm2527 = vweird.f32 %v2360
        %vm2528 = vweird.f32 %v2522
        %vm2529 = vmor %vm2527, %vm2528
        %v2530 = vsel %vm2529, %v2522, %v2526
        %v2531 = vand.u32 2147483647, %v2360
        %vm2532 = vcmp.eq.f32.partialorder %v2531, 8.507059e+37
        %v2533 = vand.u32 %v2360, 2147483648
        %v2534 = vor.u32 1.1754944e-38, %v2533
        %v2535 = vsel %vm2532, %v2534, %v2530
        %v2536 = vmul.f32 1.0, %v2535
        %v2537 = vrcp.pop %v2361
        %v2538 = vmul.f32 %v2361, %v2537
        %v2539 = vsub.f32 1.0, %v2538
        %v2540 = vmul.f32 %v2537, %v2539
        %v2541 = vadd.f32 %v2537, %v2540
        %vm2542 = vweird.f32 %v2361
        %vm2543 = vweird.f32 %v2537
        %vm2544 = vmor %vm2542, %vm2543
        %v2545 = vsel %vm2544, %v2537, %v2541
        %v2546 = vand.u32 2147483647, %v2361
        %vm2547 = vcmp.eq.f32.partialorder %v2546, 8.507059e+37
        %v2548 = vand.u32 %v2361, 2147483648
        %v2549 = vor.u32 1.1754944e-38, %v2548
        %v2550 = vsel %vm2547, %v2549, %v2545
        %v2551 = vmul.f32 1.0, %v2550
        %v2552 = vrcp.pop %v2362
        %v2553 = vmul.f32 %v2362, %v2552
        %v2554 = vsub.f32 1.0, %v2553
        %v2555 = vmul.f32 %v2552, %v2554
        %v2556 = vadd.f32 %v2552, %v2555
        %vm2557 = vweird.f32 %v2362
        %vm2558 = vweird.f32 %v2552
        %vm2559 = vmor %vm2557, %vm2558
        %v2560 = vsel %vm2559, %v2552, %v2556
        %v2561 = vand.u32 2147483647, %v2362
        %vm2562 = vcmp.eq.f32.partialorder %v2561, 8.507059e+37
        %v2563 = vand.u32 %v2362, 2147483648
        %v2564 = vor.u32 1.1754944e-38, %v2563
        %v2565 = vsel %vm2562, %v2564, %v2560
        %v2566 = vmul.f32 1.0, %v2565
        %v2567 = vrcp.pop %v2363
        %v2568 = vmul.f32 %v2363, %v2567
        %v2569 = vsub.f32 1.0, %v2568
        %v2570 = vmul.f32 %v2567, %v2569
        %v2571 = vadd.f32 %v2567, %v2570
        %vm2572 = vweird.f32 %v2363
        %vm2573 = vweird.f32 %v2567
        %vm2574 = vmor %vm2572, %vm2573
        %v2575 = vsel %vm2574, %v2567, %v2571
        %v2576 = vand.u32 2147483647, %v2363
        %vm2577 = vcmp.eq.f32.partialorder %v2576, 8.507059e+37
        %v2578 = vand.u32 %v2363, 2147483648
        %v2579 = vor.u32 1.1754944e-38, %v2578
        %v2580 = vsel %vm2577, %v2579, %v2575
        %v2581 = vmul.f32 1.0, %v2580
        %v2582 = vrcp.pop %v2364
        %v2583 = vmul.f32 %v2364, %v2582
        %v2584 = vsub.f32 1.0, %v2583
        %v2585 = vmul.f32 %v2582, %v2584
        %v2586 = vadd.f32 %v2582, %v2585
        %vm2587 = vweird.f32 %v2364
        %vm2588 = vweird.f32 %v2582
        %vm2589 = vmor %vm2587, %vm2588
        %v2590 = vsel %vm2589, %v2582, %v2586
        %v2591 = vand.u32 2147483647, %v2364
        %vm2592 = vcmp.eq.f32.partialorder %v2591, 8.507059e+37
        %v2593 = vand.u32 %v2364, 2147483648
        %v2594 = vor.u32 1.1754944e-38, %v2593
        %v2595 = vsel %vm2592, %v2594, %v2590
        %v2596 = vmul.f32 1.0, %v2595
        %v2597 = vrcp.pop %v2365
        %v2598 = vmul.f32 %v2365, %v2597
        %v2599 = vsub.f32 1.0, %v2598
        %v2600 = vmul.f32 %v2597, %v2599
        %v2601 = vadd.f32 %v2597, %v2600
        %vm2602 = vweird.f32 %v2365
        %vm2603 = vweird.f32 %v2597
        %vm2604 = vmor %vm2602, %vm2603
        %v2605 = vsel %vm2604, %v2597, %v2601
        %v2606 = vand.u32 2147483647, %v2365
        %vm2607 = vcmp.eq.f32.partialorder %v2606, 8.507059e+37
        %v2608 = vand.u32 %v2365, 2147483648
        %v2609 = vor.u32 1.1754944e-38, %v2608
        %v2610 = vsel %vm2607, %v2609, %v2605
        %v2611 = vmul.f32 1.0, %v2610
        %v2612 = vrcp.pop %v2366
        %v2613 = vmul.f32 %v2366, %v2612
        %v2614 = vsub.f32 1.0, %v2613
        %v2615 = vmul.f32 %v2612, %v2614
        %v2616 = vadd.f32 %v2612, %v2615
        %vm2617 = vweird.f32 %v2366
        %vm2618 = vweird.f32 %v2612
        %vm2619 = vmor %vm2617, %vm2618
        %v2620 = vsel %vm2619, %v2612, %v2616
        %v2621 = vand.u32 2147483647, %v2366
        %vm2622 = vcmp.eq.f32.partialorder %v2621, 8.507059e+37
        %v2623 = vand.u32 %v2366, 2147483648
        %v2624 = vor.u32 1.1754944e-38, %v2623
        %v2625 = vsel %vm2622, %v2624, %v2620
        %v2626 = vmul.f32 1.0, %v2625
        %v2627 = vrcp.pop %v2367
        %v2628 = vmul.f32 %v2367, %v2627
        %v2629 = vsub.f32 1.0, %v2628
        %v2630 = vmul.f32 %v2627, %v2629
        %v2631 = vadd.f32 %v2627, %v2630
        %vm2632 = vweird.f32 %v2367
        %vm2633 = vweird.f32 %v2627
        %vm2634 = vmor %vm2632, %vm2633
        %v2635 = vsel %vm2634, %v2627, %v2631
        %v2636 = vand.u32 2147483647, %v2367
        %vm2637 = vcmp.eq.f32.partialorder %v2636, 8.507059e+37
        %v2638 = vand.u32 %v2367, 2147483648
        %v2639 = vor.u32 1.1754944e-38, %v2638
        %v2640 = vsel %vm2637, %v2639, %v2635
        %v2641 = vmul.f32 1.0, %v2640
        %v2642 = vrcp.pop %v2368
        %v2643 = vmul.f32 %v2368, %v2642
        %v2644 = vsub.f32 1.0, %v2643
        %v2645 = vmul.f32 %v2642, %v2644
        %v2646 = vadd.f32 %v2642, %v2645
        %vm2647 = vweird.f32 %v2368
        %vm2648 = vweird.f32 %v2642
        %vm2649 = vmor %vm2647, %vm2648
        %v2650 = vsel %vm2649, %v2642, %v2646
        %v2651 = vand.u32 2147483647, %v2368
        %vm2652 = vcmp.eq.f32.partialorder %v2651, 8.507059e+37
        %v2653 = vand.u32 %v2368, 2147483648
        %v2654 = vor.u32 1.1754944e-38, %v2653
        %v2655 = vsel %vm2652, %v2654, %v2650
        %v2656 = vmul.f32 1.0, %v2655
        %v2657 = vrcp.pop %v2369
        %v2658 = vmul.f32 %v2369, %v2657
        %v2659 = vsub.f32 1.0, %v2658
        %v2660 = vmul.f32 %v2657, %v2659
        %v2661 = vadd.f32 %v2657, %v2660
        %vm2662 = vweird.f32 %v2369
        %vm2663 = vweird.f32 %v2657
        %vm2664 = vmor %vm2662, %vm2663
        %v2665 = vsel %vm2664, %v2657, %v2661
        %v2666 = vand.u32 2147483647, %v2369
        %vm2667 = vcmp.eq.f32.partialorder %v2666, 8.507059e+37
        %v2668 = vand.u32 %v2369, 2147483648
        %v2669 = vor.u32 1.1754944e-38, %v2668
        %v2670 = vsel %vm2667, %v2669, %v2665
        %v2671 = vmul.f32 1.0, %v2670
        %v2672 = vrcp.pop %v2370
        %v2673 = vmul.f32 %v2370, %v2672
        %v2674 = vsub.f32 1.0, %v2673
        %v2675 = vmul.f32 %v2672, %v2674
        %v2676 = vadd.f32 %v2672, %v2675
        %vm2677 = vweird.f32 %v2370
        %vm2678 = vweird.f32 %v2672
        %vm2679 = vmor %vm2677, %vm2678
        %v2680 = vsel %vm2679, %v2672, %v2676
        %v2681 = vand.u32 2147483647, %v2370
        %vm2682 = vcmp.eq.f32.partialorder %v2681, 8.507059e+37
        %v2683 = vand.u32 %v2370, 2147483648
        %v2684 = vor.u32 1.1754944e-38, %v2683
        %v2685 = vsel %vm2682, %v2684, %v2680
        %v2686 = vmul.f32 1.0, %v2685
        %v2687 = vrcp.pop %v2371
        %v2688 = vmul.f32 %v2371, %v2687
        %v2689 = vsub.f32 1.0, %v2688
        %v2690 = vmul.f32 %v2687, %v2689
        %v2691 = vadd.f32 %v2687, %v2690
        %vm2692 = vweird.f32 %v2371
        %vm2693 = vweird.f32 %v2687
        %vm2694 = vmor %vm2692, %vm2693
        %v2695 = vsel %vm2694, %v2687, %v2691
        %v2696 = vand.u32 2147483647, %v2371
        %vm2697 = vcmp.eq.f32.partialorder %v2696, 8.507059e+37
        %v2698 = vand.u32 %v2371, 2147483648
        %v2699 = vor.u32 1.1754944e-38, %v2698
        %v2700 = vsel %vm2697, %v2699, %v2695
        %v2701 = vmul.f32 1.0, %v2700
        %v2702 = vrcp.pop %v2372
        %v2703 = vmul.f32 %v2372, %v2702
        %v2704 = vsub.f32 1.0, %v2703
        %v2705 = vmul.f32 %v2702, %v2704
        %v2706 = vadd.f32 %v2702, %v2705
        %vm2707 = vweird.f32 %v2372
        %vm2708 = vweird.f32 %v2702
        %vm2709 = vmor %vm2707, %vm2708
        %v2710 = vsel %vm2709, %v2702, %v2706
        %v2711 = vand.u32 2147483647, %v2372
        %vm2712 = vcmp.eq.f32.partialorder %v2711, 8.507059e+37
        %v2713 = vand.u32 %v2372, 2147483648
        %v2714 = vor.u32 1.1754944e-38, %v2713
        %v2715 = vsel %vm2712, %v2714, %v2710
        %v2716 = vmul.f32 1.0, %v2715
        %v2717 = vrcp.pop %v2373
        %v2718 = vmul.f32 %v2373, %v2717
        %v2719 = vsub.f32 1.0, %v2718
        %v2720 = vmul.f32 %v2717, %v2719
        %v2721 = vadd.f32 %v2717, %v2720
        %vm2722 = vweird.f32 %v2373
        %vm2723 = vweird.f32 %v2717
        %vm2724 = vmor %vm2722, %vm2723
        %v2725 = vsel %vm2724, %v2717, %v2721
        %v2726 = vand.u32 2147483647, %v2373
        %vm2727 = vcmp.eq.f32.partialorder %v2726, 8.507059e+37
        %v2728 = vand.u32 %v2373, 2147483648
        %v2729 = vor.u32 1.1754944e-38, %v2728
        %v2730 = vsel %vm2727, %v2729, %v2725
        %v2731 = vmul.f32 1.0, %v2730
        %v2732 = vrcp.pop %v2374
        %v2733 = vmul.f32 %v2374, %v2732
        %v2734 = vsub.f32 1.0, %v2733
        %v2735 = vmul.f32 %v2732, %v2734
        %v2736 = vadd.f32 %v2732, %v2735
        %vm2737 = vweird.f32 %v2374
        %vm2738 = vweird.f32 %v2732
        %vm2739 = vmor %vm2737, %vm2738
        %v2740 = vsel %vm2739, %v2732, %v2736
        %v2741 = vand.u32 2147483647, %v2374
        %vm2742 = vcmp.eq.f32.partialorder %v2741, 8.507059e+37
        %v2743 = vand.u32 %v2374, 2147483648
        %v2744 = vor.u32 1.1754944e-38, %v2743
        %v2745 = vsel %vm2742, %v2744, %v2740
        %v2746 = vmul.f32 1.0, %v2745
        %v2747 = vrcp.pop %v2375
        %v2748 = vmul.f32 %v2375, %v2747
        %v2749 = vsub.f32 1.0, %v2748
        %v2750 = vmul.f32 %v2747, %v2749
        %v2751 = vadd.f32 %v2747, %v2750
        %vm2752 = vweird.f32 %v2375
        %vm2753 = vweird.f32 %v2747
        %vm2754 = vmor %vm2752, %vm2753
        %v2755 = vsel %vm2754, %v2747, %v2751
        %v2756 = vand.u32 2147483647, %v2375
        %vm2757 = vcmp.eq.f32.partialorder %v2756, 8.507059e+37
        %v2758 = vand.u32 %v2375, 2147483648
        %v2759 = vor.u32 1.1754944e-38, %v2758
        %v2760 = vsel %vm2757, %v2759, %v2755
        %v2761 = vmul.f32 1.0, %v2760
        %v2762 = vrcp.pop %v2376
        %v2763 = vmul.f32 %v2376, %v2762
        %v2764 = vsub.f32 1.0, %v2763
        %v2765 = vmul.f32 %v2762, %v2764
        %v2766 = vadd.f32 %v2762, %v2765
        %vm2767 = vweird.f32 %v2376
        %vm2768 = vweird.f32 %v2762
        %vm2769 = vmor %vm2767, %vm2768
        %v2770 = vsel %vm2769, %v2762, %v2766
        %v2771 = vand.u32 2147483647, %v2376
        %vm2772 = vcmp.eq.f32.partialorder %v2771, 8.507059e+37
        %v2773 = vand.u32 %v2376, 2147483648
        %v2774 = vor.u32 1.1754944e-38, %v2773
        %v2775 = vsel %vm2772, %v2774, %v2770
        %v2776 = vmul.f32 1.0, %v2775
        %v2777 = vrcp.pop %v2377
        %v2778 = vmul.f32 %v2377, %v2777
        %v2779 = vsub.f32 1.0, %v2778
        %v2780 = vmul.f32 %v2777, %v2779
        %v2781 = vadd.f32 %v2777, %v2780
        %vm2782 = vweird.f32 %v2377
        %vm2783 = vweird.f32 %v2777
        %vm2784 = vmor %vm2782, %vm2783
        %v2785 = vsel %vm2784, %v2777, %v2781
        %v2786 = vand.u32 2147483647, %v2377
        %vm2787 = vcmp.eq.f32.partialorder %v2786, 8.507059e+37
        %v2788 = vand.u32 %v2377, 2147483648
        %v2789 = vor.u32 1.1754944e-38, %v2788
        %v2790 = vsel %vm2787, %v2789, %v2785
        %v2791 = vmul.f32 1.0, %v2790
        %v2792 = vrcp.pop %v2378
        %v2793 = vmul.f32 %v2378, %v2792
        %v2794 = vsub.f32 1.0, %v2793
        %v2795 = vmul.f32 %v2792, %v2794
        %v2796 = vadd.f32 %v2792, %v2795
        %vm2797 = vweird.f32 %v2378
        %vm2798 = vweird.f32 %v2792
        %vm2799 = vmor %vm2797, %vm2798
        %v2800 = vsel %vm2799, %v2792, %v2796
        %v2801 = vand.u32 2147483647, %v2378
        %vm2802 = vcmp.eq.f32.partialorder %v2801, 8.507059e+37
        %v2803 = vand.u32 %v2378, 2147483648
        %v2804 = vor.u32 1.1754944e-38, %v2803
        %v2805 = vsel %vm2802, %v2804, %v2800
        %v2806 = vmul.f32 1.0, %v2805
        %v2807 = vrcp.pop %v2379
        %v2808 = vmul.f32 %v2379, %v2807
        %v2809 = vsub.f32 1.0, %v2808
        %v2810 = vmul.f32 %v2807, %v2809
        %v2811 = vadd.f32 %v2807, %v2810
        %vm2812 = vweird.f32 %v2379
        %vm2813 = vweird.f32 %v2807
        %vm2814 = vmor %vm2812, %vm2813
        %v2815 = vsel %vm2814, %v2807, %v2811
        %v2816 = vand.u32 2147483647, %v2379
        %vm2817 = vcmp.eq.f32.partialorder %v2816, 8.507059e+37
        %v2818 = vand.u32 %v2379, 2147483648
        %v2819 = vor.u32 1.1754944e-38, %v2818
        %v2820 = vsel %vm2817, %v2819, %v2815
        %v2821 = vmul.f32 1.0, %v2820
        %v2822 = vrcp.pop %v2380
        %v2823 = vmul.f32 %v2380, %v2822
        %v2824 = vsub.f32 1.0, %v2823
        %v2825 = vmul.f32 %v2822, %v2824
        %v2826 = vadd.f32 %v2822, %v2825
        %vm2827 = vweird.f32 %v2380
        %vm2828 = vweird.f32 %v2822
        %vm2829 = vmor %vm2827, %vm2828
        %v2830 = vsel %vm2829, %v2822, %v2826
        %v2831 = vand.u32 2147483647, %v2380
        %vm2832 = vcmp.eq.f32.partialorder %v2831, 8.507059e+37
        %v2833 = vand.u32 %v2380, 2147483648
        %v2834 = vor.u32 1.1754944e-38, %v2833
        %v2835 = vsel %vm2832, %v2834, %v2830
        %v2836 = vmul.f32 1.0, %v2835
        %v2837 = vrcp.pop %v2381
        %v2838 = vmul.f32 %v2381, %v2837
        %v2839 = vsub.f32 1.0, %v2838
        %v2840 = vmul.f32 %v2837, %v2839
        %v2841 = vadd.f32 %v2837, %v2840
        %vm2842 = vweird.f32 %v2381
        %vm2843 = vweird.f32 %v2837
        %vm2844 = vmor %vm2842, %vm2843
        %v2845 = vsel %vm2844, %v2837, %v2841
        %v2846 = vand.u32 2147483647, %v2381
        %vm2847 = vcmp.eq.f32.partialorder %v2846, 8.507059e+37
        %v2848 = vand.u32 %v2381, 2147483648
        %v2849 = vor.u32 1.1754944e-38, %v2848
        %v2850 = vsel %vm2847, %v2849, %v2845
        %v2851 = vmul.f32 1.0, %v2850
        %v2852 = vrcp.pop %v2382
        %v2853 = vmul.f32 %v2382, %v2852
        %v2854 = vsub.f32 1.0, %v2853
        %v2855 = vmul.f32 %v2852, %v2854
        %v2856 = vadd.f32 %v2852, %v2855
        %vm2857 = vweird.f32 %v2382
        %vm2858 = vweird.f32 %v2852
        %vm2859 = vmor %vm2857, %vm2858
        %v2860 = vsel %vm2859, %v2852, %v2856
        %v2861 = vand.u32 2147483647, %v2382
        %vm2862 = vcmp.eq.f32.partialorder %v2861, 8.507059e+37
        %v2863 = vand.u32 %v2382, 2147483648
        %v2864 = vor.u32 1.1754944e-38, %v2863
        %v2865 = vsel %vm2862, %v2864, %v2860
        %v2866 = vmul.f32 1.0, %v2865
        %v2867 = vrcp.pop %v2383
        %v2868 = vmul.f32 %v2383, %v2867
        %v2869 = vsub.f32 1.0, %v2868
        %v2870 = vmul.f32 %v2867, %v2869
        %v2871 = vadd.f32 %v2867, %v2870
        %vm2872 = vweird.f32 %v2383
        %vm2873 = vweird.f32 %v2867
        %vm2874 = vmor %vm2872, %vm2873
        %v2875 = vsel %vm2874, %v2867, %v2871
        %v2876 = vand.u32 2147483647, %v2383
        %vm2877 = vcmp.eq.f32.partialorder %v2876, 8.507059e+37
        %v2878 = vand.u32 %v2383, 2147483648
        %v2879 = vor.u32 1.1754944e-38, %v2878
        %v2880 = vsel %vm2877, %v2879, %v2875
        %v2881 = vmul.f32 1.0, %v2880
        %v2882 = vrcp.pop %v2384
        %v2883 = vmul.f32 %v2384, %v2882
        %v2884 = vsub.f32 1.0, %v2883
        %v2885 = vmul.f32 %v2882, %v2884
        %v2886 = vadd.f32 %v2882, %v2885
        %vm2887 = vweird.f32 %v2384
        %vm2888 = vweird.f32 %v2882
        %vm2889 = vmor %vm2887, %vm2888
        %v2890 = vsel %vm2889, %v2882, %v2886
        %v2891 = vand.u32 2147483647, %v2384
        %vm2892 = vcmp.eq.f32.partialorder %v2891, 8.507059e+37
        %v2893 = vand.u32 %v2384, 2147483648
        %v2894 = vor.u32 1.1754944e-38, %v2893
        %v2895 = vsel %vm2892, %v2894, %v2890
        %v2896 = vmul.f32 1.0, %v2895
        %v2897 = vrcp.pop %v2385
        %v2898 = vmul.f32 %v2385, %v2897
        %v2899 = vsub.f32 1.0, %v2898
        %v2900 = vmul.f32 %v2897, %v2899
        %v2901 = vadd.f32 %v2897, %v2900
        %vm2902 = vweird.f32 %v2385
        %vm2903 = vweird.f32 %v2897
        %vm2904 = vmor %vm2902, %vm2903
        %v2905 = vsel %vm2904, %v2897, %v2901
        %v2906 = vand.u32 2147483647, %v2385
        %vm2907 = vcmp.eq.f32.partialorder %v2906, 8.507059e+37
        %v2908 = vand.u32 %v2385, 2147483648
        %v2909 = vor.u32 1.1754944e-38, %v2908
        %v2910 = vsel %vm2907, %v2909, %v2905
        %v2911 = vmul.f32 1.0, %v2910
        %v2912 = vrcp.pop %v2386
        %v2913 = vmul.f32 %v2386, %v2912
        %v2914 = vsub.f32 1.0, %v2913
        %v2915 = vmul.f32 %v2912, %v2914
        %v2916 = vadd.f32 %v2912, %v2915
        %vm2917 = vweird.f32 %v2386
        %vm2918 = vweird.f32 %v2912
        %vm2919 = vmor %vm2917, %vm2918
        %v2920 = vsel %vm2919, %v2912, %v2916
        %v2921 = vand.u32 2147483647, %v2386
        %vm2922 = vcmp.eq.f32.partialorder %v2921, 8.507059e+37
        %v2923 = vand.u32 %v2386, 2147483648
        %v2924 = vor.u32 1.1754944e-38, %v2923
        %v2925 = vsel %vm2922, %v2924, %v2920
        %v2926 = vmul.f32 1.0, %v2925
        %v2927 = vrcp.pop %v2387
        %v2928 = vmul.f32 %v2387, %v2927
        %v2929 = vsub.f32 1.0, %v2928
        %v2930 = vmul.f32 %v2927, %v2929
        %v2931 = vadd.f32 %v2927, %v2930
        %vm2932 = vweird.f32 %v2387
        %vm2933 = vweird.f32 %v2927
        %vm2934 = vmor %vm2932, %vm2933
        %v2935 = vsel %vm2934, %v2927, %v2931
        %v2936 = vand.u32 2147483647, %v2387
        %vm2937 = vcmp.eq.f32.partialorder %v2936, 8.507059e+37
        %v2938 = vand.u32 %v2387, 2147483648
        %v2939 = vor.u32 1.1754944e-38, %v2938
        %v2940 = vsel %vm2937, %v2939, %v2935
        %v2941 = vmul.f32 1.0, %v2940
        %v2942 = vrcp.pop %v2388
        %v2943 = vmul.f32 %v2388, %v2942
        %v2944 = vsub.f32 1.0, %v2943
        %v2945 = vmul.f32 %v2942, %v2944
        %v2946 = vadd.f32 %v2942, %v2945
        %vm2947 = vweird.f32 %v2388
        %vm2948 = vweird.f32 %v2942
        %vm2949 = vmor %vm2947, %vm2948
        %v2950 = vsel %vm2949, %v2942, %v2946
        %v2951 = vand.u32 2147483647, %v2388
        %vm2952 = vcmp.eq.f32.partialorder %v2951, 8.507059e+37
        %v2953 = vand.u32 %v2388, 2147483648
        %v2954 = vor.u32 1.1754944e-38, %v2953
        %v2955 = vsel %vm2952, %v2954, %v2950
        %v2956 = vmul.f32 1.0, %v2955
        %v2957 = vrcp.pop %v2389
        %v2958 = vmul.f32 %v2389, %v2957
        %v2959 = vsub.f32 1.0, %v2958
        %v2960 = vmul.f32 %v2957, %v2959
        %v2961 = vadd.f32 %v2957, %v2960
        %vm2962 = vweird.f32 %v2389
        %vm2963 = vweird.f32 %v2957
        %vm2964 = vmor %vm2962, %vm2963
        %v2965 = vsel %vm2964, %v2957, %v2961
        %v2966 = vand.u32 2147483647, %v2389
        %vm2967 = vcmp.eq.f32.partialorder %v2966, 8.507059e+37
        %v2968 = vand.u32 %v2389, 2147483648
        %v2969 = vor.u32 1.1754944e-38, %v2968
        %v2970 = vsel %vm2967, %v2969, %v2965
        %v2971 = vmul.f32 1.0, %v2970
        %v2972 = vrcp.pop %v2390
        %v2973 = vmul.f32 %v2390, %v2972
        %v2974 = vsub.f32 1.0, %v2973
        %v2975 = vmul.f32 %v2972, %v2974
        %v2976 = vadd.f32 %v2972, %v2975
        %vm2977 = vweird.f32 %v2390
        %vm2978 = vweird.f32 %v2972
        %vm2979 = vmor %vm2977, %vm2978
        %v2980 = vsel %vm2979, %v2972, %v2976
        %v2981 = vand.u32 2147483647, %v2390
        %vm2982 = vcmp.eq.f32.partialorder %v2981, 8.507059e+37
        %v2983 = vand.u32 %v2390, 2147483648
        %v2984 = vor.u32 1.1754944e-38, %v2983
        %v2985 = vsel %vm2982, %v2984, %v2980
        %v2986 = vmul.f32 1.0, %v2985
        %v2987 = vrcp.pop %v2391
        %v2988 = vmul.f32 %v2391, %v2987
        %v2989 = vsub.f32 1.0, %v2988
        %v2990 = vmul.f32 %v2987, %v2989
        %v2991 = vadd.f32 %v2987, %v2990
        %vm2992 = vweird.f32 %v2391
        %vm2993 = vweird.f32 %v2987
        %vm2994 = vmor %vm2992, %vm2993
        %v2995 = vsel %vm2994, %v2987, %v2991
        %v2996 = vand.u32 2147483647, %v2391
        %vm2997 = vcmp.eq.f32.partialorder %v2996, 8.507059e+37
        %v2998 = vand.u32 %v2391, 2147483648
        %v2999 = vor.u32 1.1754944e-38, %v2998
        %v3000 = vsel %vm2997, %v2999, %v2995
        %v3001 = vmul.f32 1.0, %v3000
        %v3002 = vrcp.pop %v2392
        %v3003 = vmul.f32 %v2392, %v3002
        %v3004 = vsub.f32 1.0, %v3003
        %v3005 = vmul.f32 %v3002, %v3004
        %v3006 = vadd.f32 %v3002, %v3005
        %vm3007 = vweird.f32 %v2392
        %vm3008 = vweird.f32 %v3002
        %vm3009 = vmor %vm3007, %vm3008
        %v3010 = vsel %vm3009, %v3002, %v3006
        %v3011 = vand.u32 2147483647, %v2392
        %vm3012 = vcmp.eq.f32.partialorder %v3011, 8.507059e+37
        %v3013 = vand.u32 %v2392, 2147483648
        %v3014 = vor.u32 1.1754944e-38, %v3013
        %v3015 = vsel %vm3012, %v3014, %v3010
        %v3016 = vmul.f32 1.0, %v3015
        %v3017 = vrcp.pop %v2393
        %v3018 = vmul.f32 %v2393, %v3017
        %v3019 = vsub.f32 1.0, %v3018
        %v3020 = vmul.f32 %v3017, %v3019
        %v3021 = vadd.f32 %v3017, %v3020
        %vm3022 = vweird.f32 %v2393
        %vm3023 = vweird.f32 %v3017
        %vm3024 = vmor %vm3022, %vm3023
        %v3025 = vsel %vm3024, %v3017, %v3021
        %v3026 = vand.u32 2147483647, %v2393
        %vm3027 = vcmp.eq.f32.partialorder %v3026, 8.507059e+37
        %v3028 = vand.u32 %v2393, 2147483648
        %v3029 = vor.u32 1.1754944e-38, %v3028
        %v3030 = vsel %vm3027, %v3029, %v3025
        %v3031 = vmul.f32 1.0, %v3030
        %v3032 = vrcp.pop %v2394
        %v3033 = vmul.f32 %v2394, %v3032
        %v3034 = vsub.f32 1.0, %v3033
        %v3035 = vmul.f32 %v3032, %v3034
        %v3036 = vadd.f32 %v3032, %v3035
        %vm3037 = vweird.f32 %v2394
        %vm3038 = vweird.f32 %v3032
        %vm3039 = vmor %vm3037, %vm3038
        %v3040 = vsel %vm3039, %v3032, %v3036
        %v3041 = vand.u32 2147483647, %v2394
        %vm3042 = vcmp.eq.f32.partialorder %v3041, 8.507059e+37
        %v3043 = vand.u32 %v2394, 2147483648
        %v3044 = vor.u32 1.1754944e-38, %v3043
        %v3045 = vsel %vm3042, %v3044, %v3040
        %v3046 = vmul.f32 1.0, %v3045
        %v3047 = vrcp.pop %v2395
        %v3048 = vmul.f32 %v2395, %v3047
        %v3049 = vsub.f32 1.0, %v3048
        %v3050 = vmul.f32 %v3047, %v3049
        %v3051 = vadd.f32 %v3047, %v3050
        %vm3052 = vweird.f32 %v2395
        %vm3053 = vweird.f32 %v3047
        %vm3054 = vmor %vm3052, %vm3053
        %v3055 = vsel %vm3054, %v3047, %v3051
        %v3056 = vand.u32 2147483647, %v2395
        %vm3057 = vcmp.eq.f32.partialorder %v3056, 8.507059e+37
        %v3058 = vand.u32 %v2395, 2147483648
        %v3059 = vor.u32 1.1754944e-38, %v3058
        %v3060 = vsel %vm3057, %v3059, %v3055
        %v3061 = vmul.f32 1.0, %v3060
        %v3062 = vrcp.pop %v2396
        %v3063 = vmul.f32 %v2396, %v3062
        %v3064 = vsub.f32 1.0, %v3063
        %v3065 = vmul.f32 %v3062, %v3064
        %v3066 = vadd.f32 %v3062, %v3065
        %vm3067 = vweird.f32 %v2396
        %vm3068 = vweird.f32 %v3062
        %vm3069 = vmor %vm3067, %vm3068
        %v3070 = vsel %vm3069, %v3062, %v3066
        %v3071 = vand.u32 2147483647, %v2396
        %vm3072 = vcmp.eq.f32.partialorder %v3071, 8.507059e+37
        %v3073 = vand.u32 %v2396, 2147483648
        %v3074 = vor.u32 1.1754944e-38, %v3073
        %v3075 = vsel %vm3072, %v3074, %v3070
        %v3076 = vmul.f32 1.0, %v3075
        %v3077 = vrcp.pop %v2397
        %v3078 = vmul.f32 %v2397, %v3077
        %v3079 = vsub.f32 1.0, %v3078
        %v3080 = vmul.f32 %v3077, %v3079
        %v3081 = vadd.f32 %v3077, %v3080
        %vm3082 = vweird.f32 %v2397
        %vm3083 = vweird.f32 %v3077
        %vm3084 = vmor %vm3082, %vm3083
        %v3085 = vsel %vm3084, %v3077, %v3081
        %v3086 = vand.u32 2147483647, %v2397
        %vm3087 = vcmp.eq.f32.partialorder %v3086, 8.507059e+37
        %v3088 = vand.u32 %v2397, 2147483648
        %v3089 = vor.u32 1.1754944e-38, %v3088
        %v3090 = vsel %vm3087, %v3089, %v3085
        %v3091 = vmul.f32 1.0, %v3090
        %v3092 = vrcp.pop %v2398
        %v3093 = vmul.f32 %v2398, %v3092
        %v3094 = vsub.f32 1.0, %v3093
        %v3095 = vmul.f32 %v3092, %v3094
        %v3096 = vadd.f32 %v3092, %v3095
        %vm3097 = vweird.f32 %v2398
        %vm3098 = vweird.f32 %v3092
        %vm3099 = vmor %vm3097, %vm3098
        %v3100 = vsel %vm3099, %v3092, %v3096
        %v3101 = vand.u32 2147483647, %v2398
        %vm3102 = vcmp.eq.f32.partialorder %v3101, 8.507059e+37
        %v3103 = vand.u32 %v2398, 2147483648
        %v3104 = vor.u32 1.1754944e-38, %v3103
        %v3105 = vsel %vm3102, %v3104, %v3100
        %v3106 = vmul.f32 1.0, %v3105
        %v3107 = vrcp.pop %v2399
        %v3108 = vmul.f32 %v2399, %v3107
        %v3109 = vsub.f32 1.0, %v3108
        %v3110 = vmul.f32 %v3107, %v3109
        %v3111 = vadd.f32 %v3107, %v3110
        %vm3112 = vweird.f32 %v2399
        %vm3113 = vweird.f32 %v3107
        %vm3114 = vmor %vm3112, %vm3113
        %v3115 = vsel %vm3114, %v3107, %v3111
        %v3116 = vand.u32 2147483647, %v2399
        %vm3117 = vcmp.eq.f32.partialorder %v3116, 8.507059e+37
        %v3118 = vand.u32 %v2399, 2147483648
        %v3119 = vor.u32 1.1754944e-38, %v3118
        %v3120 = vsel %vm3117, %v3119, %v3115
        %v3121 = vmul.f32 1.0, %v3120
        %v3122 = vrcp.pop %v2400
        %v3123 = vmul.f32 %v2400, %v3122
        %v3124 = vsub.f32 1.0, %v3123
        %v3125 = vmul.f32 %v3122, %v3124
        %v3126 = vadd.f32 %v3122, %v3125
        %vm3127 = vweird.f32 %v2400
        %vm3128 = vweird.f32 %v3122
        %vm3129 = vmor %vm3127, %vm3128
        %v3130 = vsel %vm3129, %v3122, %v3126
        %v3131 = vand.u32 2147483647, %v2400
        %vm3132 = vcmp.eq.f32.partialorder %v3131, 8.507059e+37
        %v3133 = vand.u32 %v2400, 2147483648
        %v3134 = vor.u32 1.1754944e-38, %v3133
        %v3135 = vsel %vm3132, %v3134, %v3130
        %v3136 = vmul.f32 1.0, %v3135
        %v3137 = vrcp.pop %v2401
        %v3138 = vmul.f32 %v2401, %v3137
        %v3139 = vsub.f32 1.0, %v3138
        %v3140 = vmul.f32 %v3137, %v3139
        %v3141 = vadd.f32 %v3137, %v3140
        %vm3142 = vweird.f32 %v2401
        %vm3143 = vweird.f32 %v3137
        %vm3144 = vmor %vm3142, %vm3143
        %v3145 = vsel %vm3144, %v3137, %v3141
        %v3146 = vand.u32 2147483647, %v2401
        %vm3147 = vcmp.eq.f32.partialorder %v3146, 8.507059e+37
        %v3148 = vand.u32 %v2401, 2147483648
        %v3149 = vor.u32 1.1754944e-38, %v3148
        %v3150 = vsel %vm3147, %v3149, %v3145
        %v3151 = vmul.f32 1.0, %v3150
        %v3152 = vrcp.pop %v2402
        %v3153 = vmul.f32 %v2402, %v3152
        %v3154 = vsub.f32 1.0, %v3153
        %v3155 = vmul.f32 %v3152, %v3154
        %v3156 = vadd.f32 %v3152, %v3155
        %vm3157 = vweird.f32 %v2402
        %vm3158 = vweird.f32 %v3152
        %vm3159 = vmor %vm3157, %vm3158
        %v3160 = vsel %vm3159, %v3152, %v3156
        %v3161 = vand.u32 2147483647, %v2402
        %vm3162 = vcmp.eq.f32.partialorder %v3161, 8.507059e+37
        %v3163 = vand.u32 %v2402, 2147483648
        %v3164 = vor.u32 1.1754944e-38, %v3163
        %v3165 = vsel %vm3162, %v3164, %v3160
        %v3166 = vmul.f32 1.0, %v3165
        %v3167 = vrcp.pop %v2403
        %v3168 = vmul.f32 %v2403, %v3167
        %v3169 = vsub.f32 1.0, %v3168
        %v3170 = vmul.f32 %v3167, %v3169
        %v3171 = vadd.f32 %v3167, %v3170
        %vm3172 = vweird.f32 %v2403
        %vm3173 = vweird.f32 %v3167
        %vm3174 = vmor %vm3172, %vm3173
        %v3175 = vsel %vm3174, %v3167, %v3171
        %v3176 = vand.u32 2147483647, %v2403
        %vm3177 = vcmp.eq.f32.partialorder %v3176, 8.507059e+37
        %v3178 = vand.u32 %v2403, 2147483648
        %v3179 = vor.u32 1.1754944e-38, %v3178
        %v3180 = vsel %vm3177, %v3179, %v3175
        %v3181 = vmul.f32 1.0, %v3180
        %v3182 = vrcp.pop %v2404
        %v3183 = vmul.f32 %v2404, %v3182
        %v3184 = vsub.f32 1.0, %v3183
        %v3185 = vmul.f32 %v3182, %v3184
        %v3186 = vadd.f32 %v3182, %v3185
        %vm3187 = vweird.f32 %v2404
        %vm3188 = vweird.f32 %v3182
        %vm3189 = vmor %vm3187, %vm3188
        %v3190 = vsel %vm3189, %v3182, %v3186
        %v3191 = vand.u32 2147483647, %v2404
        %vm3192 = vcmp.eq.f32.partialorder %v3191, 8.507059e+37
        %v3193 = vand.u32 %v2404, 2147483648
        %v3194 = vor.u32 1.1754944e-38, %v3193
        %v3195 = vsel %vm3192, %v3194, %v3190
        %v3196 = vmul.f32 1.0, %v3195
        %v3197 = vrcp.pop %v2405
        %v3198 = vmul.f32 %v2405, %v3197
        %v3199 = vsub.f32 1.0, %v3198
        %v3200 = vmul.f32 %v3197, %v3199
        %v3201 = vadd.f32 %v3197, %v3200
        %vm3202 = vweird.f32 %v2405
        %vm3203 = vweird.f32 %v3197
        %vm3204 = vmor %vm3202, %vm3203
        %v3205 = vsel %vm3204, %v3197, %v3201
        %v3206 = vand.u32 2147483647, %v2405
        %vm3207 = vcmp.eq.f32.partialorder %v3206, 8.507059e+37
        %v3208 = vand.u32 %v2405, 2147483648
        %v3209 = vor.u32 1.1754944e-38, %v3208
        %v3210 = vsel %vm3207, %v3209, %v3205
        %v3211 = vmul.f32 1.0, %v3210
        %v3212 = vrcp.pop %v2406
        %v3213 = vmul.f32 %v2406, %v3212
        %v3214 = vsub.f32 1.0, %v3213
        %v3215 = vmul.f32 %v3212, %v3214
        %v3216 = vadd.f32 %v3212, %v3215
        %vm3217 = vweird.f32 %v2406
        %vm3218 = vweird.f32 %v3212
        %vm3219 = vmor %vm3217, %vm3218
        %v3220 = vsel %vm3219, %v3212, %v3216
        %v3221 = vand.u32 2147483647, %v2406
        %vm3222 = vcmp.eq.f32.partialorder %v3221, 8.507059e+37
        %v3223 = vand.u32 %v2406, 2147483648
        %v3224 = vor.u32 1.1754944e-38, %v3223
        %v3225 = vsel %vm3222, %v3224, %v3220
        %v3226 = vmul.f32 1.0, %v3225
        %v3227 = vrcp.pop %v2407
        %v3228 = vmul.f32 %v2407, %v3227
        %v3229 = vsub.f32 1.0, %v3228
        %v3230 = vmul.f32 %v3227, %v3229
        %v3231 = vadd.f32 %v3227, %v3230
        %vm3232 = vweird.f32 %v2407
        %vm3233 = vweird.f32 %v3227
        %vm3234 = vmor %vm3232, %vm3233
        %v3235 = vsel %vm3234, %v3227, %v3231
        %v3236 = vand.u32 2147483647, %v2407
        %vm3237 = vcmp.eq.f32.partialorder %v3236, 8.507059e+37
        %v3238 = vand.u32 %v2407, 2147483648
        %v3239 = vor.u32 1.1754944e-38, %v3238
        %v3240 = vsel %vm3237, %v3239, %v3235
        %v3241 = vmul.f32 1.0, %v3240
        %v3242 = vrcp.pop %v2408
        %v3243 = vmul.f32 %v2408, %v3242
        %v3244 = vsub.f32 1.0, %v3243
        %v3245 = vmul.f32 %v3242, %v3244
        %v3246 = vadd.f32 %v3242, %v3245
        %vm3247 = vweird.f32 %v2408
        %vm3248 = vweird.f32 %v3242
        %vm3249 = vmor %vm3247, %vm3248
        %v3250 = vsel %vm3249, %v3242, %v3246
        %v3251 = vand.u32 2147483647, %v2408
        %vm3252 = vcmp.eq.f32.partialorder %v3251, 8.507059e+37
        %v3253 = vand.u32 %v2408, 2147483648
        %v3254 = vor.u32 1.1754944e-38, %v3253
        %v3255 = vsel %vm3252, %v3254, %v3250
        %v3256 = vmul.f32 1.0, %v3255
        %v3257 = vrcp.pop %v2409
        %v3258 = vmul.f32 %v2409, %v3257
        %v3259 = vsub.f32 1.0, %v3258
        %v3260 = vmul.f32 %v3257, %v3259
        %v3261 = vadd.f32 %v3257, %v3260
        %vm3262 = vweird.f32 %v2409
        %vm3263 = vweird.f32 %v3257
        %vm3264 = vmor %vm3262, %vm3263
        %v3265 = vsel %vm3264, %v3257, %v3261
        %v3266 = vand.u32 2147483647, %v2409
        %vm3267 = vcmp.eq.f32.partialorder %v3266, 8.507059e+37
        %v3268 = vand.u32 %v2409, 2147483648
        %v3269 = vor.u32 1.1754944e-38, %v3268
        %v3270 = vsel %vm3267, %v3269, %v3265
        %v3271 = vmul.f32 1.0, %v3270
        %v3272 = vrcp.pop %v2410
        %v3273 = vmul.f32 %v2410, %v3272
        %v3274 = vsub.f32 1.0, %v3273
        %v3275 = vmul.f32 %v3272, %v3274
        %v3276 = vadd.f32 %v3272, %v3275
        %vm3277 = vweird.f32 %v2410
        %vm3278 = vweird.f32 %v3272
        %vm3279 = vmor %vm3277, %vm3278
        %v3280 = vsel %vm3279, %v3272, %v3276
        %v3281 = vand.u32 2147483647, %v2410
        %vm3282 = vcmp.eq.f32.partialorder %v3281, 8.507059e+37
        %v3283 = vand.u32 %v2410, 2147483648
        %v3284 = vor.u32 1.1754944e-38, %v3283
        %v3285 = vsel %vm3282, %v3284, %v3280
        %v3286 = vmul.f32 1.0, %v3285
        %v3287 = vrcp.pop %v2411
        %v3288 = vmul.f32 %v2411, %v3287
        %v3289 = vsub.f32 1.0, %v3288
        %v3290 = vmul.f32 %v3287, %v3289
        %v3291 = vadd.f32 %v3287, %v3290
        %vm3292 = vweird.f32 %v2411
        %vm3293 = vweird.f32 %v3287
        %vm3294 = vmor %vm3292, %vm3293
        %v3295 = vsel %vm3294, %v3287, %v3291
        %v3296 = vand.u32 2147483647, %v2411
        %vm3297 = vcmp.eq.f32.partialorder %v3296, 8.507059e+37
        %v3298 = vand.u32 %v2411, 2147483648
        %v3299 = vor.u32 1.1754944e-38, %v3298
        %v3300 = vsel %vm3297, %v3299, %v3295
        %v3301 = vmul.f32 1.0, %v3300
        %v3302 = vrcp.pop %v2412
        %v3303 = vmul.f32 %v2412, %v3302
        %v3304 = vsub.f32 1.0, %v3303
        %v3305 = vmul.f32 %v3302, %v3304
        %v3306 = vadd.f32 %v3302, %v3305
        %vm3307 = vweird.f32 %v2412
        %vm3308 = vweird.f32 %v3302
        %vm3309 = vmor %vm3307, %vm3308
        %v3310 = vsel %vm3309, %v3302, %v3306
        %v3311 = vand.u32 2147483647, %v2412
        %vm3312 = vcmp.eq.f32.partialorder %v3311, 8.507059e+37
        %v3313 = vand.u32 %v2412, 2147483648
        %v3314 = vor.u32 1.1754944e-38, %v3313
        %v3315 = vsel %vm3312, %v3314, %v3310
        %v3316 = vmul.f32 1.0, %v3315
        %v3317 = vrcp.pop %v2413
        %v3318 = vmul.f32 %v2413, %v3317
        %v3319 = vsub.f32 1.0, %v3318
        %v3320 = vmul.f32 %v3317, %v3319
        %v3321 = vadd.f32 %v3317, %v3320
        %vm3322 = vweird.f32 %v2413
        %vm3323 = vweird.f32 %v3317
        %vm3324 = vmor %vm3322, %vm3323
        %v3325 = vsel %vm3324, %v3317, %v3321
        %v3326 = vand.u32 2147483647, %v2413
        %vm3327 = vcmp.eq.f32.partialorder %v3326, 8.507059e+37
        %v3328 = vand.u32 %v2413, 2147483648
        %v3329 = vor.u32 1.1754944e-38, %v3328
        %v3330 = vsel %vm3327, %v3329, %v3325
        %v3331 = vmul.f32 1.0, %v3330
        %v3332 = vrcp.pop %v2414
        %v3333 = vmul.f32 %v2414, %v3332
        %v3334 = vsub.f32 1.0, %v3333
        %v3335 = vmul.f32 %v3332, %v3334
        %v3336 = vadd.f32 %v3332, %v3335
        %vm3337 = vweird.f32 %v2414
        %vm3338 = vweird.f32 %v3332
        %vm3339 = vmor %vm3337, %vm3338
        %v3340 = vsel %vm3339, %v3332, %v3336
        %v3341 = vand.u32 2147483647, %v2414
        %vm3342 = vcmp.eq.f32.partialorder %v3341, 8.507059e+37
        %v3343 = vand.u32 %v2414, 2147483648
        %v3344 = vor.u32 1.1754944e-38, %v3343
        %v3345 = vsel %vm3342, %v3344, %v3340
        %v3346 = vmul.f32 1.0, %v3345
        %v3347 = vrcp.pop %v2415
        %v3348 = vmul.f32 %v2415, %v3347
        %v3349 = vsub.f32 1.0, %v3348
        %v3350 = vmul.f32 %v3347, %v3349
        %v3351 = vadd.f32 %v3347, %v3350
        %vm3352 = vweird.f32 %v2415
        %vm3353 = vweird.f32 %v3347
        %vm3354 = vmor %vm3352, %vm3353
        %v3355 = vsel %vm3354, %v3347, %v3351
        %v3356 = vand.u32 2147483647, %v2415
        %vm3357 = vcmp.eq.f32.partialorder %v3356, 8.507059e+37
        %v3358 = vand.u32 %v2415, 2147483648
        %v3359 = vor.u32 1.1754944e-38, %v3358
        %v3360 = vsel %vm3357, %v3359, %v3355
        %v3361 = vmul.f32 1.0, %v3360
        %v3362 = vrcp.pop %v2416
        %v3363 = vmul.f32 %v2416, %v3362
        %v3364 = vsub.f32 1.0, %v3363
        %v3365 = vmul.f32 %v3362, %v3364
        %v3366 = vadd.f32 %v3362, %v3365
        %vm3367 = vweird.f32 %v2416
        %vm3368 = vweird.f32 %v3362
        %vm3369 = vmor %vm3367, %vm3368
        %v3370 = vsel %vm3369, %v3362, %v3366
        %v3371 = vand.u32 2147483647, %v2416
        %vm3372 = vcmp.eq.f32.partialorder %v3371, 8.507059e+37
        %v3373 = vand.u32 %v2416, 2147483648
        %v3374 = vor.u32 1.1754944e-38, %v3373
        %v3375 = vsel %vm3372, %v3374, %v3370
        %v3376 = vmul.f32 1.0, %v3375
        %v3377 = vpack.c.bf16 %v2431, %v2431
        %v3378 = vpack.c.bf16 %v2446, %v2446
        %v3379 = vpack.c.bf16 %v2461, %v2461
        %v3380 = vpack.c.bf16 %v2476, %v2476
        %v3381 = vpack.c.bf16 %v2491, %v2491
        %v3382 = vpack.c.bf16 %v2506, %v2506
        %v3383 = vpack.c.bf16 %v2521, %v2521
        %v3384 = vpack.c.bf16 %v2536, %v2536
        %v3385 = vpack.c.bf16 %v2551, %v2551
        %v3386 = vpack.c.bf16 %v2566, %v2566
        %v3387 = vpack.c.bf16 %v2581, %v2581
        %v3388 = vpack.c.bf16 %v2596, %v2596
        %v3389 = vpack.c.bf16 %v2611, %v2611
        %v3390 = vpack.c.bf16 %v2626, %v2626
        %v3391 = vpack.c.bf16 %v2641, %v2641
        %v3392 = vpack.c.bf16 %v2656, %v2656
        %v3393 = vpack.c.bf16 %v2671, %v2671
        %v3394 = vpack.c.bf16 %v2686, %v2686
        %v3395 = vpack.c.bf16 %v2701, %v2701
        %v3396 = vpack.c.bf16 %v2716, %v2716
        %v3397 = vpack.c.bf16 %v2731, %v2731
        %v3398 = vpack.c.bf16 %v2746, %v2746
        %v3399 = vpack.c.bf16 %v2761, %v2761
        %v3400 = vpack.c.bf16 %v2776, %v2776
        %v3401 = vpack.c.bf16 %v2791, %v2791
        %v3402 = vpack.c.bf16 %v2806, %v2806
        %v3403 = vpack.c.bf16 %v2821, %v2821
        %v3404 = vpack.c.bf16 %v2836, %v2836
        %v3405 = vpack.c.bf16 %v2851, %v2851
        %v3406 = vpack.c.bf16 %v2866, %v2866
        %v3407 = vpack.c.bf16 %v2881, %v2881
        %v3408 = vpack.c.bf16 %v2896, %v2896
        %v3409 = vpack.c.bf16 %v2911, %v2911
        %v3410 = vpack.c.bf16 %v2926, %v2926
        %v3411 = vpack.c.bf16 %v2941, %v2941
        %v3412 = vpack.c.bf16 %v2956, %v2956
        %v3413 = vpack.c.bf16 %v2971, %v2971
        %v3414 = vpack.c.bf16 %v2986, %v2986
        %v3415 = vpack.c.bf16 %v3001, %v3001
        %v3416 = vpack.c.bf16 %v3016, %v3016
        %v3417 = vpack.c.bf16 %v3031, %v3031
        %v3418 = vpack.c.bf16 %v3046, %v3046
        %v3419 = vpack.c.bf16 %v3061, %v3061
        %v3420 = vpack.c.bf16 %v3076, %v3076
        %v3421 = vpack.c.bf16 %v3091, %v3091
        %v3422 = vpack.c.bf16 %v3106, %v3106
        %v3423 = vpack.c.bf16 %v3121, %v3121
        %v3424 = vpack.c.bf16 %v3136, %v3136
        %v3425 = vpack.c.bf16 %v3151, %v3151
        %v3426 = vpack.c.bf16 %v3166, %v3166
        %v3427 = vpack.c.bf16 %v3181, %v3181
        %v3428 = vpack.c.bf16 %v3196, %v3196
        %v3429 = vpack.c.bf16 %v3211, %v3211
        %v3430 = vpack.c.bf16 %v3226, %v3226
        %v3431 = vpack.c.bf16 %v3241, %v3241
        %v3432 = vpack.c.bf16 %v3256, %v3256
        %v3433 = vpack.c.bf16 %v3271, %v3271
        %v3434 = vpack.c.bf16 %v3286, %v3286
        %v3435 = vpack.c.bf16 %v3301, %v3301
        %v3436 = vpack.c.bf16 %v3316, %v3316
        %v3437 = vpack.c.bf16 %v3331, %v3331
        %v3438 = vpack.c.bf16 %v3346, %v3346
        %v3439 = vpack.c.bf16 %v3361, %v3361
        %v3440 = vpack.c.bf16 %v3376, %v3376
        %vm3441 = vcmask 125952
        %3442 = vst.msk [vmem:[%s280] sm:$0xf] %vm3441, %v3377
        %3443 = vst.msk [vmem:[%s280 + $0x4] sm:$0xf] %vm3441, %v3378
        %3444 = vst.msk [vmem:[%s280 + $0x8] sm:$0xf] %vm3441, %v3379
        %3445 = vst.msk [vmem:[%s280 + $0xc] sm:$0xf] %vm3441, %v3380
        %3446 = vst.msk [vmem:[%s280 + $0x10] sm:$0xf] %vm3441, %v3381
        %3447 = vst.msk [vmem:[%s280 + $0x14] sm:$0xf] %vm3441, %v3382
        %3448 = vst.msk [vmem:[%s280 + $0x18] sm:$0xf] %vm3441, %v3383
        %3449 = vst.msk [vmem:[%s280 + $0x1c] sm:$0xf] %vm3441, %v3384
        %3450 = vst.msk [vmem:[%s280 + $0x20] sm:$0xf] %vm3441, %v3385
        %3451 = vst.msk [vmem:[%s280 + $0x24] sm:$0xf] %vm3441, %v3386
        %3452 = vst.msk [vmem:[%s280 + $0x28] sm:$0xf] %vm3441, %v3387
        %3453 = vst.msk [vmem:[%s280 + $0x2c] sm:$0xf] %vm3441, %v3388
        %3454 = vst.msk [vmem:[%s280 + $0x30] sm:$0xf] %vm3441, %v3389
        %3455 = vst.msk [vmem:[%s280 + $0x34] sm:$0xf] %vm3441, %v3390
        %3456 = vst.msk [vmem:[%s280 + $0x38] sm:$0xf] %vm3441, %v3391
        %3457 = vst.msk [vmem:[%s280 + $0x3c] sm:$0xf] %vm3441, %v3392
        %3458 = vst.msk [vmem:[%s280 + $0x40] sm:$0xf] %vm3441, %v3393
        %3459 = vst.msk [vmem:[%s280 + $0x44] sm:$0xf] %vm3441, %v3394
        %3460 = vst.msk [vmem:[%s280 + $0x48] sm:$0xf] %vm3441, %v3395
        %3461 = vst.msk [vmem:[%s280 + $0x4c] sm:$0xf] %vm3441, %v3396
        %3462 = vst.msk [vmem:[%s280 + $0x50] sm:$0xf] %vm3441, %v3397
        %3463 = vst.msk [vmem:[%s280 + $0x54] sm:$0xf] %vm3441, %v3398
        %3464 = vst.msk [vmem:[%s280 + $0x58] sm:$0xf] %vm3441, %v3399
        %3465 = vst.msk [vmem:[%s280 + $0x5c] sm:$0xf] %vm3441, %v3400
        %3466 = vst.msk [vmem:[%s280 + $0x60] sm:$0xf] %vm3441, %v3401
        %3467 = vst.msk [vmem:[%s280 + $0x64] sm:$0xf] %vm3441, %v3402
        %3468 = vst.msk [vmem:[%s280 + $0x68] sm:$0xf] %vm3441, %v3403
        %3469 = vst.msk [vmem:[%s280 + $0x6c] sm:$0xf] %vm3441, %v3404
        %3470 = vst.msk [vmem:[%s280 + $0x70] sm:$0xf] %vm3441, %v3405
        %3471 = vst.msk [vmem:[%s280 + $0x74] sm:$0xf] %vm3441, %v3406
        %3472 = vst.msk [vmem:[%s280 + $0x78] sm:$0xf] %vm3441, %v3407
        %3473 = vst.msk [vmem:[%s280 + $0x7c] sm:$0xf] %vm3441, %v3408
        %3474 = vst.msk [vmem:[%s280 + $0x80] sm:$0xf] %vm3441, %v3409
        %3475 = vst.msk [vmem:[%s280 + $0x84] sm:$0xf] %vm3441, %v3410
        %3476 = vst.msk [vmem:[%s280 + $0x88] sm:$0xf] %vm3441, %v3411
        %3477 = vst.msk [vmem:[%s280 + $0x8c] sm:$0xf] %vm3441, %v3412
        %3478 = vst.msk [vmem:[%s280 + $0x90] sm:$0xf] %vm3441, %v3413
        %3479 = vst.msk [vmem:[%s280 + $0x94] sm:$0xf] %vm3441, %v3414
        %3480 = vst.msk [vmem:[%s280 + $0x98] sm:$0xf] %vm3441, %v3415
        %3481 = vst.msk [vmem:[%s280 + $0x9c] sm:$0xf] %vm3441, %v3416
        %3482 = vst.msk [vmem:[%s280 + $0xa0] sm:$0xf] %vm3441, %v3417
        %3483 = vst.msk [vmem:[%s280 + $0xa4] sm:$0xf] %vm3441, %v3418
        %3484 = vst.msk [vmem:[%s280 + $0xa8] sm:$0xf] %vm3441, %v3419
        %3485 = vst.msk [vmem:[%s280 + $0xac] sm:$0xf] %vm3441, %v3420
        %3486 = vst.msk [vmem:[%s280 + $0xb0] sm:$0xf] %vm3441, %v3421
        %3487 = vst.msk [vmem:[%s280 + $0xb4] sm:$0xf] %vm3441, %v3422
        %3488 = vst.msk [vmem:[%s280 + $0xb8] sm:$0xf] %vm3441, %v3423
        %3489 = vst.msk [vmem:[%s280 + $0xbc] sm:$0xf] %vm3441, %v3424
        %3490 = vst.msk [vmem:[%s280 + $0xc0] sm:$0xf] %vm3441, %v3425
        %3491 = vst.msk [vmem:[%s280 + $0xc4] sm:$0xf] %vm3441, %v3426
        %3492 = vst.msk [vmem:[%s280 + $0xc8] sm:$0xf] %vm3441, %v3427
        %3493 = vst.msk [vmem:[%s280 + $0xcc] sm:$0xf] %vm3441, %v3428
        %3494 = vst.msk [vmem:[%s280 + $0xd0] sm:$0xf] %vm3441, %v3429
        %3495 = vst.msk [vmem:[%s280 + $0xd4] sm:$0xf] %vm3441, %v3430
        %3496 = vst.msk [vmem:[%s280 + $0xd8] sm:$0xf] %vm3441, %v3431
        %3497 = vst.msk [vmem:[%s280 + $0xdc] sm:$0xf] %vm3441, %v3432
        %3498 = vst.msk [vmem:[%s280 + $0xe0] sm:$0xf] %vm3441, %v3433
        %3499 = vst.msk [vmem:[%s280 + $0xe4] sm:$0xf] %vm3441, %v3434
        %3500 = vst.msk [vmem:[%s280 + $0xe8] sm:$0xf] %vm3441, %v3435
        %3501 = vst.msk [vmem:[%s280 + $0xec] sm:$0xf] %vm3441, %v3436
        %3502 = vst.msk [vmem:[%s280 + $0xf0] sm:$0xf] %vm3441, %v3437
        %3503 = vst.msk [vmem:[%s280 + $0xf4] sm:$0xf] %vm3441, %v3438
        %3504 = vst.msk [vmem:[%s280 + $0xf8] sm:$0xf] %vm3441, %v3439
        %3505 = vst.msk [vmem:[%s280 + $0xfc] sm:$0xf] %vm3441, %v3440
        %s3506 = sand.u32 %s178, 1
        %s3507 = sand.u32 %s178, 1
        %s3508 = smul.addr %s3507, 256
        %s3509 = scalar_lea.vmem [#allocation2], %s3508
        // Predicated region
        $region49: #{pixelnerf_forward.1} parent=47 // pred_check
          %p3510 = pneg %p188
        $region50: #{pixelnerf_forward.1} parent=47 // pred_check_branch
          %3512 = sbr.rel (%p3510) target = $region52
        $region51: #{pixelnerf_forward.1} parent=47 // pred_region
          %s3513 = smul.u32 64, %s18
          %s3514 = ssub.s32 250, %s3513
          %p3515 = scmp.lt.s32.totalorder %s3514, 64
          %s3516 = scalar_select %p3515, %s3514, 64
          %s3517 = smul.u32 4, %s3516
          %p3518 = scmp.ne.s32.totalorder 0, %s3517
          %s3519 = smul.addr %s3513, 4
          %s3520 = scalar_lea.vmem %s7, %s3519
          // Predicated region
          $region53: #{pixelnerf_forward.1} parent=51 // pred_check
            %p3521 = pneg %p3518
          $region54: #{pixelnerf_forward.1} parent=51 // pred_check_branch
            %3523 = sbr.rel (%p3521) target = $region56
          $region55: #{pixelnerf_forward.1} parent=51 // pred_region
            // Predicated region
            $region57: #{pixelnerf_forward.1} parent=55 // pred_check
              _
            $region58: #{pixelnerf_forward.1} parent=55 // pred_check_branch
              %3525 = sbr.rel target = $region60
            $region59: #{pixelnerf_forward.1} parent=55 // pred_region
              // Predicated region
              $region79: #{pixelnerf_forward.1} parent=59 // pred_check
                _
              $region80: #{pixelnerf_forward.1} parent=59 // pred_check_branch
                %3637 = sbr.rel (0) target = $region82
              $region81: #{pixelnerf_forward.1} parent=59 // pred_region
                %s3639 = ssub.s32 16, 1
                %s3640 = sshrl.u32 %s3516, 5
                // While loop
                $region83: #{pixelnerf_forward.1} parent=81 // loop_pre_header
                  _
                $region84: #{pixelnerf_forward.1} parent=81 // loop_header
                  %s3642 = sphi 0, %s3644
                  %p3643 = scmp.ge.s32.totalorder %s3642, %s3640
                  %s3647 = sphi 0, %s3716
                  %s3648 = sphi %s3509, %s3719
                  %s3649 = sphi %s3520, %s3720
                $region85: #{pixelnerf_forward.1} parent=81 // loop_header_branch
                  %3646 = sbr.rel (%p3643) target = $region89
                $region86: #{pixelnerf_forward.1} parent=81 // loop_body
                  %v3650 = vld [vmem:[%s3648] sm:%s3639]
                  %3651 = vst [vmem:[%s3649] sm:%s3639] %v3650
                  %v3652 = vld [vmem:[%s3648 + $0x4] sm:%s3639]
                  %3653 = vst [vmem:[%s3649 + $0x4] sm:%s3639] %v3652
                  %v3654 = vld [vmem:[%s3648 + $0x8] sm:%s3639]
                  %3655 = vst [vmem:[%s3649 + $0x8] sm:%s3639] %v3654
                  %v3656 = vld [vmem:[%s3648 + $0xc] sm:%s3639]
                  %3657 = vst [vmem:[%s3649 + $0xc] sm:%s3639] %v3656
                  %v3658 = vld [vmem:[%s3648 + $0x10] sm:%s3639]
                  %3659 = vst [vmem:[%s3649 + $0x10] sm:%s3639] %v3658
                  %v3660 = vld [vmem:[%s3648 + $0x14] sm:%s3639]
                  %3661 = vst [vmem:[%s3649 + $0x14] sm:%s3639] %v3660
                  %v3662 = vld [vmem:[%s3648 + $0x18] sm:%s3639]
                  %3663 = vst [vmem:[%s3649 + $0x18] sm:%s3639] %v3662
                  %v3664 = vld [vmem:[%s3648 + $0x1c] sm:%s3639]
                  %3665 = vst [vmem:[%s3649 + $0x1c] sm:%s3639] %v3664
                  %v3666 = vld [vmem:[%s3648 + $0x20] sm:%s3639]
                  %3667 = vst [vmem:[%s3649 + $0x20] sm:%s3639] %v3666
                  %v3668 = vld [vmem:[%s3648 + $0x24] sm:%s3639]
                  %3669 = vst [vmem:[%s3649 + $0x24] sm:%s3639] %v3668
                  %v3670 = vld [vmem:[%s3648 + $0x28] sm:%s3639]
                  %3671 = vst [vmem:[%s3649 + $0x28] sm:%s3639] %v3670
                  %v3672 = vld [vmem:[%s3648 + $0x2c] sm:%s3639]
                  %3673 = vst [vmem:[%s3649 + $0x2c] sm:%s3639] %v3672
                  %v3674 = vld [vmem:[%s3648 + $0x30] sm:%s3639]
                  %3675 = vst [vmem:[%s3649 + $0x30] sm:%s3639] %v3674
                  %v3676 = vld [vmem:[%s3648 + $0x34] sm:%s3639]
                  %3677 = vst [vmem:[%s3649 + $0x34] sm:%s3639] %v3676
                  %v3678 = vld [vmem:[%s3648 + $0x38] sm:%s3639]
                  %3679 = vst [vmem:[%s3649 + $0x38] sm:%s3639] %v3678
                  %v3680 = vld [vmem:[%s3648 + $0x3c] sm:%s3639]
                  %3681 = vst [vmem:[%s3649 + $0x3c] sm:%s3639] %v3680
                  %v3682 = vld [vmem:[%s3648 + $0x40] sm:%s3639]
                  %3683 = vst [vmem:[%s3649 + $0x40] sm:%s3639] %v3682
                  %v3684 = vld [vmem:[%s3648 + $0x44] sm:%s3639]
                  %3685 = vst [vmem:[%s3649 + $0x44] sm:%s3639] %v3684
                  %v3686 = vld [vmem:[%s3648 + $0x48] sm:%s3639]
                  %3687 = vst [vmem:[%s3649 + $0x48] sm:%s3639] %v3686
                  %v3688 = vld [vmem:[%s3648 + $0x4c] sm:%s3639]
                  %3689 = vst [vmem:[%s3649 + $0x4c] sm:%s3639] %v3688
                  %v3690 = vld [vmem:[%s3648 + $0x50] sm:%s3639]
                  %3691 = vst [vmem:[%s3649 + $0x50] sm:%s3639] %v3690
                  %v3692 = vld [vmem:[%s3648 + $0x54] sm:%s3639]
                  %3693 = vst [vmem:[%s3649 + $0x54] sm:%s3639] %v3692
                  %v3694 = vld [vmem:[%s3648 + $0x58] sm:%s3639]
                  %3695 = vst [vmem:[%s3649 + $0x58] sm:%s3639] %v3694
                  %v3696 = vld [vmem:[%s3648 + $0x5c] sm:%s3639]
                  %3697 = vst [vmem:[%s3649 + $0x5c] sm:%s3639] %v3696
                  %v3698 = vld [vmem:[%s3648 + $0x60] sm:%s3639]
                  %3699 = vst [vmem:[%s3649 + $0x60] sm:%s3639] %v3698
                  %v3700 = vld [vmem:[%s3648 + $0x64] sm:%s3639]
                  %3701 = vst [vmem:[%s3649 + $0x64] sm:%s3639] %v3700
                  %v3702 = vld [vmem:[%s3648 + $0x68] sm:%s3639]
                  %3703 = vst [vmem:[%s3649 + $0x68] sm:%s3639] %v3702
                  %v3704 = vld [vmem:[%s3648 + $0x6c] sm:%s3639]
                  %3705 = vst [vmem:[%s3649 + $0x6c] sm:%s3639] %v3704
                  %v3706 = vld [vmem:[%s3648 + $0x70] sm:%s3639]
                  %3707 = vst [vmem:[%s3649 + $0x70] sm:%s3639] %v3706
                  %v3708 = vld [vmem:[%s3648 + $0x74] sm:%s3639]
                  %3709 = vst [vmem:[%s3649 + $0x74] sm:%s3639] %v3708
                  %v3710 = vld [vmem:[%s3648 + $0x78] sm:%s3639]
                  %3711 = vst [vmem:[%s3649 + $0x78] sm:%s3639] %v3710
                  %v3712 = vld [vmem:[%s3648 + $0x7c] sm:%s3639]
                  %3713 = vst [vmem:[%s3649 + $0x7c] sm:%s3639] %v3712
                  %s3714 = sadd.s32 1, %s3647
                  %p3715 = scmp.ge.s32.totalorder %s3714, %s3640
                  %s3716 = scalar_select %p3715, 0, %s3714
                  %s3717 = smul.u32 %s3716, 128
                  %s3718 = smul.u32 %s3716, 128
                  %s3719 = scalar_lea.vmem %s3509, %s3717 [#allocation2]
                  %s3720 = scalar_lea.vmem %s3520, %s3718
                $region87: #{pixelnerf_forward.1} parent=81 // loop_footer
                  %s3644 = sadd.s32 %s3642, 1
                $region88: #{pixelnerf_forward.1} parent=81 // loop_footer_branch
                  %3641 = sbr.rel target = $region84
                $region89: #{pixelnerf_forward.1} parent=81 // loop_exit
                  _
                %s3721 = sshrl.u32 %s3516, 5
                %s3722 = sand.u32 %s3516, 31
                %s3723 = smul.u32 %s3721, 32
                %s3724 = smul.u32 4, %s3723
                %s3725 = scalar_lea.vmem %s3509, %s3724 [#allocation2]
                %s3726 = smul.u32 4, %s3723
                %s3727 = scalar_lea.vmem %s3520, %s3726
                // While loop
                $region90: #{pixelnerf_forward.1} parent=81 // loop_pre_header
                  _
                $region91: #{pixelnerf_forward.1} parent=81 // loop_header
                  %s3729 = sphi 0, %s3731
                  %p3730 = scmp.ge.s32.totalorder %s3729, %s3722
                  %s3734 = sphi 0, %s3741
                  %s3735 = sphi %s3725, %s3744
                  %s3736 = sphi %s3727, %s3745
                $region92: #{pixelnerf_forward.1} parent=81 // loop_header_branch
                  %3733 = sbr.rel (%p3730) target = $region96
                $region93: #{pixelnerf_forward.1} parent=81 // loop_body
                  %v3737 = vld [vmem:[%s3735] sm:%s3639]
                  %3738 = vst [vmem:[%s3736] sm:%s3639] %v3737
                  %s3739 = sadd.s32 1, %s3734
                  %p3740 = scmp.ge.s32.totalorder %s3739, %s3722
                  %s3741 = scalar_select %p3740, 0, %s3739
                  %s3742 = smul.u32 %s3741, 4
                  %s3743 = smul.u32 %s3741, 4
                  %s3744 = scalar_lea.vmem %s3725, %s3742 [#allocation2]
                  %s3745 = scalar_lea.vmem %s3727, %s3743
                $region94: #{pixelnerf_forward.1} parent=81 // loop_footer
                  %s3731 = sadd.s32 %s3729, 1
                $region95: #{pixelnerf_forward.1} parent=81 // loop_footer_branch
                  %3728 = sbr.rel target = $region91
                $region96: #{pixelnerf_forward.1} parent=81 // loop_exit
                  _
              $region82: #{pixelnerf_forward.1} parent=59 // pred_fallthru
                _
            $region60: #{pixelnerf_forward.1} parent=55 // pred_fallthru
              _
            // Predicated region
            $region61: #{pixelnerf_forward.1} parent=55 // pred_check
              _
            $region62: #{pixelnerf_forward.1} parent=55 // pred_check_branch
              %3527 = sbr.rel (0) target = $region64
            $region63: #{pixelnerf_forward.1} parent=55 // pred_region
              %s3529 = ssub.s32 16, 1
              %s3530 = sshrl.u32 %s3516, 5
              // While loop
              $region65: #{pixelnerf_forward.1} parent=63 // loop_pre_header
                _
              $region66: #{pixelnerf_forward.1} parent=63 // loop_header
                %s3532 = sphi 0, %s3534
                %p3533 = scmp.ge.s32.totalorder %s3532, %s3530
                %s3537 = sphi 0, %s3606
                %s3538 = sphi %s3509, %s3609
                %s3539 = sphi %s3520, %s3610
              $region67: #{pixelnerf_forward.1} parent=63 // loop_header_branch
                %3536 = sbr.rel (%p3533) target = $region71
              $region68: #{pixelnerf_forward.1} parent=63 // loop_body
                %v3540 = vld [vmem:[%s3538] sm:%s3529]
                %3541 = vst [vmem:[%s3539] sm:%s3529] %v3540
                %v3542 = vld [vmem:[%s3538 + $0x4] sm:%s3529]
                %3543 = vst [vmem:[%s3539 + $0x4] sm:%s3529] %v3542
                %v3544 = vld [vmem:[%s3538 + $0x8] sm:%s3529]
                %3545 = vst [vmem:[%s3539 + $0x8] sm:%s3529] %v3544
                %v3546 = vld [vmem:[%s3538 + $0xc] sm:%s3529]
                %3547 = vst [vmem:[%s3539 + $0xc] sm:%s3529] %v3546
                %v3548 = vld [vmem:[%s3538 + $0x10] sm:%s3529]
                %3549 = vst [vmem:[%s3539 + $0x10] sm:%s3529] %v3548
                %v3550 = vld [vmem:[%s3538 + $0x14] sm:%s3529]
                %3551 = vst [vmem:[%s3539 + $0x14] sm:%s3529] %v3550
                %v3552 = vld [vmem:[%s3538 + $0x18] sm:%s3529]
                %3553 = vst [vmem:[%s3539 + $0x18] sm:%s3529] %v3552
                %v3554 = vld [vmem:[%s3538 + $0x1c] sm:%s3529]
                %3555 = vst [vmem:[%s3539 + $0x1c] sm:%s3529] %v3554
                %v3556 = vld [vmem:[%s3538 + $0x20] sm:%s3529]
                %3557 = vst [vmem:[%s3539 + $0x20] sm:%s3529] %v3556
                %v3558 = vld [vmem:[%s3538 + $0x24] sm:%s3529]
                %3559 = vst [vmem:[%s3539 + $0x24] sm:%s3529] %v3558
                %v3560 = vld [vmem:[%s3538 + $0x28] sm:%s3529]
                %3561 = vst [vmem:[%s3539 + $0x28] sm:%s3529] %v3560
                %v3562 = vld [vmem:[%s3538 + $0x2c] sm:%s3529]
                %3563 = vst [vmem:[%s3539 + $0x2c] sm:%s3529] %v3562
                %v3564 = vld [vmem:[%s3538 + $0x30] sm:%s3529]
                %3565 = vst [vmem:[%s3539 + $0x30] sm:%s3529] %v3564
                %v3566 = vld [vmem:[%s3538 + $0x34] sm:%s3529]
                %3567 = vst [vmem:[%s3539 + $0x34] sm:%s3529] %v3566
                %v3568 = vld [vmem:[%s3538 + $0x38] sm:%s3529]
                %3569 = vst [vmem:[%s3539 + $0x38] sm:%s3529] %v3568
                %v3570 = vld [vmem:[%s3538 + $0x3c] sm:%s3529]
                %3571 = vst [vmem:[%s3539 + $0x3c] sm:%s3529] %v3570
                %v3572 = vld [vmem:[%s3538 + $0x40] sm:%s3529]
                %3573 = vst [vmem:[%s3539 + $0x40] sm:%s3529] %v3572
                %v3574 = vld [vmem:[%s3538 + $0x44] sm:%s3529]
                %3575 = vst [vmem:[%s3539 + $0x44] sm:%s3529] %v3574
                %v3576 = vld [vmem:[%s3538 + $0x48] sm:%s3529]
                %3577 = vst [vmem:[%s3539 + $0x48] sm:%s3529] %v3576
                %v3578 = vld [vmem:[%s3538 + $0x4c] sm:%s3529]
                %3579 = vst [vmem:[%s3539 + $0x4c] sm:%s3529] %v3578
                %v3580 = vld [vmem:[%s3538 + $0x50] sm:%s3529]
                %3581 = vst [vmem:[%s3539 + $0x50] sm:%s3529] %v3580
                %v3582 = vld [vmem:[%s3538 + $0x54] sm:%s3529]
                %3583 = vst [vmem:[%s3539 + $0x54] sm:%s3529] %v3582
                %v3584 = vld [vmem:[%s3538 + $0x58] sm:%s3529]
                %3585 = vst [vmem:[%s3539 + $0x58] sm:%s3529] %v3584
                %v3586 = vld [vmem:[%s3538 + $0x5c] sm:%s3529]
                %3587 = vst [vmem:[%s3539 + $0x5c] sm:%s3529] %v3586
                %v3588 = vld [vmem:[%s3538 + $0x60] sm:%s3529]
                %3589 = vst [vmem:[%s3539 + $0x60] sm:%s3529] %v3588
                %v3590 = vld [vmem:[%s3538 + $0x64] sm:%s3529]
                %3591 = vst [vmem:[%s3539 + $0x64] sm:%s3529] %v3590
                %v3592 = vld [vmem:[%s3538 + $0x68] sm:%s3529]
                %3593 = vst [vmem:[%s3539 + $0x68] sm:%s3529] %v3592
                %v3594 = vld [vmem:[%s3538 + $0x6c] sm:%s3529]
                %3595 = vst [vmem:[%s3539 + $0x6c] sm:%s3529] %v3594
                %v3596 = vld [vmem:[%s3538 + $0x70] sm:%s3529]
                %3597 = vst [vmem:[%s3539 + $0x70] sm:%s3529] %v3596
                %v3598 = vld [vmem:[%s3538 + $0x74] sm:%s3529]
                %3599 = vst [vmem:[%s3539 + $0x74] sm:%s3529] %v3598
                %v3600 = vld [vmem:[%s3538 + $0x78] sm:%s3529]
                %3601 = vst [vmem:[%s3539 + $0x78] sm:%s3529] %v3600
                %v3602 = vld [vmem:[%s3538 + $0x7c] sm:%s3529]
                %3603 = vst [vmem:[%s3539 + $0x7c] sm:%s3529] %v3602
                %s3604 = sadd.s32 1, %s3537
                %p3605 = scmp.ge.s32.totalorder %s3604, %s3530
                %s3606 = scalar_select %p3605, 0, %s3604
                %s3607 = smul.u32 %s3606, 128
                %s3608 = smul.u32 %s3606, 128
                %s3609 = scalar_lea.vmem %s3509, %s3607 [#allocation2]
                %s3610 = scalar_lea.vmem %s3520, %s3608
              $region69: #{pixelnerf_forward.1} parent=63 // loop_footer
                %s3534 = sadd.s32 %s3532, 1
              $region70: #{pixelnerf_forward.1} parent=63 // loop_footer_branch
                %3531 = sbr.rel target = $region66
              $region71: #{pixelnerf_forward.1} parent=63 // loop_exit
                _
              %s3611 = sshrl.u32 %s3516, 5
              %s3612 = sand.u32 %s3516, 31
              %s3613 = smul.u32 %s3611, 32
              %s3614 = smul.u32 4, %s3613
              %s3615 = scalar_lea.vmem %s3509, %s3614 [#allocation2]
              %s3616 = smul.u32 4, %s3613
              %s3617 = scalar_lea.vmem %s3520, %s3616
              // While loop
              $region72: #{pixelnerf_forward.1} parent=63 // loop_pre_header
                _
              $region73: #{pixelnerf_forward.1} parent=63 // loop_header
                %s3619 = sphi 0, %s3621
                %p3620 = scmp.ge.s32.totalorder %s3619, %s3612
                %s3624 = sphi 0, %s3631
                %s3625 = sphi %s3615, %s3634
                %s3626 = sphi %s3617, %s3635
              $region74: #{pixelnerf_forward.1} parent=63 // loop_header_branch
                %3623 = sbr.rel (%p3620) target = $region78
              $region75: #{pixelnerf_forward.1} parent=63 // loop_body
                %v3627 = vld [vmem:[%s3625] sm:%s3529]
                %3628 = vst [vmem:[%s3626] sm:%s3529] %v3627
                %s3629 = sadd.s32 1, %s3624
                %p3630 = scmp.ge.s32.totalorder %s3629, %s3612
                %s3631 = scalar_select %p3630, 0, %s3629
                %s3632 = smul.u32 %s3631, 4
                %s3633 = smul.u32 %s3631, 4
                %s3634 = scalar_lea.vmem %s3615, %s3632 [#allocation2]
                %s3635 = scalar_lea.vmem %s3617, %s3633
              $region76: #{pixelnerf_forward.1} parent=63 // loop_footer
                %s3621 = sadd.s32 %s3619, 1
              $region77: #{pixelnerf_forward.1} parent=63 // loop_footer_branch
                %3618 = sbr.rel target = $region73
              $region78: #{pixelnerf_forward.1} parent=63 // loop_exit
                _
            $region64: #{pixelnerf_forward.1} parent=55 // pred_fallthru
              _
          $region56: #{pixelnerf_forward.1} parent=51 // pred_fallthru
            _
          %3746 = vnop
        $region52: #{pixelnerf_forward.1} parent=47 // pred_fallthru
          _
      $region48: #{pixelnerf_forward.1} parent=5 // pred_fallthru
        _
      %p3747 = scmp.le.s32.totalorder 2, %s13
      // Predicated region
      $region97: #{pixelnerf_forward.1} parent=5 // pred_check
        %p3748 = pneg %p3747
      $region98: #{pixelnerf_forward.1} parent=5 // pred_check_branch
        %3750 = sbr.rel (%p3748) target = $region100
      $region99: #{pixelnerf_forward.1} parent=5 // pred_region
        %s3751 = ssub.s32 %s13, 2
        // Predicated region
        $region101: #{pixelnerf_forward.1} parent=99 // pred_check
          %p3752 = pneg %p194
        $region102: #{pixelnerf_forward.1} parent=99 // pred_check_branch
          %3754 = sbr.rel (%p3752) target = $region104
        $region103: #{pixelnerf_forward.1} parent=99 // pred_region
          %s3755 = sand.u32 %s179, 1
          %s3756 = sand.u32 %s179, 1
          %s3757 = smul.addr %s3756, 256
          %s3758 = scalar_lea.vmem [#allocation2], %s3757
        $region104: #{pixelnerf_forward.1} parent=99 // pred_fallthru
          _
      $region100: #{pixelnerf_forward.1} parent=5 // pred_fallthru
        _
    $region6: #{pixelnerf_forward.1} parent=1 // loop_footer
      %s17 = sadd.s32 1, %s13
    $region7: #{pixelnerf_forward.1} parent=1 // loop_footer_branch
      %12 = sbr.rel target = $region3
    $region8: #{pixelnerf_forward.1} parent=1 // loop_exit
      _

</llo_original>
